<compile_context>
chip_gen: v6e
topology: v6e:2x2x1
jax: 0.10.0
libtpu: 0.0.40
codegen_flags: <defaults>
</compile_context>

<pallas_src>
import functools

import jax
import jax.numpy as jnp
from jax import lax
from jax.experimental import pallas as pl
from jax.experimental.pallas import tpu as pltpu


def _bigru_layer_kernel(x2d_ref, mask_ref, wih_ref, whh_ref, out_ref, *scratch,
                        seq_len, batch, hidden, num_dirs, reduce_max):
    """One (bi)GRU layer, whole sequence, bias=False, both directions fused.

    x2d_ref:  (T*B, E_in)        VMEM bf16  time-major inputs, row = t*B + b
    mask_ref: (T*B, 1)           VMEM f32   1.0 where t < length[b] else 0.0
    wih_ref:  (D, E_in, 3H)      VMEM bf16  fused (r|z|n) input weights
    whh_ref:  (D, H, 3H)         VMEM bf16  fused (r|z|n) hidden weights
    out_ref:  (T*B, D*H) f32     zero-padded per-step outputs      (seq mode)
              (B,   D*H) f32     running max over time             (max mode)
    scratch:  D x VMEM (T*B, 3H) f32  hoisted input projections
              D x VMEM (B,   H)  f32  running hidden state per direction
    """
    T, B, H = seq_len, batch, hidden
    xp_refs = scratch[:num_dirs]
    h_refs = scratch[num_dirs:]

    # ---- phase 1: hoisted input projection (one big MXU matmul / direction).
    x2d = x2d_ref[...]                                        # (T*B, E) bf16
    for d in range(num_dirs):
        xp_refs[d][...] = jnp.dot(x2d, wih_ref[d],
                                  preferred_element_type=jnp.float32)

    # ---- loop-invariant hoists: weights live in locals, not re-sliced per step.
    whh = [whh_ref[d] for d in range(num_dirs)]               # (H, 3H) bf16

    for d in range(num_dirs):
        h_refs[d][...] = jnp.zeros_like(h_refs[d])
    if reduce_max:
        # running max over zero-padded outputs (matches pad_packed + torch.max)
        out_ref[...] = jnp.full(out_ref.shape, -jnp.inf, out_ref.dtype)

    # ---- phase 2: serial recurrence; only h @ W_hh left on the critical path.
    def step(s, carry):
        for d in range(num_dirs):
            t = s if d == 0 else (T - 1 - s)                  # reverse dir
            row = pl.multiple_of(t * B, B)
            gi = xp_refs[d][pl.ds(row, B), :]                 # (B, 3H) f32
            h = h_refs[d][...]                                # (B, H)  f32
            gh = jnp.dot(h.astype(jnp.bfloat16), whh[d],
                         preferred_element_type=jnp.float32)  # (B, 3H)

            r = jax.nn.sigmoid(gi[:, 0:H] + gh[:, 0:H])
            z = jax.nn.sigmoid(gi[:, H:2 * H] + gh[:, H:2 * H])
            n = jnp.tanh(gi[:, 2 * H:3 * H] + r * gh[:, 2 * H:3 * H])
            h_new = (1.0 - z) * n + z * h

            # packed-sequence semantics: h advances only while t < length,
            # outputs at t >= length stay zero (so the reverse recurrence
            # effectively starts at t = length - 1).
            m = mask_ref[pl.ds(row, B), :]                    # (B, 1) f32
            h_refs[d][...] = m * h_new + (1.0 - m) * h
            o = m * h_new

            if reduce_max:
                cur = out_ref[:, d * H:(d + 1) * H]
                out_ref[:, d * H:(d + 1) * H] = jnp.maximum(cur, o)
            else:
                out_ref[pl.ds(row, B), d * H:(d + 1) * H] = o
        return carry

    lax.fori_loop(0, T, step, 0, unroll=True)


def bigru_layer(x2d, mask2d, wih, whh, *, seq_len, batch, hidden, reduce_max):
    num_dirs, e_in, gates = wih.shape
    out_rows = batch if reduce_max else seq_len * batch
    kernel = functools.partial(_bigru_layer_kernel, seq_len=seq_len,
                               batch=batch, hidden=hidden,
                               num_dirs=num_dirs, reduce_max=reduce_max)
    scratch = ([pltpu.VMEM((seq_len * batch, gates), jnp.float32)
                for _ in range(num_dirs)]
               + [pltpu.VMEM((batch, hidden), jnp.float32)
                  for _ in range(num_dirs)])
    return pl.pallas_call(
        kernel,
        out_shape=jax.ShapeDtypeStruct((out_rows, num_dirs * hidden),
                                       jnp.float32),
        grid=(1,),
        in_specs=[
            pl.BlockSpec((seq_len * batch, e_in), lambda i: (0, 0)),
            pl.BlockSpec((seq_len * batch, 1), lambda i: (0, 0)),
            pl.BlockSpec((num_dirs, e_in, gates), lambda i: (0, 0, 0)),
            pl.BlockSpec((num_dirs, hidden, gates), lambda i: (0, 0, 0)),
        ],
        out_specs=pl.BlockSpec((out_rows, num_dirs * hidden),
                               lambda i: (0, 0)),
        scratch_shapes=scratch,
        compiler_params=pltpu.CompilerParams(
            dimension_semantics=("arbitrary",)),
    )(x2d, mask2d, wih, whh)


def init_params(key, vocab_size, embed_size, hidden_dim, num_layers,
                bidirectional):
    params = {}
    k_embed, key = jax.random.split(key)
    embed = jax.random.normal(k_embed, (vocab_size, embed_size), jnp.float32)
    embed = embed.at[0].set(0.0)  # nn.Embedding padding_idx=0 -> zero row
    params["embed"] = embed

    num_dirs = 2 if bidirectional else 1
    bound = 1.0 / float(hidden_dim) ** 0.5
    for layer in range(num_layers):
        e_in = embed_size if layer == 0 else hidden_dim * num_dirs
        for d in range(num_dirs):
            suffix = f"l{layer}" + ("_reverse" if d == 1 else "")
            key, k1, k2 = jax.random.split(key, 3)
            # PyTorch stores (3H, E_in)/(3H, H); we keep the gate-fused
            # transposed layout (E_in, 3H)/(H, 3H) for x @ W on the MXU.
            params[f"w_ih_{suffix}"] = jax.random.uniform(
                k1, (e_in, 3 * hidden_dim), jnp.float32, -bound, bound)
            params[f"w_hh_{suffix}"] = jax.random.uniform(
                k2, (hidden_dim, 3 * hidden_dim), jnp.float32, -bound, bound)
    return params


def gru_forward(params, text, lengths, *, num_layers, bidirectional):
    # Embedding gather / transpose / mask build are glue; all matmuls,
    # recurrences and the time-max run inside the Pallas kernels.
    B, T = text.shape
    emb = params["embed"][text]                             # (B, T, E)
    x2d = jnp.transpose(emb, (1, 0, 2)).reshape(T * B, -1)  # row = t*B + b
    x2d = x2d.astype(jnp.bfloat16)
    mask2d = (jnp.arange(T)[:, None] < lengths[None, :]
              ).astype(jnp.float32).reshape(T * B, 1)

    num_dirs = 2 if bidirectional else 1
    H = params["w_hh_l0"].shape[-1] // 3
    out = None
    for layer in range(num_layers):
        names = [f"l{layer}"] + ([f"l{layer}_reverse"] if bidirectional else [])
        wih = jnp.stack([params[f"w_ih_{n}"] for n in names]
                        ).astype(jnp.bfloat16)              # (D, E_in, 3H)
        whh = jnp.stack([params[f"w_hh_{n}"] for n in names]
                        ).astype(jnp.bfloat16)              # (D, H, 3H)
        last = layer == num_layers - 1
        out = bigru_layer(x2d, mask2d, wih, whh, seq_len=T, batch=B,
                          hidden=H, reduce_max=last)
        if not last:
            x2d = out.astype(jnp.bfloat16)                  # (T*B, D*H)
        # TODO(synk): inter-layer nn.GRU dropout omitted (inference semantics).
    return out                                              # (B, D*H)


# ------------------------- pure-JAX reference -------------------------------

def _ref_gru_layer(x, lengths, w_ih, w_hh, reverse):
    T, B, _ = x.shape
    H = w_hh.shape[0]
    hp = lax.Precision.HIGHEST

    def step(h, inp):
        x_t, t = inp
        gi = jnp.dot(x_t, w_ih, precision=hp)
        gh = jnp.dot(h, w_hh, precision=hp)
        r = jax.nn.sigmoid(gi[:, :H] + gh[:, :H])
        z = jax.nn.sigmoid(gi[:, H:2 * H] + gh[:, H:2 * H])
        n = jnp.tanh(gi[:, 2 * H:] + r * gh[:, 2 * H:])
        h_new = (1.0 - z) * n + z * h
        mask = (lengths > t).astype(jnp.float32)[:, None]
        return mask * h_new + (1.0 - mask) * h, mask * h_new

    ts = jnp.arange(T)
    xs = (x[::-1], ts[::-1]) if reverse else (x, ts)
    _, outs = lax.scan(step, jnp.zeros((B, H), jnp.float32), xs)
    return outs[::-1] if reverse else outs


def ref_forward(params, text, lengths, *, num_layers, bidirectional):
    emb = params["embed"][text]
    x = jnp.transpose(emb, (1, 0, 2))
    num_dirs = 2 if bidirectional else 1
    for layer in range(num_layers):
        outs = []
        for d in range(num_dirs):
            suffix = f"l{layer}" + ("_reverse" if d == 1 else "")
            outs.append(_ref_gru_layer(x, lengths,
                                       params[f"w_ih_{suffix}"],
                                       params[f"w_hh_{suffix}"], d == 1))
        x = jnp.concatenate(outs, axis=-1) if num_dirs == 2 else outs[0]
    return jnp.max(x, axis=0)


# ----------------------------------------------------------------------------

if __name__ == "__main__":
    B, T = 8, 8                       # batch multiple of 8 -> sublane-aligned
    vocab_size, embed_size = 50, 32
    hidden_dim, num_layers = 32, 2
    bidirectional = True

    key = jax.random.PRNGKey(0)
    k_p, k_tok, k_len = jax.random.split(key, 3)
    params = init_params(k_p, vocab_size, embed_size, hidden_dim,
                         num_layers, bidirectional)

    text = jax.random.randint(k_tok, (B, T), 1, vocab_size, jnp.int32)
    lengths = jax.random.randint(k_len, (B,), 1, T + 1, jnp.int32)
    # pad_packed_sequence pads to the batch-max length; keep max(lengths) == T
    lengths = lengths.at[0].set(T)
    # zero padding tokens beyond each length (padding_idx=0)
    text = jnp.where(jnp.arange(T)[None, :] < lengths[:, None], text, 0)

    out = gru_forward(params, text, lengths,
                      num_layers=num_layers, bidirectional=bidirectional)
    out = jax.block_until_ready(out)

    ref = ref_forward(params, text, lengths,
                      num_layers=num_layers, bidirectional=bidirectional)
    assert out.shape == (B, 2 * hidden_dim if bidirectional else hidden_dim)
    assert jnp.allclose(out, ref, atol=5e-2, rtol=5e-2), float(
        jnp.max(jnp.abs(out - ref)))

    print("KERNEL_OK")
</pallas_src>

<mosaic_0001>
module attributes {stable_mosaic.version = 11 : i64} {
  func.func @_bigru_layer_kernel(%arg0: i32, %arg1: memref<64x32xbf16, #tpu.memory_space<vmem>>, %arg2: memref<64x1xf32, #tpu.memory_space<vmem>>, %arg3: memref<2x32x96xbf16, #tpu.memory_space<vmem>>, %arg4: memref<2x32x96xbf16, #tpu.memory_space<vmem>>, %arg5: memref<64x64xf32, #tpu.memory_space<vmem>>, %arg6: memref<64x96xf32, #tpu.memory_space<vmem>>, %arg7: memref<64x96xf32, #tpu.memory_space<vmem>>, %arg8: memref<8x32xf32, #tpu.memory_space<vmem>>, %arg9: memref<8x32xf32, #tpu.memory_space<vmem>>) attributes {dimension_semantics = [#tpu.dimension_semantics<arbitrary>], iteration_bounds = array<i64: 1>, scalar_prefetch = 0 : i64, scratch_operands = 4 : i64, tpu.core_type = #tpu.core_type<tc>, window_params = [{pipeline_mode = #tpu.pipeline_mode<synchronous>, transform_indices = @transform_0, window_bounds = array<i64: 64, 32>}, {pipeline_mode = #tpu.pipeline_mode<synchronous>, transform_indices = @transform_1, window_bounds = array<i64: 64, 1>}, {pipeline_mode = #tpu.pipeline_mode<synchronous>, transform_indices = @transform_2, window_bounds = array<i64: 2, 32, 96>}, {pipeline_mode = #tpu.pipeline_mode<synchronous>, transform_indices = @transform_3, window_bounds = array<i64: 2, 32, 96>}, {pipeline_mode = #tpu.pipeline_mode<synchronous>, transform_indices = @transform_4, window_bounds = array<i64: 64, 64>}]} {
    %c0 = arith.constant 0 : index
    %c0_0 = arith.constant 0 : index
    %0 = vector.load %arg1[%c0, %c0_0] : memref<64x32xbf16, #tpu.memory_space<vmem>>, vector<64x32xbf16>
    %c0_1 = arith.constant 0 : index
    %c0_2 = arith.constant 0 : index
    %c0_3 = arith.constant 0 : index
    %1 = vector.load %arg3[%c0_1, %c0_2, %c0_3] : memref<2x32x96xbf16, #tpu.memory_space<vmem>>, vector<1x32x96xbf16>
    %2 = vector.shape_cast %1 : vector<1x32x96xbf16> to vector<32x96xbf16>
    %cst = arith.constant dense<0.000000e+00> : vector<64x96xf32>
    %3 = tpu.matmul %0, %2, %cst {dimension_numbers = #tpu.dot_dimension_numbers<[1], [0], [0], [1], [0, 0, 1, 1], [], []>} : vector<64x32xbf16>, vector<32x96xbf16>, vector<64x96xf32> -> vector<64x96xf32>
    %c0_4 = arith.constant 0 : index
    %c0_5 = arith.constant 0 : index
    %4 = vector.load %arg6[%c0_4, %c0_5] : memref<64x96xf32, #tpu.memory_space<vmem>>, vector<64x96xf32>
    tpu.vector_store %arg6[%c0_4, %c0_5], %3 {strides = array<i32>} : memref<64x96xf32, #tpu.memory_space<vmem>>, vector<64x96xf32>,
    %c1 = arith.constant 1 : index
    %c0_6 = arith.constant 0 : index
    %c0_7 = arith.constant 0 : index
    %5 = vector.load %arg3[%c1, %c0_6, %c0_7] : memref<2x32x96xbf16, #tpu.memory_space<vmem>>, vector<1x32x96xbf16>
    %6 = vector.shape_cast %5 : vector<1x32x96xbf16> to vector<32x96xbf16>
    %cst_8 = arith.constant dense<0.000000e+00> : vector<64x96xf32>
    %7 = tpu.matmul %0, %6, %cst_8 {dimension_numbers = #tpu.dot_dimension_numbers<[1], [0], [0], [1], [0, 0, 1, 1], [], []>} : vector<64x32xbf16>, vector<32x96xbf16>, vector<64x96xf32> -> vector<64x96xf32>
    %c0_9 = arith.constant 0 : index
    %c0_10 = arith.constant 0 : index
    %8 = vector.load %arg7[%c0_9, %c0_10] : memref<64x96xf32, #tpu.memory_space<vmem>>, vector<64x96xf32>
    tpu.vector_store %arg7[%c0_9, %c0_10], %7 {strides = array<i32>} : memref<64x96xf32, #tpu.memory_space<vmem>>, vector<64x96xf32>,
    %c0_11 = arith.constant 0 : index
    %c0_12 = arith.constant 0 : index
    %c0_13 = arith.constant 0 : index
    %9 = vector.load %arg4[%c0_11, %c0_12, %c0_13] : memref<2x32x96xbf16, #tpu.memory_space<vmem>>, vector<1x32x96xbf16>
    %10 = vector.shape_cast %9 : vector<1x32x96xbf16> to vector<32x96xbf16>
    %c1_14 = arith.constant 1 : index
    %c0_15 = arith.constant 0 : index
    %c0_16 = arith.constant 0 : index
    %11 = vector.load %arg4[%c1_14, %c0_15, %c0_16] : memref<2x32x96xbf16, #tpu.memory_space<vmem>>, vector<1x32x96xbf16>
    %12 = vector.shape_cast %11 : vector<1x32x96xbf16> to vector<32x96xbf16>
    %cst_17 = arith.constant 0.000000e+00 : f32
    %13 = vector.broadcast %cst_17 : f32 to vector<8x32xf32>
    %c0_18 = arith.constant 0 : index
    %c0_19 = arith.constant 0 : index
    %14 = vector.load %arg8[%c0_18, %c0_19] : memref<8x32xf32, #tpu.memory_space<vmem>>, vector<8x32xf32>
    tpu.vector_store %arg8[%c0_18, %c0_19], %13 {strides = array<i32>} : memref<8x32xf32, #tpu.memory_space<vmem>>, vector<8x32xf32>,
    %cst_20 = arith.constant 0.000000e+00 : f32
    %15 = vector.broadcast %cst_20 : f32 to vector<8x32xf32>
    %c0_21 = arith.constant 0 : index
    %c0_22 = arith.constant 0 : index
    %16 = vector.load %arg9[%c0_21, %c0_22] : memref<8x32xf32, #tpu.memory_space<vmem>>, vector<8x32xf32>
    tpu.vector_store %arg9[%c0_21, %c0_22], %15 {strides = array<i32>} : memref<8x32xf32, #tpu.memory_space<vmem>>, vector<8x32xf32>,
    %c0_i32 = arith.constant 0 : i32
    %c8_i32 = arith.constant 8 : i32
    %17 = arith.muli %c0_i32, %c8_i32 : i32
    %18 = tpu.assume_multiple %17, 8 : i32
    %19 = arith.index_cast %18 : i32 to index
    %c0_23 = arith.constant 0 : index
    %20 = vector.load %arg6[%19, %c0_23] : memref<64x96xf32, #tpu.memory_space<vmem>>, vector<8x96xf32>
    %c0_24 = arith.constant 0 : index
    %c0_25 = arith.constant 0 : index
    %21 = vector.load %arg8[%c0_24, %c0_25] : memref<8x32xf32, #tpu.memory_space<vmem>>, vector<8x32xf32>
    %22 = arith.truncf %21 : vector<8x32xf32> to vector<8x32xbf16>
    %cst_26 = arith.constant dense<0.000000e+00> : vector<8x96xf32>
    %23 = tpu.matmul %22, %10, %cst_26 {dimension_numbers = #tpu.dot_dimension_numbers<[1], [0], [0], [1], [0, 0, 1, 1], [], []>} : vector<8x32xbf16>, vector<32x96xbf16>, vector<8x96xf32> -> vector<8x96xf32>
    %24 = vector.extract_strided_slice %20 {offsets = [0, 0], sizes = [8, 32], strides = [1, 1]} : vector<8x96xf32> to vector<8x32xf32>
    %25 = vector.extract_strided_slice %23 {offsets = [0, 0], sizes = [8, 32], strides = [1, 1]} : vector<8x96xf32> to vector<8x32xf32>
    %26 = arith.addf %24, %25 : vector<8x32xf32>
    %27 = arith.negf %26 : vector<8x32xf32>
    %28 = math.exp %27 : vector<8x32xf32>
    %cst_27 = arith.constant 1.000000e+00 : f32
    %29 = vector.broadcast %cst_27 : f32 to vector<8x32xf32>
    %30 = arith.addf %29, %28 : vector<8x32xf32>
    %31 = arith.divf %29, %30 : vector<8x32xf32>
    %32 = vector.extract_strided_slice %20 {offsets = [0, 32], sizes = [8, 32], strides = [1, 1]} : vector<8x96xf32> to vector<8x32xf32>
    %33 = vector.extract_strided_slice %23 {offsets = [0, 32], sizes = [8, 32], strides = [1, 1]} : vector<8x96xf32> to vector<8x32xf32>
    %34 = arith.addf %32, %33 : vector<8x32xf32>
    %35 = arith.negf %34 : vector<8x32xf32>
    %36 = math.exp %35 : vector<8x32xf32>
    %cst_28 = arith.constant 1.000000e+00 : f32
    %37 = vector.broadcast %cst_28 : f32 to vector<8x32xf32>
    %38 = arith.addf %37, %36 : vector<8x32xf32>
    %39 = arith.divf %37, %38 : vector<8x32xf32>
    %40 = vector.extract_strided_slice %20 {offsets = [0, 64], sizes = [8, 32], strides = [1, 1]} : vector<8x96xf32> to vector<8x32xf32>
    %41 = vector.extract_strided_slice %23 {offsets = [0, 64], sizes = [8, 32], strides = [1, 1]} : vector<8x96xf32> to vector<8x32xf32>
    %42 = arith.mulf %31, %41 : vector<8x32xf32>
    %43 = arith.addf %40, %42 : vector<8x32xf32>
    %44 = math.tanh %43 : vector<8x32xf32>
    %cst_29 = arith.constant 1.000000e+00 : f32
    %45 = vector.broadcast %cst_29 : f32 to vector<8x32xf32>
    %46 = arith.subf %45, %39 : vector<8x32xf32>
    %47 = arith.mulf %46, %44 : vector<8x32xf32>
    %48 = arith.mulf %39, %21 : vector<8x32xf32>
    %49 = arith.addf %47, %48 : vector<8x32xf32>
    %50 = arith.index_cast %18 : i32 to index
    %c0_30 = arith.constant 0 : index
    %51 = vector.load %arg2[%50, %c0_30] : memref<64x1xf32, #tpu.memory_space<vmem>>, vector<8x1xf32>
    %52 = vector.broadcast %51 : vector<8x1xf32> to vector<8x32xf32>
    %53 = arith.mulf %52, %49 : vector<8x32xf32>
    %cst_31 = arith.constant 1.000000e+00 : f32
    %54 = vector.broadcast %cst_31 : f32 to vector<8x1xf32>
    %55 = arith.subf %54, %51 : vector<8x1xf32>
    %56 = vector.broadcast %55 : vector<8x1xf32> to vector<8x32xf32>
    %57 = arith.mulf %56, %21 : vector<8x32xf32>
    %58 = arith.addf %53, %57 : vector<8x32xf32>
    %c0_32 = arith.constant 0 : index
    %c0_33 = arith.constant 0 : index
    %59 = vector.load %arg8[%c0_32, %c0_33] : memref<8x32xf32, #tpu.memory_space<vmem>>, vector<8x32xf32>
    tpu.vector_store %arg8[%c0_32, %c0_33], %58 {strides = array<i32>} : memref<8x32xf32, #tpu.memory_space<vmem>>, vector<8x32xf32>,
    %60 = vector.broadcast %51 : vector<8x1xf32> to vector<8x32xf32>
    %61 = arith.mulf %60, %49 : vector<8x32xf32>
    %62 = arith.index_cast %18 : i32 to index
    %c0_34 = arith.constant 0 : index
    %63 = vector.load %arg5[%62, %c0_34] : memref<64x64xf32, #tpu.memory_space<vmem>>, vector<8x32xf32>
    tpu.vector_store %arg5[%62, %c0_34], %61 {strides = array<i32>} : memref<64x64xf32, #tpu.memory_space<vmem>>, vector<8x32xf32>,
    %c7_i32 = arith.constant 7 : i32
    %64 = arith.subi %c7_i32, %c0_i32 : i32
    %c8_i32_35 = arith.constant 8 : i32
    %65 = arith.muli %64, %c8_i32_35 : i32
    %66 = tpu.assume_multiple %65, 8 : i32
    %67 = arith.index_cast %66 : i32 to index
    %c0_36 = arith.constant 0 : index
    %68 = vector.load %arg7[%67, %c0_36] : memref<64x96xf32, #tpu.memory_space<vmem>>, vector<8x96xf32>
    %c0_37 = arith.constant 0 : index
    %c0_38 = arith.constant 0 : index
    %69 = vector.load %arg9[%c0_37, %c0_38] : memref<8x32xf32, #tpu.memory_space<vmem>>, vector<8x32xf32>
    %70 = arith.truncf %69 : vector<8x32xf32> to vector<8x32xbf16>
    %cst_39 = arith.constant dense<0.000000e+00> : vector<8x96xf32>
    %71 = tpu.matmul %70, %12, %cst_39 {dimension_numbers = #tpu.dot_dimension_numbers<[1], [0], [0], [1], [0, 0, 1, 1], [], []>} : vector<8x32xbf16>, vector<32x96xbf16>, vector<8x96xf32> -> vector<8x96xf32>
    %72 = vector.extract_strided_slice %68 {offsets = [0, 0], sizes = [8, 32], strides = [1, 1]} : vector<8x96xf32> to vector<8x32xf32>
    %73 = vector.extract_strided_slice %71 {offsets = [0, 0], sizes = [8, 32], strides = [1, 1]} : vector<8x96xf32> to vector<8x32xf32>
    %74 = arith.addf %72, %73 : vector<8x32xf32>
    %75 = arith.negf %74 : vector<8x32xf32>
    %76 = math.exp %75 : vector<8x32xf32>
    %cst_40 = arith.constant 1.000000e+00 : f32
    %77 = vector.broadcast %cst_40 : f32 to vector<8x32xf32>
    %78 = arith.addf %77, %76 : vector<8x32xf32>
    %79 = arith.divf %77, %78 : vector<8x32xf32>
    %80 = vector.extract_strided_slice %68 {offsets = [0, 32], sizes = [8, 32], strides = [1, 1]} : vector<8x96xf32> to vector<8x32xf32>
    %81 = vector.extract_strided_slice %71 {offsets = [0, 32], sizes = [8, 32], strides = [1, 1]} : vector<8x96xf32> to vector<8x32xf32>
    %82 = arith.addf %80, %81 : vector<8x32xf32>
    %83 = arith.negf %82 : vector<8x32xf32>
    %84 = math.exp %83 : vector<8x32xf32>
    %cst_41 = arith.constant 1.000000e+00 : f32
    %85 = vector.broadcast %cst_41 : f32 to vector<8x32xf32>
    %86 = arith.addf %85, %84 : vector<8x32xf32>
    %87 = arith.divf %85, %86 : vector<8x32xf32>
    %88 = vector.extract_strided_slice %68 {offsets = [0, 64], sizes = [8, 32], strides = [1, 1]} : vector<8x96xf32> to vector<8x32xf32>
    %89 = vector.extract_strided_slice %71 {offsets = [0, 64], sizes = [8, 32], strides = [1, 1]} : vector<8x96xf32> to vector<8x32xf32>
    %90 = arith.mulf %79, %89 : vector<8x32xf32>
    %91 = arith.addf %88, %90 : vector<8x32xf32>
    %92 = math.tanh %91 : vector<8x32xf32>
    %cst_42 = arith.constant 1.000000e+00 : f32
    %93 = vector.broadcast %cst_42 : f32 to vector<8x32xf32>
    %94 = arith.subf %93, %87 : vector<8x32xf32>
    %95 = arith.mulf %94, %92 : vector<8x32xf32>
    %96 = arith.mulf %87, %69 : vector<8x32xf32>
    %97 = arith.addf %95, %96 : vector<8x32xf32>
    %98 = arith.index_cast %66 : i32 to index
    %c0_43 = arith.constant 0 : index
    %99 = vector.load %arg2[%98, %c0_43] : memref<64x1xf32, #tpu.memory_space<vmem>>, vector<8x1xf32>
    %100 = vector.broadcast %99 : vector<8x1xf32> to vector<8x32xf32>
    %101 = arith.mulf %100, %97 : vector<8x32xf32>
    %cst_44 = arith.constant 1.000000e+00 : f32
    %102 = vector.broadcast %cst_44 : f32 to vector<8x1xf32>
    %103 = arith.subf %102, %99 : vector<8x1xf32>
    %104 = vector.broadcast %103 : vector<8x1xf32> to vector<8x32xf32>
    %105 = arith.mulf %104, %69 : vector<8x32xf32>
    %106 = arith.addf %101, %105 : vector<8x32xf32>
    %c0_45 = arith.constant 0 : index
    %c0_46 = arith.constant 0 : index
    %107 = vector.load %arg9[%c0_45, %c0_46] : memref<8x32xf32, #tpu.memory_space<vmem>>, vector<8x32xf32>
    tpu.vector_store %arg9[%c0_45, %c0_46], %106 {strides = array<i32>} : memref<8x32xf32, #tpu.memory_space<vmem>>, vector<8x32xf32>,
    %108 = vector.broadcast %99 : vector<8x1xf32> to vector<8x32xf32>
    %109 = arith.mulf %108, %97 : vector<8x32xf32>
    %110 = arith.index_cast %66 : i32 to index
    %c32 = arith.constant 32 : index
    %111 = vector.load %arg5[%110, %c32] : memref<64x64xf32, #tpu.memory_space<vmem>>, vector<8x32xf32>
    tpu.vector_store %arg5[%110, %c32], %109 {strides = array<i32>} : memref<64x64xf32, #tpu.memory_space<vmem>>, vector<8x32xf32>,
    %c1_i32 = arith.constant 1 : i32
    %c8_i32_47 = arith.constant 8 : i32
    %112 = arith.muli %c1_i32, %c8_i32_47 : i32
    %113 = tpu.assume_multiple %112, 8 : i32
    %114 = arith.index_cast %113 : i32 to index
    %c0_48 = arith.constant 0 : index
    %115 = vector.load %arg6[%114, %c0_48] : memref<64x96xf32, #tpu.memory_space<vmem>>, vector<8x96xf32>
    %c0_49 = arith.constant 0 : index
    %c0_50 = arith.constant 0 : index
    %116 = vector.load %arg8[%c0_49, %c0_50] : memref<8x32xf32, #tpu.memory_space<vmem>>, vector<8x32xf32>
    %117 = arith.truncf %116 : vector<8x32xf32> to vector<8x32xbf16>
    %cst_51 = arith.constant dense<0.000000e+00> : vector<8x96xf32>
    %118 = tpu.matmul %117, %10, %cst_51 {dimension_numbers = #tpu.dot_dimension_numbers<[1], [0], [0], [1], [0, 0, 1, 1], [], []>} : vector<8x32xbf16>, vector<32x96xbf16>, vector<8x96xf32> -> vector<8x96xf32>
    %119 = vector.extract_strided_slice %115 {offsets = [0, 0], sizes = [8, 32], strides = [1, 1]} : vector<8x96xf32> to vector<8x32xf32>
    %120 = vector.extract_strided_slice %118 {offsets = [0, 0], sizes = [8, 32], strides = [1, 1]} : vector<8x96xf32> to vector<8x32xf32>
    %121 = arith.addf %119, %120 : vector<8x32xf32>
    %122 = arith.negf %121 : vector<8x32xf32>
    %123 = math.exp %122 : vector<8x32xf32>
    %cst_52 = arith.constant 1.000000e+00 : f32
    %124 = vector.broadcast %cst_52 : f32 to vector<8x32xf32>
    %125 = arith.addf %124, %123 : vector<8x32xf32>
    %126 = arith.divf %124, %125 : vector<8x32xf32>
    %127 = vector.extract_strided_slice %115 {offsets = [0, 32], sizes = [8, 32], strides = [1, 1]} : vector<8x96xf32> to vector<8x32xf32>
    %128 = vector.extract_strided_slice %118 {offsets = [0, 32], sizes = [8, 32], strides = [1, 1]} : vector<8x96xf32> to vector<8x32xf32>
    %129 = arith.addf %127, %128 : vector<8x32xf32>
    %130 = arith.negf %129 : vector<8x32xf32>
    %131 = math.exp %130 : vector<8x32xf32>
    %cst_53 = arith.constant 1.000000e+00 : f32
    %132 = vector.broadcast %cst_53 : f32 to vector<8x32xf32>
    %133 = arith.addf %132, %131 : vector<8x32xf32>
    %134 = arith.divf %132, %133 : vector<8x32xf32>
    %135 = vector.extract_strided_slice %115 {offsets = [0, 64], sizes = [8, 32], strides = [1, 1]} : vector<8x96xf32> to vector<8x32xf32>
    %136 = vector.extract_strided_slice %118 {offsets = [0, 64], sizes = [8, 32], strides = [1, 1]} : vector<8x96xf32> to vector<8x32xf32>
    %137 = arith.mulf %126, %136 : vector<8x32xf32>
    %138 = arith.addf %135, %137 : vector<8x32xf32>
    %139 = math.tanh %138 : vector<8x32xf32>
    %cst_54 = arith.constant 1.000000e+00 : f32
    %140 = vector.broadcast %cst_54 : f32 to vector<8x32xf32>
    %141 = arith.subf %140, %134 : vector<8x32xf32>
    %142 = arith.mulf %141, %139 : vector<8x32xf32>
    %143 = arith.mulf %134, %116 : vector<8x32xf32>
    %144 = arith.addf %142, %143 : vector<8x32xf32>
    %145 = arith.index_cast %113 : i32 to index
    %c0_55 = arith.constant 0 : index
    %146 = vector.load %arg2[%145, %c0_55] : memref<64x1xf32, #tpu.memory_space<vmem>>, vector<8x1xf32>
    %147 = vector.broadcast %146 : vector<8x1xf32> to vector<8x32xf32>
    %148 = arith.mulf %147, %144 : vector<8x32xf32>
    %cst_56 = arith.constant 1.000000e+00 : f32
    %149 = vector.broadcast %cst_56 : f32 to vector<8x1xf32>
    %150 = arith.subf %149, %146 : vector<8x1xf32>
    %151 = vector.broadcast %150 : vector<8x1xf32> to vector<8x32xf32>
    %152 = arith.mulf %151, %116 : vector<8x32xf32>
    %153 = arith.addf %148, %152 : vector<8x32xf32>
    %c0_57 = arith.constant 0 : index
    %c0_58 = arith.constant 0 : index
    %154 = vector.load %arg8[%c0_57, %c0_58] : memref<8x32xf32, #tpu.memory_space<vmem>>, vector<8x32xf32>
    tpu.vector_store %arg8[%c0_57, %c0_58], %153 {strides = array<i32>} : memref<8x32xf32, #tpu.memory_space<vmem>>, vector<8x32xf32>,
    %155 = vector.broadcast %146 : vector<8x1xf32> to vector<8x32xf32>
    %156 = arith.mulf %155, %144 : vector<8x32xf32>
    %157 = arith.index_cast %113 : i32 to index
    %c0_59 = arith.constant 0 : index
    %158 = vector.load %arg5[%157, %c0_59] : memref<64x64xf32, #tpu.memory_space<vmem>>, vector<8x32xf32>
    tpu.vector_store %arg5[%157, %c0_59], %156 {strides = array<i32>} : memref<64x64xf32, #tpu.memory_space<vmem>>, vector<8x32xf32>,
    %c7_i32_60 = arith.constant 7 : i32
    %159 = arith.subi %c7_i32_60, %c1_i32 : i32
    %c8_i32_61 = arith.constant 8 : i32
    %160 = arith.muli %159, %c8_i32_61 : i32
    %161 = tpu.assume_multiple %160, 8 : i32
    %162 = arith.index_cast %161 : i32 to index
    %c0_62 = arith.constant 0 : index
    %163 = vector.load %arg7[%162, %c0_62] : memref<64x96xf32, #tpu.memory_space<vmem>>, vector<8x96xf32>
    %c0_63 = arith.constant 0 : index
    %c0_64 = arith.constant 0 : index
    %164 = vector.load %arg9[%c0_63, %c0_64] : memref<8x32xf32, #tpu.memory_space<vmem>>, vector<8x32xf32>
    %165 = arith.truncf %164 : vector<8x32xf32> to vector<8x32xbf16>
    %cst_65 = arith.constant dense<0.000000e+00> : vector<8x96xf32>
    %166 = tpu.matmul %165, %12, %cst_65 {dimension_numbers = #tpu.dot_dimension_numbers<[1], [0], [0], [1], [0, 0, 1, 1], [], []>} : vector<8x32xbf16>, vector<32x96xbf16>, vector<8x96xf32> -> vector<8x96xf32>
    %167 = vector.extract_strided_slice %163 {offsets = [0, 0], sizes = [8, 32], strides = [1, 1]} : vector<8x96xf32> to vector<8x32xf32>
    %168 = vector.extract_strided_slice %166 {offsets = [0, 0], sizes = [8, 32], strides = [1, 1]} : vector<8x96xf32> to vector<8x32xf32>
    %169 = arith.addf %167, %168 : vector<8x32xf32>
    %170 = arith.negf %169 : vector<8x32xf32>
    %171 = math.exp %170 : vector<8x32xf32>
    %cst_66 = arith.constant 1.000000e+00 : f32
    %172 = vector.broadcast %cst_66 : f32 to vector<8x32xf32>
    %173 = arith.addf %172, %171 : vector<8x32xf32>
    %174 = arith.divf %172, %173 : vector<8x32xf32>
    %175 = vector.extract_strided_slice %163 {offsets = [0, 32], sizes = [8, 32], strides = [1, 1]} : vector<8x96xf32> to vector<8x32xf32>
    %176 = vector.extract_strided_slice %166 {offsets = [0, 32], sizes = [8, 32], strides = [1, 1]} : vector<8x96xf32> to vector<8x32xf32>
    %177 = arith.addf %175, %176 : vector<8x32xf32>
    %178 = arith.negf %177 : vector<8x32xf32>
    %179 = math.exp %178 : vector<8x32xf32>
    %cst_67 = arith.constant 1.000000e+00 : f32
    %180 = vector.broadcast %cst_67 : f32 to vector<8x32xf32>
    %181 = arith.addf %180, %179 : vector<8x32xf32>
    %182 = arith.divf %180, %181 : vector<8x32xf32>
    %183 = vector.extract_strided_slice %163 {offsets = [0, 64], sizes = [8, 32], strides = [1, 1]} : vector<8x96xf32> to vector<8x32xf32>
    %184 = vector.extract_strided_slice %166 {offsets = [0, 64], sizes = [8, 32], strides = [1, 1]} : vector<8x96xf32> to vector<8x32xf32>
    %185 = arith.mulf %174, %184 : vector<8x32xf32>
    %186 = arith.addf %183, %185 : vector<8x32xf32>
    %187 = math.tanh %186 : vector<8x32xf32>
    %cst_68 = arith.constant 1.000000e+00 : f32
    %188 = vector.broadcast %cst_68 : f32 to vector<8x32xf32>
    %189 = arith.subf %188, %182 : vector<8x32xf32>
    %190 = arith.mulf %189, %187 : vector<8x32xf32>
    %191 = arith.mulf %182, %164 : vector<8x32xf32>
    %192 = arith.addf %190, %191 : vector<8x32xf32>
    %193 = arith.index_cast %161 : i32 to index
    %c0_69 = arith.constant 0 : index
    %194 = vector.load %arg2[%193, %c0_69] : memref<64x1xf32, #tpu.memory_space<vmem>>, vector<8x1xf32>
    %195 = vector.broadcast %194 : vector<8x1xf32> to vector<8x32xf32>
    %196 = arith.mulf %195, %192 : vector<8x32xf32>
    %cst_70 = arith.constant 1.000000e+00 : f32
    %197 = vector.broadcast %cst_70 : f32 to vector<8x1xf32>
    %198 = arith.subf %197, %194 : vector<8x1xf32>
    %199 = vector.broadcast %198 : vector<8x1xf32> to vector<8x32xf32>
    %200 = arith.mulf %199, %164 : vector<8x32xf32>
    %201 = arith.addf %196, %200 : vector<8x32xf32>
    %c0_71 = arith.constant 0 : index
    %c0_72 = arith.constant 0 : index
    %202 = vector.load %arg9[%c0_71, %c0_72] : memref<8x32xf32, #tpu.memory_space<vmem>>, vector<8x32xf32>
    tpu.vector_store %arg9[%c0_71, %c0_72], %201 {strides = array<i32>} : memref<8x32xf32, #tpu.memory_space<vmem>>, vector<8x32xf32>,
    %203 = vector.broadcast %194 : vector<8x1xf32> to vector<8x32xf32>
    %204 = arith.mulf %203, %192 : vector<8x32xf32>
    %205 = arith.index_cast %161 : i32 to index
    %c32_73 = arith.constant 32 : index
    %206 = vector.load %arg5[%205, %c32_73] : memref<64x64xf32, #tpu.memory_space<vmem>>, vector<8x32xf32>
    tpu.vector_store %arg5[%205, %c32_73], %204 {strides = array<i32>} : memref<64x64xf32, #tpu.memory_space<vmem>>, vector<8x32xf32>,
    %c2_i32 = arith.constant 2 : i32
    %c8_i32_74 = arith.constant 8 : i32
    %207 = arith.muli %c2_i32, %c8_i32_74 : i32
    %208 = tpu.assume_multiple %207, 8 : i32
    %209 = arith.index_cast %208 : i32 to index
    %c0_75 = arith.constant 0 : index
    %210 = vector.load %arg6[%209, %c0_75] : memref<64x96xf32, #tpu.memory_space<vmem>>, vector<8x96xf32>
    %c0_76 = arith.constant 0 : index
    %c0_77 = arith.constant 0 : index
    %211 = vector.load %arg8[%c0_76, %c0_77] : memref<8x32xf32, #tpu.memory_space<vmem>>, vector<8x32xf32>
    %212 = arith.truncf %211 : vector<8x32xf32> to vector<8x32xbf16>
    %cst_78 = arith.constant dense<0.000000e+00> : vector<8x96xf32>
    %213 = tpu.matmul %212, %10, %cst_78 {dimension_numbers = #tpu.dot_dimension_numbers<[1], [0], [0], [1], [0, 0, 1, 1], [], []>} : vector<8x32xbf16>, vector<32x96xbf16>, vector<8x96xf32> -> vector<8x96xf32>
    %214 = vector.extract_strided_slice %210 {offsets = [0, 0], sizes = [8, 32], strides = [1, 1]} : vector<8x96xf32> to vector<8x32xf32>
    %215 = vector.extract_strided_slice %213 {offsets = [0, 0], sizes = [8, 32], strides = [1, 1]} : vector<8x96xf32> to vector<8x32xf32>
    %216 = arith.addf %214, %215 : vector<8x32xf32>
    %217 = arith.negf %216 : vector<8x32xf32>
    %218 = math.exp %217 : vector<8x32xf32>
    %cst_79 = arith.constant 1.000000e+00 : f32
    %219 = vector.broadcast %cst_79 : f32 to vector<8x32xf32>
    %220 = arith.addf %219, %218 : vector<8x32xf32>
    %221 = arith.divf %219, %220 : vector<8x32xf32>
    %222 = vector.extract_strided_slice %210 {offsets = [0, 32], sizes = [8, 32], strides = [1, 1]} : vector<8x96xf32> to vector<8x32xf32>
    %223 = vector.extract_strided_slice %213 {offsets = [0, 32], sizes = [8, 32], strides = [1, 1]} : vector<8x96xf32> to vector<8x32xf32>
    %224 = arith.addf %222, %223 : vector<8x32xf32>
    %225 = arith.negf %224 : vector<8x32xf32>
    %226 = math.exp %225 : vector<8x32xf32>
    %cst_80 = arith.constant 1.000000e+00 : f32
    %227 = vector.broadcast %cst_80 : f32 to vector<8x32xf32>
    %228 = arith.addf %227, %226 : vector<8x32xf32>
    %229 = arith.divf %227, %228 : vector<8x32xf32>
    %230 = vector.extract_strided_slice %210 {offsets = [0, 64], sizes = [8, 32], strides = [1, 1]} : vector<8x96xf32> to vector<8x32xf32>
    %231 = vector.extract_strided_slice %213 {offsets = [0, 64], sizes = [8, 32], strides = [1, 1]} : vector<8x96xf32> to vector<8x32xf32>
    %232 = arith.mulf %221, %231 : vector<8x32xf32>
    %233 = arith.addf %230, %232 : vector<8x32xf32>
    %234 = math.tanh %233 : vector<8x32xf32>
    %cst_81 = arith.constant 1.000000e+00 : f32
    %235 = vector.broadcast %cst_81 : f32 to vector<8x32xf32>
    %236 = arith.subf %235, %229 : vector<8x32xf32>
    %237 = arith.mulf %236, %234 : vector<8x32xf32>
    %238 = arith.mulf %229, %211 : vector<8x32xf32>
    %239 = arith.addf %237, %238 : vector<8x32xf32>
    %240 = arith.index_cast %208 : i32 to index
    %c0_82 = arith.constant 0 : index
    %241 = vector.load %arg2[%240, %c0_82] : memref<64x1xf32, #tpu.memory_space<vmem>>, vector<8x1xf32>
    %242 = vector.broadcast %241 : vector<8x1xf32> to vector<8x32xf32>
    %243 = arith.mulf %242, %239 : vector<8x32xf32>
    %cst_83 = arith.constant 1.000000e+00 : f32
    %244 = vector.broadcast %cst_83 : f32 to vector<8x1xf32>
    %245 = arith.subf %244, %241 : vector<8x1xf32>
    %246 = vector.broadcast %245 : vector<8x1xf32> to vector<8x32xf32>
    %247 = arith.mulf %246, %211 : vector<8x32xf32>
    %248 = arith.addf %243, %247 : vector<8x32xf32>
    %c0_84 = arith.constant 0 : index
    %c0_85 = arith.constant 0 : index
    %249 = vector.load %arg8[%c0_84, %c0_85] : memref<8x32xf32, #tpu.memory_space<vmem>>, vector<8x32xf32>
    tpu.vector_store %arg8[%c0_84, %c0_85], %248 {strides = array<i32>} : memref<8x32xf32, #tpu.memory_space<vmem>>, vector<8x32xf32>,
    %250 = vector.broadcast %241 : vector<8x1xf32> to vector<8x32xf32>
    %251 = arith.mulf %250, %239 : vector<8x32xf32>
    %252 = arith.index_cast %208 : i32 to index
    %c0_86 = arith.constant 0 : index
    %253 = vector.load %arg5[%252, %c0_86] : memref<64x64xf32, #tpu.memory_space<vmem>>, vector<8x32xf32>
    tpu.vector_store %arg5[%252, %c0_86], %251 {strides = array<i32>} : memref<64x64xf32, #tpu.memory_space<vmem>>, vector<8x32xf32>,
    %c7_i32_87 = arith.constant 7 : i32
    %254 = arith.subi %c7_i32_87, %c2_i32 : i32
    %c8_i32_88 = arith.constant 8 : i32
    %255 = arith.muli %254, %c8_i32_88 : i32
    %256 = tpu.assume_multiple %255, 8 : i32
    %257 = arith.index_cast %256 : i32 to index
    %c0_89 = arith.constant 0 : index
    %258 = vector.load %arg7[%257, %c0_89] : memref<64x96xf32, #tpu.memory_space<vmem>>, vector<8x96xf32>
    %c0_90 = arith.constant 0 : index
    %c0_91 = arith.constant 0 : index
    %259 = vector.load %arg9[%c0_90, %c0_91] : memref<8x32xf32, #tpu.memory_space<vmem>>, vector<8x32xf32>
    %260 = arith.truncf %259 : vector<8x32xf32> to vector<8x32xbf16>
    %cst_92 = arith.constant dense<0.000000e+00> : vector<8x96xf32>
    %261 = tpu.matmul %260, %12, %cst_92 {dimension_numbers = #tpu.dot_dimension_numbers<[1], [0], [0], [1], [0, 0, 1, 1], [], []>} : vector<8x32xbf16>, vector<32x96xbf16>, vector<8x96xf32> -> vector<8x96xf32>
    %262 = vector.extract_strided_slice %258 {offsets = [0, 0], sizes = [8, 32], strides = [1, 1]} : vector<8x96xf32> to vector<8x32xf32>
    %263 = vector.extract_strided_slice %261 {offsets = [0, 0], sizes = [8, 32], strides = [1, 1]} : vector<8x96xf32> to vector<8x32xf32>
    %264 = arith.addf %262, %263 : vector<8x32xf32>
    %265 = arith.negf %264 : vector<8x32xf32>
    %266 = math.exp %265 : vector<8x32xf32>
    %cst_93 = arith.constant 1.000000e+00 : f32
    %267 = vector.broadcast %cst_93 : f32 to vector<8x32xf32>
    %268 = arith.addf %267, %266 : vector<8x32xf32>
    %269 = arith.divf %267, %268 : vector<8x32xf32>
    %270 = vector.extract_strided_slice %258 {offsets = [0, 32], sizes = [8, 32], strides = [1, 1]} : vector<8x96xf32> to vector<8x32xf32>
    %271 = vector.extract_strided_slice %261 {offsets = [0, 32], sizes = [8, 32], strides = [1, 1]} : vector<8x96xf32> to vector<8x32xf32>
    %272 = arith.addf %270, %271 : vector<8x32xf32>
    %273 = arith.negf %272 : vector<8x32xf32>
    %274 = math.exp %273 : vector<8x32xf32>
    %cst_94 = arith.constant 1.000000e+00 : f32
    %275 = vector.broadcast %cst_94 : f32 to vector<8x32xf32>
    %276 = arith.addf %275, %274 : vector<8x32xf32>
    %277 = arith.divf %275, %276 : vector<8x32xf32>
    %278 = vector.extract_strided_slice %258 {offsets = [0, 64], sizes = [8, 32], strides = [1, 1]} : vector<8x96xf32> to vector<8x32xf32>
    %279 = vector.extract_strided_slice %261 {offsets = [0, 64], sizes = [8, 32], strides = [1, 1]} : vector<8x96xf32> to vector<8x32xf32>
    %280 = arith.mulf %269, %279 : vector<8x32xf32>
    %281 = arith.addf %278, %280 : vector<8x32xf32>
    %282 = math.tanh %281 : vector<8x32xf32>
    %cst_95 = arith.constant 1.000000e+00 : f32
    %283 = vector.broadcast %cst_95 : f32 to vector<8x32xf32>
    %284 = arith.subf %283, %277 : vector<8x32xf32>
    %285 = arith.mulf %284, %282 : vector<8x32xf32>
    %286 = arith.mulf %277, %259 : vector<8x32xf32>
    %287 = arith.addf %285, %286 : vector<8x32xf32>
    %288 = arith.index_cast %256 : i32 to index
    %c0_96 = arith.constant 0 : index
    %289 = vector.load %arg2[%288, %c0_96] : memref<64x1xf32, #tpu.memory_space<vmem>>, vector<8x1xf32>
    %290 = vector.broadcast %289 : vector<8x1xf32> to vector<8x32xf32>
    %291 = arith.mulf %290, %287 : vector<8x32xf32>
    %cst_97 = arith.constant 1.000000e+00 : f32
    %292 = vector.broadcast %cst_97 : f32 to vector<8x1xf32>
    %293 = arith.subf %292, %289 : vector<8x1xf32>
    %294 = vector.broadcast %293 : vector<8x1xf32> to vector<8x32xf32>
    %295 = arith.mulf %294, %259 : vector<8x32xf32>
    %296 = arith.addf %291, %295 : vector<8x32xf32>
    %c0_98 = arith.constant 0 : index
    %c0_99 = arith.constant 0 : index
    %297 = vector.load %arg9[%c0_98, %c0_99] : memref<8x32xf32, #tpu.memory_space<vmem>>, vector<8x32xf32>
    tpu.vector_store %arg9[%c0_98, %c0_99], %296 {strides = array<i32>} : memref<8x32xf32, #tpu.memory_space<vmem>>, vector<8x32xf32>,
    %298 = vector.broadcast %289 : vector<8x1xf32> to vector<8x32xf32>
    %299 = arith.mulf %298, %287 : vector<8x32xf32>
    %300 = arith.index_cast %256 : i32 to index
    %c32_100 = arith.constant 32 : index
    %301 = vector.load %arg5[%300, %c32_100] : memref<64x64xf32, #tpu.memory_space<vmem>>, vector<8x32xf32>
    tpu.vector_store %arg5[%300, %c32_100], %299 {strides = array<i32>} : memref<64x64xf32, #tpu.memory_space<vmem>>, vector<8x32xf32>,
    %c3_i32 = arith.constant 3 : i32
    %c8_i32_101 = arith.constant 8 : i32
    %302 = arith.muli %c3_i32, %c8_i32_101 : i32
    %303 = tpu.assume_multiple %302, 8 : i32
    %304 = arith.index_cast %303 : i32 to index
    %c0_102 = arith.constant 0 : index
    %305 = vector.load %arg6[%304, %c0_102] : memref<64x96xf32, #tpu.memory_space<vmem>>, vector<8x96xf32>
    %c0_103 = arith.constant 0 : index
    %c0_104 = arith.constant 0 : index
    %306 = vector.load %arg8[%c0_103, %c0_104] : memref<8x32xf32, #tpu.memory_space<vmem>>, vector<8x32xf32>
    %307 = arith.truncf %306 : vector<8x32xf32> to vector<8x32xbf16>
    %cst_105 = arith.constant dense<0.000000e+00> : vector<8x96xf32>
    %308 = tpu.matmul %307, %10, %cst_105 {dimension_numbers = #tpu.dot_dimension_numbers<[1], [0], [0], [1], [0, 0, 1, 1], [], []>} : vector<8x32xbf16>, vector<32x96xbf16>, vector<8x96xf32> -> vector<8x96xf32>
    %309 = vector.extract_strided_slice %305 {offsets = [0, 0], sizes = [8, 32], strides = [1, 1]} : vector<8x96xf32> to vector<8x32xf32>
    %310 = vector.extract_strided_slice %308 {offsets = [0, 0], sizes = [8, 32], strides = [1, 1]} : vector<8x96xf32> to vector<8x32xf32>
    %311 = arith.addf %309, %310 : vector<8x32xf32>
    %312 = arith.negf %311 : vector<8x32xf32>
    %313 = math.exp %312 : vector<8x32xf32>
    %cst_106 = arith.constant 1.000000e+00 : f32
    %314 = vector.broadcast %cst_106 : f32 to vector<8x32xf32>
    %315 = arith.addf %314, %313 : vector<8x32xf32>
    %316 = arith.divf %314, %315 : vector<8x32xf32>
    %317 = vector.extract_strided_slice %305 {offsets = [0, 32], sizes = [8, 32], strides = [1, 1]} : vector<8x96xf32> to vector<8x32xf32>
    %318 = vector.extract_strided_slice %308 {offsets = [0, 32], sizes = [8, 32], strides = [1, 1]} : vector<8x96xf32> to vector<8x32xf32>
    %319 = arith.addf %317, %318 : vector<8x32xf32>
    %320 = arith.negf %319 : vector<8x32xf32>
    %321 = math.exp %320 : vector<8x32xf32>
    %cst_107 = arith.constant 1.000000e+00 : f32
    %322 = vector.broadcast %cst_107 : f32 to vector<8x32xf32>
    %323 = arith.addf %322, %321 : vector<8x32xf32>
    %324 = arith.divf %322, %323 : vector<8x32xf32>
    %325 = vector.extract_strided_slice %305 {offsets = [0, 64], sizes = [8, 32], strides = [1, 1]} : vector<8x96xf32> to vector<8x32xf32>
    %326 = vector.extract_strided_slice %308 {offsets = [0, 64], sizes = [8, 32], strides = [1, 1]} : vector<8x96xf32> to vector<8x32xf32>
    %327 = arith.mulf %316, %326 : vector<8x32xf32>
    %328 = arith.addf %325, %327 : vector<8x32xf32>
    %329 = math.tanh %328 : vector<8x32xf32>
    %cst_108 = arith.constant 1.000000e+00 : f32
    %330 = vector.broadcast %cst_108 : f32 to vector<8x32xf32>
    %331 = arith.subf %330, %324 : vector<8x32xf32>
    %332 = arith.mulf %331, %329 : vector<8x32xf32>
    %333 = arith.mulf %324, %306 : vector<8x32xf32>
    %334 = arith.addf %332, %333 : vector<8x32xf32>
    %335 = arith.index_cast %303 : i32 to index
    %c0_109 = arith.constant 0 : index
    %336 = vector.load %arg2[%335, %c0_109] : memref<64x1xf32, #tpu.memory_space<vmem>>, vector<8x1xf32>
    %337 = vector.broadcast %336 : vector<8x1xf32> to vector<8x32xf32>
    %338 = arith.mulf %337, %334 : vector<8x32xf32>
    %cst_110 = arith.constant 1.000000e+00 : f32
    %339 = vector.broadcast %cst_110 : f32 to vector<8x1xf32>
    %340 = arith.subf %339, %336 : vector<8x1xf32>
    %341 = vector.broadcast %340 : vector<8x1xf32> to vector<8x32xf32>
    %342 = arith.mulf %341, %306 : vector<8x32xf32>
    %343 = arith.addf %338, %342 : vector<8x32xf32>
    %c0_111 = arith.constant 0 : index
    %c0_112 = arith.constant 0 : index
    %344 = vector.load %arg8[%c0_111, %c0_112] : memref<8x32xf32, #tpu.memory_space<vmem>>, vector<8x32xf32>
    tpu.vector_store %arg8[%c0_111, %c0_112], %343 {strides = array<i32>} : memref<8x32xf32, #tpu.memory_space<vmem>>, vector<8x32xf32>,
    %345 = vector.broadcast %336 : vector<8x1xf32> to vector<8x32xf32>
    %346 = arith.mulf %345, %334 : vector<8x32xf32>
    %347 = arith.index_cast %303 : i32 to index
    %c0_113 = arith.constant 0 : index
    %348 = vector.load %arg5[%347, %c0_113] : memref<64x64xf32, #tpu.memory_space<vmem>>, vector<8x32xf32>
    tpu.vector_store %arg5[%347, %c0_113], %346 {strides = array<i32>} : memref<64x64xf32, #tpu.memory_space<vmem>>, vector<8x32xf32>,
    %c7_i32_114 = arith.constant 7 : i32
    %349 = arith.subi %c7_i32_114, %c3_i32 : i32
    %c8_i32_115 = arith.constant 8 : i32
    %350 = arith.muli %349, %c8_i32_115 : i32
    %351 = tpu.assume_multiple %350, 8 : i32
    %352 = arith.index_cast %351 : i32 to index
    %c0_116 = arith.constant 0 : index
    %353 = vector.load %arg7[%352, %c0_116] : memref<64x96xf32, #tpu.memory_space<vmem>>, vector<8x96xf32>
    %c0_117 = arith.constant 0 : index
    %c0_118 = arith.constant 0 : index
    %354 = vector.load %arg9[%c0_117, %c0_118] : memref<8x32xf32, #tpu.memory_space<vmem>>, vector<8x32xf32>
    %355 = arith.truncf %354 : vector<8x32xf32> to vector<8x32xbf16>
    %cst_119 = arith.constant dense<0.000000e+00> : vector<8x96xf32>
    %356 = tpu.matmul %355, %12, %cst_119 {dimension_numbers = #tpu.dot_dimension_numbers<[1], [0], [0], [1], [0, 0, 1, 1], [], []>} : vector<8x32xbf16>, vector<32x96xbf16>, vector<8x96xf32> -> vector<8x96xf32>
    %357 = vector.extract_strided_slice %353 {offsets = [0, 0], sizes = [8, 32], strides = [1, 1]} : vector<8x96xf32> to vector<8x32xf32>
    %358 = vector.extract_strided_slice %356 {offsets = [0, 0], sizes = [8, 32], strides = [1, 1]} : vector<8x96xf32> to vector<8x32xf32>
    %359 = arith.addf %357, %358 : vector<8x32xf32>
    %360 = arith.negf %359 : vector<8x32xf32>
    %361 = math.exp %360 : vector<8x32xf32>
    %cst_120 = arith.constant 1.000000e+00 : f32
    %362 = vector.broadcast %cst_120 : f32 to vector<8x32xf32>
    %363 = arith.addf %362, %361 : vector<8x32xf32>
    %364 = arith.divf %362, %363 : vector<8x32xf32>
    %365 = vector.extract_strided_slice %353 {offsets = [0, 32], sizes = [8, 32], strides = [1, 1]} : vector<8x96xf32> to vector<8x32xf32>
    %366 = vector.extract_strided_slice %356 {offsets = [0, 32], sizes = [8, 32], strides = [1, 1]} : vector<8x96xf32> to vector<8x32xf32>
    %367 = arith.addf %365, %366 : vector<8x32xf32>
    %368 = arith.negf %367 : vector<8x32xf32>
    %369 = math.exp %368 : vector<8x32xf32>
    %cst_121 = arith.constant 1.000000e+00 : f32
    %370 = vector.broadcast %cst_121 : f32 to vector<8x32xf32>
    %371 = arith.addf %370, %369 : vector<8x32xf32>
    %372 = arith.divf %370, %371 : vector<8x32xf32>
    %373 = vector.extract_strided_slice %353 {offsets = [0, 64], sizes = [8, 32], strides = [1, 1]} : vector<8x96xf32> to vector<8x32xf32>
    %374 = vector.extract_strided_slice %356 {offsets = [0, 64], sizes = [8, 32], strides = [1, 1]} : vector<8x96xf32> to vector<8x32xf32>
    %375 = arith.mulf %364, %374 : vector<8x32xf32>
    %376 = arith.addf %373, %375 : vector<8x32xf32>
    %377 = math.tanh %376 : vector<8x32xf32>
    %cst_122 = arith.constant 1.000000e+00 : f32
    %378 = vector.broadcast %cst_122 : f32 to vector<8x32xf32>
    %379 = arith.subf %378, %372 : vector<8x32xf32>
    %380 = arith.mulf %379, %377 : vector<8x32xf32>
    %381 = arith.mulf %372, %354 : vector<8x32xf32>
    %382 = arith.addf %380, %381 : vector<8x32xf32>
    %383 = arith.index_cast %351 : i32 to index
    %c0_123 = arith.constant 0 : index
    %384 = vector.load %arg2[%383, %c0_123] : memref<64x1xf32, #tpu.memory_space<vmem>>, vector<8x1xf32>
    %385 = vector.broadcast %384 : vector<8x1xf32> to vector<8x32xf32>
    %386 = arith.mulf %385, %382 : vector<8x32xf32>
    %cst_124 = arith.constant 1.000000e+00 : f32
    %387 = vector.broadcast %cst_124 : f32 to vector<8x1xf32>
    %388 = arith.subf %387, %384 : vector<8x1xf32>
    %389 = vector.broadcast %388 : vector<8x1xf32> to vector<8x32xf32>
    %390 = arith.mulf %389, %354 : vector<8x32xf32>
    %391 = arith.addf %386, %390 : vector<8x32xf32>
    %c0_125 = arith.constant 0 : index
    %c0_126 = arith.constant 0 : index
    %392 = vector.load %arg9[%c0_125, %c0_126] : memref<8x32xf32, #tpu.memory_space<vmem>>, vector<8x32xf32>
    tpu.vector_store %arg9[%c0_125, %c0_126], %391 {strides = array<i32>} : memref<8x32xf32, #tpu.memory_space<vmem>>, vector<8x32xf32>,
    %393 = vector.broadcast %384 : vector<8x1xf32> to vector<8x32xf32>
    %394 = arith.mulf %393, %382 : vector<8x32xf32>
    %395 = arith.index_cast %351 : i32 to index
    %c32_127 = arith.constant 32 : index
    %396 = vector.load %arg5[%395, %c32_127] : memref<64x64xf32, #tpu.memory_space<vmem>>, vector<8x32xf32>
    tpu.vector_store %arg5[%395, %c32_127], %394 {strides = array<i32>} : memref<64x64xf32, #tpu.memory_space<vmem>>, vector<8x32xf32>,
    %c4_i32 = arith.constant 4 : i32
    %c8_i32_128 = arith.constant 8 : i32
    %397 = arith.muli %c4_i32, %c8_i32_128 : i32
    %398 = tpu.assume_multiple %397, 8 : i32
    %399 = arith.index_cast %398 : i32 to index
    %c0_129 = arith.constant 0 : index
    %400 = vector.load %arg6[%399, %c0_129] : memref<64x96xf32, #tpu.memory_space<vmem>>, vector<8x96xf32>
    %c0_130 = arith.constant 0 : index
    %c0_131 = arith.constant 0 : index
    %401 = vector.load %arg8[%c0_130, %c0_131] : memref<8x32xf32, #tpu.memory_space<vmem>>, vector<8x32xf32>
    %402 = arith.truncf %401 : vector<8x32xf32> to vector<8x32xbf16>
    %cst_132 = arith.constant dense<0.000000e+00> : vector<8x96xf32>
    %403 = tpu.matmul %402, %10, %cst_132 {dimension_numbers = #tpu.dot_dimension_numbers<[1], [0], [0], [1], [0, 0, 1, 1], [], []>} : vector<8x32xbf16>, vector<32x96xbf16>, vector<8x96xf32> -> vector<8x96xf32>
    %404 = vector.extract_strided_slice %400 {offsets = [0, 0], sizes = [8, 32], strides = [1, 1]} : vector<8x96xf32> to vector<8x32xf32>
    %405 = vector.extract_strided_slice %403 {offsets = [0, 0], sizes = [8, 32], strides = [1, 1]} : vector<8x96xf32> to vector<8x32xf32>
    %406 = arith.addf %404, %405 : vector<8x32xf32>
    %407 = arith.negf %406 : vector<8x32xf32>
    %408 = math.exp %407 : vector<8x32xf32>
    %cst_133 = arith.constant 1.000000e+00 : f32
    %409 = vector.broadcast %cst_133 : f32 to vector<8x32xf32>
    %410 = arith.addf %409, %408 : vector<8x32xf32>
    %411 = arith.divf %409, %410 : vector<8x32xf32>
    %412 = vector.extract_strided_slice %400 {offsets = [0, 32], sizes = [8, 32], strides = [1, 1]} : vector<8x96xf32> to vector<8x32xf32>
    %413 = vector.extract_strided_slice %403 {offsets = [0, 32], sizes = [8, 32], strides = [1, 1]} : vector<8x96xf32> to vector<8x32xf32>
    %414 = arith.addf %412, %413 : vector<8x32xf32>
    %415 = arith.negf %414 : vector<8x32xf32>
    %416 = math.exp %415 : vector<8x32xf32>
    %cst_134 = arith.constant 1.000000e+00 : f32
    %417 = vector.broadcast %cst_134 : f32 to vector<8x32xf32>
    %418 = arith.addf %417, %416 : vector<8x32xf32>
    %419 = arith.divf %417, %418 : vector<8x32xf32>
    %420 = vector.extract_strided_slice %400 {offsets = [0, 64], sizes = [8, 32], strides = [1, 1]} : vector<8x96xf32> to vector<8x32xf32>
    %421 = vector.extract_strided_slice %403 {offsets = [0, 64], sizes = [8, 32], strides = [1, 1]} : vector<8x96xf32> to vector<8x32xf32>
    %422 = arith.mulf %411, %421 : vector<8x32xf32>
    %423 = arith.addf %420, %422 : vector<8x32xf32>
    %424 = math.tanh %423 : vector<8x32xf32>
    %cst_135 = arith.constant 1.000000e+00 : f32
    %425 = vector.broadcast %cst_135 : f32 to vector<8x32xf32>
    %426 = arith.subf %425, %419 : vector<8x32xf32>
    %427 = arith.mulf %426, %424 : vector<8x32xf32>
    %428 = arith.mulf %419, %401 : vector<8x32xf32>
    %429 = arith.addf %427, %428 : vector<8x32xf32>
    %430 = arith.index_cast %398 : i32 to index
    %c0_136 = arith.constant 0 : index
    %431 = vector.load %arg2[%430, %c0_136] : memref<64x1xf32, #tpu.memory_space<vmem>>, vector<8x1xf32>
    %432 = vector.broadcast %431 : vector<8x1xf32> to vector<8x32xf32>
    %433 = arith.mulf %432, %429 : vector<8x32xf32>
    %cst_137 = arith.constant 1.000000e+00 : f32
    %434 = vector.broadcast %cst_137 : f32 to vector<8x1xf32>
    %435 = arith.subf %434, %431 : vector<8x1xf32>
    %436 = vector.broadcast %435 : vector<8x1xf32> to vector<8x32xf32>
    %437 = arith.mulf %436, %401 : vector<8x32xf32>
    %438 = arith.addf %433, %437 : vector<8x32xf32>
    %c0_138 = arith.constant 0 : index
    %c0_139 = arith.constant 0 : index
    %439 = vector.load %arg8[%c0_138, %c0_139] : memref<8x32xf32, #tpu.memory_space<vmem>>, vector<8x32xf32>
    tpu.vector_store %arg8[%c0_138, %c0_139], %438 {strides = array<i32>} : memref<8x32xf32, #tpu.memory_space<vmem>>, vector<8x32xf32>,
    %440 = vector.broadcast %431 : vector<8x1xf32> to vector<8x32xf32>
    %441 = arith.mulf %440, %429 : vector<8x32xf32>
    %442 = arith.index_cast %398 : i32 to index
    %c0_140 = arith.constant 0 : index
    %443 = vector.load %arg5[%442, %c0_140] : memref<64x64xf32, #tpu.memory_space<vmem>>, vector<8x32xf32>
    tpu.vector_store %arg5[%442, %c0_140], %441 {strides = array<i32>} : memref<64x64xf32, #tpu.memory_space<vmem>>, vector<8x32xf32>,
    %c7_i32_141 = arith.constant 7 : i32
    %444 = arith.subi %c7_i32_141, %c4_i32 : i32
    %c8_i32_142 = arith.constant 8 : i32
    %445 = arith.muli %444, %c8_i32_142 : i32
    %446 = tpu.assume_multiple %445, 8 : i32
    %447 = arith.index_cast %446 : i32 to index
    %c0_143 = arith.constant 0 : index
    %448 = vector.load %arg7[%447, %c0_143] : memref<64x96xf32, #tpu.memory_space<vmem>>, vector<8x96xf32>
    %c0_144 = arith.constant 0 : index
    %c0_145 = arith.constant 0 : index
    %449 = vector.load %arg9[%c0_144, %c0_145] : memref<8x32xf32, #tpu.memory_space<vmem>>, vector<8x32xf32>
    %450 = arith.truncf %449 : vector<8x32xf32> to vector<8x32xbf16>
    %cst_146 = arith.constant dense<0.000000e+00> : vector<8x96xf32>
    %451 = tpu.matmul %450, %12, %cst_146 {dimension_numbers = #tpu.dot_dimension_numbers<[1], [0], [0], [1], [0, 0, 1, 1], [], []>} : vector<8x32xbf16>, vector<32x96xbf16>, vector<8x96xf32> -> vector<8x96xf32>
    %452 = vector.extract_strided_slice %448 {offsets = [0, 0], sizes = [8, 32], strides = [1, 1]} : vector<8x96xf32> to vector<8x32xf32>
    %453 = vector.extract_strided_slice %451 {offsets = [0, 0], sizes = [8, 32], strides = [1, 1]} : vector<8x96xf32> to vector<8x32xf32>
    %454 = arith.addf %452, %453 : vector<8x32xf32>
    %455 = arith.negf %454 : vector<8x32xf32>
    %456 = math.exp %455 : vector<8x32xf32>
    %cst_147 = arith.constant 1.000000e+00 : f32
    %457 = vector.broadcast %cst_147 : f32 to vector<8x32xf32>
    %458 = arith.addf %457, %456 : vector<8x32xf32>
    %459 = arith.divf %457, %458 : vector<8x32xf32>
    %460 = vector.extract_strided_slice %448 {offsets = [0, 32], sizes = [8, 32], strides = [1, 1]} : vector<8x96xf32> to vector<8x32xf32>
    %461 = vector.extract_strided_slice %451 {offsets = [0, 32], sizes = [8, 32], strides = [1, 1]} : vector<8x96xf32> to vector<8x32xf32>
    %462 = arith.addf %460, %461 : vector<8x32xf32>
    %463 = arith.negf %462 : vector<8x32xf32>
    %464 = math.exp %463 : vector<8x32xf32>
    %cst_148 = arith.constant 1.000000e+00 : f32
    %465 = vector.broadcast %cst_148 : f32 to vector<8x32xf32>
    %466 = arith.addf %465, %464 : vector<8x32xf32>
    %467 = arith.divf %465, %466 : vector<8x32xf32>
    %468 = vector.extract_strided_slice %448 {offsets = [0, 64], sizes = [8, 32], strides = [1, 1]} : vector<8x96xf32> to vector<8x32xf32>
    %469 = vector.extract_strided_slice %451 {offsets = [0, 64], sizes = [8, 32], strides = [1, 1]} : vector<8x96xf32> to vector<8x32xf32>
    %470 = arith.mulf %459, %469 : vector<8x32xf32>
    %471 = arith.addf %468, %470 : vector<8x32xf32>
    %472 = math.tanh %471 : vector<8x32xf32>
    %cst_149 = arith.constant 1.000000e+00 : f32
    %473 = vector.broadcast %cst_149 : f32 to vector<8x32xf32>
    %474 = arith.subf %473, %467 : vector<8x32xf32>
    %475 = arith.mulf %474, %472 : vector<8x32xf32>
    %476 = arith.mulf %467, %449 : vector<8x32xf32>
    %477 = arith.addf %475, %476 : vector<8x32xf32>
    %478 = arith.index_cast %446 : i32 to index
    %c0_150 = arith.constant 0 : index
    %479 = vector.load %arg2[%478, %c0_150] : memref<64x1xf32, #tpu.memory_space<vmem>>, vector<8x1xf32>
    %480 = vector.broadcast %479 : vector<8x1xf32> to vector<8x32xf32>
    %481 = arith.mulf %480, %477 : vector<8x32xf32>
    %cst_151 = arith.constant 1.000000e+00 : f32
    %482 = vector.broadcast %cst_151 : f32 to vector<8x1xf32>
    %483 = arith.subf %482, %479 : vector<8x1xf32>
    %484 = vector.broadcast %483 : vector<8x1xf32> to vector<8x32xf32>
    %485 = arith.mulf %484, %449 : vector<8x32xf32>
    %486 = arith.addf %481, %485 : vector<8x32xf32>
    %c0_152 = arith.constant 0 : index
    %c0_153 = arith.constant 0 : index
    %487 = vector.load %arg9[%c0_152, %c0_153] : memref<8x32xf32, #tpu.memory_space<vmem>>, vector<8x32xf32>
    tpu.vector_store %arg9[%c0_152, %c0_153], %486 {strides = array<i32>} : memref<8x32xf32, #tpu.memory_space<vmem>>, vector<8x32xf32>,
    %488 = vector.broadcast %479 : vector<8x1xf32> to vector<8x32xf32>
    %489 = arith.mulf %488, %477 : vector<8x32xf32>
    %490 = arith.index_cast %446 : i32 to index
    %c32_154 = arith.constant 32 : index
    %491 = vector.load %arg5[%490, %c32_154] : memref<64x64xf32, #tpu.memory_space<vmem>>, vector<8x32xf32>
    tpu.vector_store %arg5[%490, %c32_154], %489 {strides = array<i32>} : memref<64x64xf32, #tpu.memory_space<vmem>>, vector<8x32xf32>,
    %c5_i32 = arith.constant 5 : i32
    %c8_i32_155 = arith.constant 8 : i32
    %492 = arith.muli %c5_i32, %c8_i32_155 : i32
    %493 = tpu.assume_multiple %492, 8 : i32
    %494 = arith.index_cast %493 : i32 to index
    %c0_156 = arith.constant 0 : index
    %495 = vector.load %arg6[%494, %c0_156] : memref<64x96xf32, #tpu.memory_space<vmem>>, vector<8x96xf32>
    %c0_157 = arith.constant 0 : index
    %c0_158 = arith.constant 0 : index
    %496 = vector.load %arg8[%c0_157, %c0_158] : memref<8x32xf32, #tpu.memory_space<vmem>>, vector<8x32xf32>
    %497 = arith.truncf %496 : vector<8x32xf32> to vector<8x32xbf16>
    %cst_159 = arith.constant dense<0.000000e+00> : vector<8x96xf32>
    %498 = tpu.matmul %497, %10, %cst_159 {dimension_numbers = #tpu.dot_dimension_numbers<[1], [0], [0], [1], [0, 0, 1, 1], [], []>} : vector<8x32xbf16>, vector<32x96xbf16>, vector<8x96xf32> -> vector<8x96xf32>
    %499 = vector.extract_strided_slice %495 {offsets = [0, 0], sizes = [8, 32], strides = [1, 1]} : vector<8x96xf32> to vector<8x32xf32>
    %500 = vector.extract_strided_slice %498 {offsets = [0, 0], sizes = [8, 32], strides = [1, 1]} : vector<8x96xf32> to vector<8x32xf32>
    %501 = arith.addf %499, %500 : vector<8x32xf32>
    %502 = arith.negf %501 : vector<8x32xf32>
    %503 = math.exp %502 : vector<8x32xf32>
    %cst_160 = arith.constant 1.000000e+00 : f32
    %504 = vector.broadcast %cst_160 : f32 to vector<8x32xf32>
    %505 = arith.addf %504, %503 : vector<8x32xf32>
    %506 = arith.divf %504, %505 : vector<8x32xf32>
    %507 = vector.extract_strided_slice %495 {offsets = [0, 32], sizes = [8, 32], strides = [1, 1]} : vector<8x96xf32> to vector<8x32xf32>
    %508 = vector.extract_strided_slice %498 {offsets = [0, 32], sizes = [8, 32], strides = [1, 1]} : vector<8x96xf32> to vector<8x32xf32>
    %509 = arith.addf %507, %508 : vector<8x32xf32>
    %510 = arith.negf %509 : vector<8x32xf32>
    %511 = math.exp %510 : vector<8x32xf32>
    %cst_161 = arith.constant 1.000000e+00 : f32
    %512 = vector.broadcast %cst_161 : f32 to vector<8x32xf32>
    %513 = arith.addf %512, %511 : vector<8x32xf32>
    %514 = arith.divf %512, %513 : vector<8x32xf32>
    %515 = vector.extract_strided_slice %495 {offsets = [0, 64], sizes = [8, 32], strides = [1, 1]} : vector<8x96xf32> to vector<8x32xf32>
    %516 = vector.extract_strided_slice %498 {offsets = [0, 64], sizes = [8, 32], strides = [1, 1]} : vector<8x96xf32> to vector<8x32xf32>
    %517 = arith.mulf %506, %516 : vector<8x32xf32>
    %518 = arith.addf %515, %517 : vector<8x32xf32>
    %519 = math.tanh %518 : vector<8x32xf32>
    %cst_162 = arith.constant 1.000000e+00 : f32
    %520 = vector.broadcast %cst_162 : f32 to vector<8x32xf32>
    %521 = arith.subf %520, %514 : vector<8x32xf32>
    %522 = arith.mulf %521, %519 : vector<8x32xf32>
    %523 = arith.mulf %514, %496 : vector<8x32xf32>
    %524 = arith.addf %522, %523 : vector<8x32xf32>
    %525 = arith.index_cast %493 : i32 to index
    %c0_163 = arith.constant 0 : index
    %526 = vector.load %arg2[%525, %c0_163] : memref<64x1xf32, #tpu.memory_space<vmem>>, vector<8x1xf32>
    %527 = vector.broadcast %526 : vector<8x1xf32> to vector<8x32xf32>
    %528 = arith.mulf %527, %524 : vector<8x32xf32>
    %cst_164 = arith.constant 1.000000e+00 : f32
    %529 = vector.broadcast %cst_164 : f32 to vector<8x1xf32>
    %530 = arith.subf %529, %526 : vector<8x1xf32>
    %531 = vector.broadcast %530 : vector<8x1xf32> to vector<8x32xf32>
    %532 = arith.mulf %531, %496 : vector<8x32xf32>
    %533 = arith.addf %528, %532 : vector<8x32xf32>
    %c0_165 = arith.constant 0 : index
    %c0_166 = arith.constant 0 : index
    %534 = vector.load %arg8[%c0_165, %c0_166] : memref<8x32xf32, #tpu.memory_space<vmem>>, vector<8x32xf32>
    tpu.vector_store %arg8[%c0_165, %c0_166], %533 {strides = array<i32>} : memref<8x32xf32, #tpu.memory_space<vmem>>, vector<8x32xf32>,
    %535 = vector.broadcast %526 : vector<8x1xf32> to vector<8x32xf32>
    %536 = arith.mulf %535, %524 : vector<8x32xf32>
    %537 = arith.index_cast %493 : i32 to index
    %c0_167 = arith.constant 0 : index
    %538 = vector.load %arg5[%537, %c0_167] : memref<64x64xf32, #tpu.memory_space<vmem>>, vector<8x32xf32>
    tpu.vector_store %arg5[%537, %c0_167], %536 {strides = array<i32>} : memref<64x64xf32, #tpu.memory_space<vmem>>, vector<8x32xf32>,
    %c7_i32_168 = arith.constant 7 : i32
    %539 = arith.subi %c7_i32_168, %c5_i32 : i32
    %c8_i32_169 = arith.constant 8 : i32
    %540 = arith.muli %539, %c8_i32_169 : i32
    %541 = tpu.assume_multiple %540, 8 : i32
    %542 = arith.index_cast %541 : i32 to index
    %c0_170 = arith.constant 0 : index
    %543 = vector.load %arg7[%542, %c0_170] : memref<64x96xf32, #tpu.memory_space<vmem>>, vector<8x96xf32>
    %c0_171 = arith.constant 0 : index
    %c0_172 = arith.constant 0 : index
    %544 = vector.load %arg9[%c0_171, %c0_172] : memref<8x32xf32, #tpu.memory_space<vmem>>, vector<8x32xf32>
    %545 = arith.truncf %544 : vector<8x32xf32> to vector<8x32xbf16>
    %cst_173 = arith.constant dense<0.000000e+00> : vector<8x96xf32>
    %546 = tpu.matmul %545, %12, %cst_173 {dimension_numbers = #tpu.dot_dimension_numbers<[1], [0], [0], [1], [0, 0, 1, 1], [], []>} : vector<8x32xbf16>, vector<32x96xbf16>, vector<8x96xf32> -> vector<8x96xf32>
    %547 = vector.extract_strided_slice %543 {offsets = [0, 0], sizes = [8, 32], strides = [1, 1]} : vector<8x96xf32> to vector<8x32xf32>
    %548 = vector.extract_strided_slice %546 {offsets = [0, 0], sizes = [8, 32], strides = [1, 1]} : vector<8x96xf32> to vector<8x32xf32>
    %549 = arith.addf %547, %548 : vector<8x32xf32>
    %550 = arith.negf %549 : vector<8x32xf32>
    %551 = math.exp %550 : vector<8x32xf32>
    %cst_174 = arith.constant 1.000000e+00 : f32
    %552 = vector.broadcast %cst_174 : f32 to vector<8x32xf32>
    %553 = arith.addf %552, %551 : vector<8x32xf32>
    %554 = arith.divf %552, %553 : vector<8x32xf32>
    %555 = vector.extract_strided_slice %543 {offsets = [0, 32], sizes = [8, 32], strides = [1, 1]} : vector<8x96xf32> to vector<8x32xf32>
    %556 = vector.extract_strided_slice %546 {offsets = [0, 32], sizes = [8, 32], strides = [1, 1]} : vector<8x96xf32> to vector<8x32xf32>
    %557 = arith.addf %555, %556 : vector<8x32xf32>
    %558 = arith.negf %557 : vector<8x32xf32>
    %559 = math.exp %558 : vector<8x32xf32>
    %cst_175 = arith.constant 1.000000e+00 : f32
    %560 = vector.broadcast %cst_175 : f32 to vector<8x32xf32>
    %561 = arith.addf %560, %559 : vector<8x32xf32>
    %562 = arith.divf %560, %561 : vector<8x32xf32>
    %563 = vector.extract_strided_slice %543 {offsets = [0, 64], sizes = [8, 32], strides = [1, 1]} : vector<8x96xf32> to vector<8x32xf32>
    %564 = vector.extract_strided_slice %546 {offsets = [0, 64], sizes = [8, 32], strides = [1, 1]} : vector<8x96xf32> to vector<8x32xf32>
    %565 = arith.mulf %554, %564 : vector<8x32xf32>
    %566 = arith.addf %563, %565 : vector<8x32xf32>
    %567 = math.tanh %566 : vector<8x32xf32>
    %cst_176 = arith.constant 1.000000e+00 : f32
    %568 = vector.broadcast %cst_176 : f32 to vector<8x32xf32>
    %569 = arith.subf %568, %562 : vector<8x32xf32>
    %570 = arith.mulf %569, %567 : vector<8x32xf32>
    %571 = arith.mulf %562, %544 : vector<8x32xf32>
    %572 = arith.addf %570, %571 : vector<8x32xf32>
    %573 = arith.index_cast %541 : i32 to index
    %c0_177 = arith.constant 0 : index
    %574 = vector.load %arg2[%573, %c0_177] : memref<64x1xf32, #tpu.memory_space<vmem>>, vector<8x1xf32>
    %575 = vector.broadcast %574 : vector<8x1xf32> to vector<8x32xf32>
    %576 = arith.mulf %575, %572 : vector<8x32xf32>
    %cst_178 = arith.constant 1.000000e+00 : f32
    %577 = vector.broadcast %cst_178 : f32 to vector<8x1xf32>
    %578 = arith.subf %577, %574 : vector<8x1xf32>
    %579 = vector.broadcast %578 : vector<8x1xf32> to vector<8x32xf32>
    %580 = arith.mulf %579, %544 : vector<8x32xf32>
    %581 = arith.addf %576, %580 : vector<8x32xf32>
    %c0_179 = arith.constant 0 : index
    %c0_180 = arith.constant 0 : index
    %582 = vector.load %arg9[%c0_179, %c0_180] : memref<8x32xf32, #tpu.memory_space<vmem>>, vector<8x32xf32>
    tpu.vector_store %arg9[%c0_179, %c0_180], %581 {strides = array<i32>} : memref<8x32xf32, #tpu.memory_space<vmem>>, vector<8x32xf32>,
    %583 = vector.broadcast %574 : vector<8x1xf32> to vector<8x32xf32>
    %584 = arith.mulf %583, %572 : vector<8x32xf32>
    %585 = arith.index_cast %541 : i32 to index
    %c32_181 = arith.constant 32 : index
    %586 = vector.load %arg5[%585, %c32_181] : memref<64x64xf32, #tpu.memory_space<vmem>>, vector<8x32xf32>
    tpu.vector_store %arg5[%585, %c32_181], %584 {strides = array<i32>} : memref<64x64xf32, #tpu.memory_space<vmem>>, vector<8x32xf32>,
    %c6_i32 = arith.constant 6 : i32
    %c8_i32_182 = arith.constant 8 : i32
    %587 = arith.muli %c6_i32, %c8_i32_182 : i32
    %588 = tpu.assume_multiple %587, 8 : i32
    %589 = arith.index_cast %588 : i32 to index
    %c0_183 = arith.constant 0 : index
    %590 = vector.load %arg6[%589, %c0_183] : memref<64x96xf32, #tpu.memory_space<vmem>>, vector<8x96xf32>
    %c0_184 = arith.constant 0 : index
    %c0_185 = arith.constant 0 : index
    %591 = vector.load %arg8[%c0_184, %c0_185] : memref<8x32xf32, #tpu.memory_space<vmem>>, vector<8x32xf32>
    %592 = arith.truncf %591 : vector<8x32xf32> to vector<8x32xbf16>
    %cst_186 = arith.constant dense<0.000000e+00> : vector<8x96xf32>
    %593 = tpu.matmul %592, %10, %cst_186 {dimension_numbers = #tpu.dot_dimension_numbers<[1], [0], [0], [1], [0, 0, 1, 1], [], []>} : vector<8x32xbf16>, vector<32x96xbf16>, vector<8x96xf32> -> vector<8x96xf32>
    %594 = vector.extract_strided_slice %590 {offsets = [0, 0], sizes = [8, 32], strides = [1, 1]} : vector<8x96xf32> to vector<8x32xf32>
    %595 = vector.extract_strided_slice %593 {offsets = [0, 0], sizes = [8, 32], strides = [1, 1]} : vector<8x96xf32> to vector<8x32xf32>
    %596 = arith.addf %594, %595 : vector<8x32xf32>
    %597 = arith.negf %596 : vector<8x32xf32>
    %598 = math.exp %597 : vector<8x32xf32>
    %cst_187 = arith.constant 1.000000e+00 : f32
    %599 = vector.broadcast %cst_187 : f32 to vector<8x32xf32>
    %600 = arith.addf %599, %598 : vector<8x32xf32>
    %601 = arith.divf %599, %600 : vector<8x32xf32>
    %602 = vector.extract_strided_slice %590 {offsets = [0, 32], sizes = [8, 32], strides = [1, 1]} : vector<8x96xf32> to vector<8x32xf32>
    %603 = vector.extract_strided_slice %593 {offsets = [0, 32], sizes = [8, 32], strides = [1, 1]} : vector<8x96xf32> to vector<8x32xf32>
    %604 = arith.addf %602, %603 : vector<8x32xf32>
    %605 = arith.negf %604 : vector<8x32xf32>
    %606 = math.exp %605 : vector<8x32xf32>
    %cst_188 = arith.constant 1.000000e+00 : f32
    %607 = vector.broadcast %cst_188 : f32 to vector<8x32xf32>
    %608 = arith.addf %607, %606 : vector<8x32xf32>
    %609 = arith.divf %607, %608 : vector<8x32xf32>
    %610 = vector.extract_strided_slice %590 {offsets = [0, 64], sizes = [8, 32], strides = [1, 1]} : vector<8x96xf32> to vector<8x32xf32>
    %611 = vector.extract_strided_slice %593 {offsets = [0, 64], sizes = [8, 32], strides = [1, 1]} : vector<8x96xf32> to vector<8x32xf32>
    %612 = arith.mulf %601, %611 : vector<8x32xf32>
    %613 = arith.addf %610, %612 : vector<8x32xf32>
    %614 = math.tanh %613 : vector<8x32xf32>
    %cst_189 = arith.constant 1.000000e+00 : f32
    %615 = vector.broadcast %cst_189 : f32 to vector<8x32xf32>
    %616 = arith.subf %615, %609 : vector<8x32xf32>
    %617 = arith.mulf %616, %614 : vector<8x32xf32>
    %618 = arith.mulf %609, %591 : vector<8x32xf32>
    %619 = arith.addf %617, %618 : vector<8x32xf32>
    %620 = arith.index_cast %588 : i32 to index
    %c0_190 = arith.constant 0 : index
    %621 = vector.load %arg2[%620, %c0_190] : memref<64x1xf32, #tpu.memory_space<vmem>>, vector<8x1xf32>
    %622 = vector.broadcast %621 : vector<8x1xf32> to vector<8x32xf32>
    %623 = arith.mulf %622, %619 : vector<8x32xf32>
    %cst_191 = arith.constant 1.000000e+00 : f32
    %624 = vector.broadcast %cst_191 : f32 to vector<8x1xf32>
    %625 = arith.subf %624, %621 : vector<8x1xf32>
    %626 = vector.broadcast %625 : vector<8x1xf32> to vector<8x32xf32>
    %627 = arith.mulf %626, %591 : vector<8x32xf32>
    %628 = arith.addf %623, %627 : vector<8x32xf32>
    %c0_192 = arith.constant 0 : index
    %c0_193 = arith.constant 0 : index
    %629 = vector.load %arg8[%c0_192, %c0_193] : memref<8x32xf32, #tpu.memory_space<vmem>>, vector<8x32xf32>
    tpu.vector_store %arg8[%c0_192, %c0_193], %628 {strides = array<i32>} : memref<8x32xf32, #tpu.memory_space<vmem>>, vector<8x32xf32>,
    %630 = vector.broadcast %621 : vector<8x1xf32> to vector<8x32xf32>
    %631 = arith.mulf %630, %619 : vector<8x32xf32>
    %632 = arith.index_cast %588 : i32 to index
    %c0_194 = arith.constant 0 : index
    %633 = vector.load %arg5[%632, %c0_194] : memref<64x64xf32, #tpu.memory_space<vmem>>, vector<8x32xf32>
    tpu.vector_store %arg5[%632, %c0_194], %631 {strides = array<i32>} : memref<64x64xf32, #tpu.memory_space<vmem>>, vector<8x32xf32>,
    %c7_i32_195 = arith.constant 7 : i32
    %634 = arith.subi %c7_i32_195, %c6_i32 : i32
    %c8_i32_196 = arith.constant 8 : i32
    %635 = arith.muli %634, %c8_i32_196 : i32
    %636 = tpu.assume_multiple %635, 8 : i32
    %637 = arith.index_cast %636 : i32 to index
    %c0_197 = arith.constant 0 : index
    %638 = vector.load %arg7[%637, %c0_197] : memref<64x96xf32, #tpu.memory_space<vmem>>, vector<8x96xf32>
    %c0_198 = arith.constant 0 : index
    %c0_199 = arith.constant 0 : index
    %639 = vector.load %arg9[%c0_198, %c0_199] : memref<8x32xf32, #tpu.memory_space<vmem>>, vector<8x32xf32>
    %640 = arith.truncf %639 : vector<8x32xf32> to vector<8x32xbf16>
    %cst_200 = arith.constant dense<0.000000e+00> : vector<8x96xf32>
    %641 = tpu.matmul %640, %12, %cst_200 {dimension_numbers = #tpu.dot_dimension_numbers<[1], [0], [0], [1], [0, 0, 1, 1], [], []>} : vector<8x32xbf16>, vector<32x96xbf16>, vector<8x96xf32> -> vector<8x96xf32>
    %642 = vector.extract_strided_slice %638 {offsets = [0, 0], sizes = [8, 32], strides = [1, 1]} : vector<8x96xf32> to vector<8x32xf32>
    %643 = vector.extract_strided_slice %641 {offsets = [0, 0], sizes = [8, 32], strides = [1, 1]} : vector<8x96xf32> to vector<8x32xf32>
    %644 = arith.addf %642, %643 : vector<8x32xf32>
    %645 = arith.negf %644 : vector<8x32xf32>
    %646 = math.exp %645 : vector<8x32xf32>
    %cst_201 = arith.constant 1.000000e+00 : f32
    %647 = vector.broadcast %cst_201 : f32 to vector<8x32xf32>
    %648 = arith.addf %647, %646 : vector<8x32xf32>
    %649 = arith.divf %647, %648 : vector<8x32xf32>
    %650 = vector.extract_strided_slice %638 {offsets = [0, 32], sizes = [8, 32], strides = [1, 1]} : vector<8x96xf32> to vector<8x32xf32>
    %651 = vector.extract_strided_slice %641 {offsets = [0, 32], sizes = [8, 32], strides = [1, 1]} : vector<8x96xf32> to vector<8x32xf32>
    %652 = arith.addf %650, %651 : vector<8x32xf32>
    %653 = arith.negf %652 : vector<8x32xf32>
    %654 = math.exp %653 : vector<8x32xf32>
    %cst_202 = arith.constant 1.000000e+00 : f32
    %655 = vector.broadcast %cst_202 : f32 to vector<8x32xf32>
    %656 = arith.addf %655, %654 : vector<8x32xf32>
    %657 = arith.divf %655, %656 : vector<8x32xf32>
    %658 = vector.extract_strided_slice %638 {offsets = [0, 64], sizes = [8, 32], strides = [1, 1]} : vector<8x96xf32> to vector<8x32xf32>
    %659 = vector.extract_strided_slice %641 {offsets = [0, 64], sizes = [8, 32], strides = [1, 1]} : vector<8x96xf32> to vector<8x32xf32>
    %660 = arith.mulf %649, %659 : vector<8x32xf32>
    %661 = arith.addf %658, %660 : vector<8x32xf32>
    %662 = math.tanh %661 : vector<8x32xf32>
    %cst_203 = arith.constant 1.000000e+00 : f32
    %663 = vector.broadcast %cst_203 : f32 to vector<8x32xf32>
    %664 = arith.subf %663, %657 : vector<8x32xf32>
    %665 = arith.mulf %664, %662 : vector<8x32xf32>
    %666 = arith.mulf %657, %639 : vector<8x32xf32>
    %667 = arith.addf %665, %666 : vector<8x32xf32>
    %668 = arith.index_cast %636 : i32 to index
    %c0_204 = arith.constant 0 : index
    %669 = vector.load %arg2[%668, %c0_204] : memref<64x1xf32, #tpu.memory_space<vmem>>, vector<8x1xf32>
    %670 = vector.broadcast %669 : vector<8x1xf32> to vector<8x32xf32>
    %671 = arith.mulf %670, %667 : vector<8x32xf32>
    %cst_205 = arith.constant 1.000000e+00 : f32
    %672 = vector.broadcast %cst_205 : f32 to vector<8x1xf32>
    %673 = arith.subf %672, %669 : vector<8x1xf32>
    %674 = vector.broadcast %673 : vector<8x1xf32> to vector<8x32xf32>
    %675 = arith.mulf %674, %639 : vector<8x32xf32>
    %676 = arith.addf %671, %675 : vector<8x32xf32>
    %c0_206 = arith.constant 0 : index
    %c0_207 = arith.constant 0 : index
    %677 = vector.load %arg9[%c0_206, %c0_207] : memref<8x32xf32, #tpu.memory_space<vmem>>, vector<8x32xf32>
    tpu.vector_store %arg9[%c0_206, %c0_207], %676 {strides = array<i32>} : memref<8x32xf32, #tpu.memory_space<vmem>>, vector<8x32xf32>,
    %678 = vector.broadcast %669 : vector<8x1xf32> to vector<8x32xf32>
    %679 = arith.mulf %678, %667 : vector<8x32xf32>
    %680 = arith.index_cast %636 : i32 to index
    %c32_208 = arith.constant 32 : index
    %681 = vector.load %arg5[%680, %c32_208] : memref<64x64xf32, #tpu.memory_space<vmem>>, vector<8x32xf32>
    tpu.vector_store %arg5[%680, %c32_208], %679 {strides = array<i32>} : memref<64x64xf32, #tpu.memory_space<vmem>>, vector<8x32xf32>,
    %c7_i32_209 = arith.constant 7 : i32
    %c8_i32_210 = arith.constant 8 : i32
    %682 = arith.muli %c7_i32_209, %c8_i32_210 : i32
    %683 = tpu.assume_multiple %682, 8 : i32
    %684 = arith.index_cast %683 : i32 to index
    %c0_211 = arith.constant 0 : index
    %685 = vector.load %arg6[%684, %c0_211] : memref<64x96xf32, #tpu.memory_space<vmem>>, vector<8x96xf32>
    %c0_212 = arith.constant 0 : index
    %c0_213 = arith.constant 0 : index
    %686 = vector.load %arg8[%c0_212, %c0_213] : memref<8x32xf32, #tpu.memory_space<vmem>>, vector<8x32xf32>
    %687 = arith.truncf %686 : vector<8x32xf32> to vector<8x32xbf16>
    %cst_214 = arith.constant dense<0.000000e+00> : vector<8x96xf32>
    %688 = tpu.matmul %687, %10, %cst_214 {dimension_numbers = #tpu.dot_dimension_numbers<[1], [0], [0], [1], [0, 0, 1, 1], [], []>} : vector<8x32xbf16>, vector<32x96xbf16>, vector<8x96xf32> -> vector<8x96xf32>
    %689 = vector.extract_strided_slice %685 {offsets = [0, 0], sizes = [8, 32], strides = [1, 1]} : vector<8x96xf32> to vector<8x32xf32>
    %690 = vector.extract_strided_slice %688 {offsets = [0, 0], sizes = [8, 32], strides = [1, 1]} : vector<8x96xf32> to vector<8x32xf32>
    %691 = arith.addf %689, %690 : vector<8x32xf32>
    %692 = arith.negf %691 : vector<8x32xf32>
    %693 = math.exp %692 : vector<8x32xf32>
    %cst_215 = arith.constant 1.000000e+00 : f32
    %694 = vector.broadcast %cst_215 : f32 to vector<8x32xf32>
    %695 = arith.addf %694, %693 : vector<8x32xf32>
    %696 = arith.divf %694, %695 : vector<8x32xf32>
    %697 = vector.extract_strided_slice %685 {offsets = [0, 32], sizes = [8, 32], strides = [1, 1]} : vector<8x96xf32> to vector<8x32xf32>
    %698 = vector.extract_strided_slice %688 {offsets = [0, 32], sizes = [8, 32], strides = [1, 1]} : vector<8x96xf32> to vector<8x32xf32>
    %699 = arith.addf %697, %698 : vector<8x32xf32>
    %700 = arith.negf %699 : vector<8x32xf32>
    %701 = math.exp %700 : vector<8x32xf32>
    %cst_216 = arith.constant 1.000000e+00 : f32
    %702 = vector.broadcast %cst_216 : f32 to vector<8x32xf32>
    %703 = arith.addf %702, %701 : vector<8x32xf32>
    %704 = arith.divf %702, %703 : vector<8x32xf32>
    %705 = vector.extract_strided_slice %685 {offsets = [0, 64], sizes = [8, 32], strides = [1, 1]} : vector<8x96xf32> to vector<8x32xf32>
    %706 = vector.extract_strided_slice %688 {offsets = [0, 64], sizes = [8, 32], strides = [1, 1]} : vector<8x96xf32> to vector<8x32xf32>
    %707 = arith.mulf %696, %706 : vector<8x32xf32>
    %708 = arith.addf %705, %707 : vector<8x32xf32>
    %709 = math.tanh %708 : vector<8x32xf32>
    %cst_217 = arith.constant 1.000000e+00 : f32
    %710 = vector.broadcast %cst_217 : f32 to vector<8x32xf32>
    %711 = arith.subf %710, %704 : vector<8x32xf32>
    %712 = arith.mulf %711, %709 : vector<8x32xf32>
    %713 = arith.mulf %704, %686 : vector<8x32xf32>
    %714 = arith.addf %712, %713 : vector<8x32xf32>
    %715 = arith.index_cast %683 : i32 to index
    %c0_218 = arith.constant 0 : index
    %716 = vector.load %arg2[%715, %c0_218] : memref<64x1xf32, #tpu.memory_space<vmem>>, vector<8x1xf32>
    %717 = vector.broadcast %716 : vector<8x1xf32> to vector<8x32xf32>
    %718 = arith.mulf %717, %714 : vector<8x32xf32>
    %cst_219 = arith.constant 1.000000e+00 : f32
    %719 = vector.broadcast %cst_219 : f32 to vector<8x1xf32>
    %720 = arith.subf %719, %716 : vector<8x1xf32>
    %721 = vector.broadcast %720 : vector<8x1xf32> to vector<8x32xf32>
    %722 = arith.mulf %721, %686 : vector<8x32xf32>
    %723 = arith.addf %718, %722 : vector<8x32xf32>
    %c0_220 = arith.constant 0 : index
    %c0_221 = arith.constant 0 : index
    %724 = vector.load %arg8[%c0_220, %c0_221] : memref<8x32xf32, #tpu.memory_space<vmem>>, vector<8x32xf32>
    tpu.vector_store %arg8[%c0_220, %c0_221], %723 {strides = array<i32>} : memref<8x32xf32, #tpu.memory_space<vmem>>, vector<8x32xf32>,
    %725 = vector.broadcast %716 : vector<8x1xf32> to vector<8x32xf32>
    %726 = arith.mulf %725, %714 : vector<8x32xf32>
    %727 = arith.index_cast %683 : i32 to index
    %c0_222 = arith.constant 0 : index
    %728 = vector.load %arg5[%727, %c0_222] : memref<64x64xf32, #tpu.memory_space<vmem>>, vector<8x32xf32>
    tpu.vector_store %arg5[%727, %c0_222], %726 {strides = array<i32>} : memref<64x64xf32, #tpu.memory_space<vmem>>, vector<8x32xf32>,
    %c7_i32_223 = arith.constant 7 : i32
    %729 = arith.subi %c7_i32_223, %c7_i32_209 : i32
    %c8_i32_224 = arith.constant 8 : i32
    %730 = arith.muli %729, %c8_i32_224 : i32
    %731 = tpu.assume_multiple %730, 8 : i32
    %732 = arith.index_cast %731 : i32 to index
    %c0_225 = arith.constant 0 : index
    %733 = vector.load %arg7[%732, %c0_225] : memref<64x96xf32, #tpu.memory_space<vmem>>, vector<8x96xf32>
    %c0_226 = arith.constant 0 : index
    %c0_227 = arith.constant 0 : index
    %734 = vector.load %arg9[%c0_226, %c0_227] : memref<8x32xf32, #tpu.memory_space<vmem>>, vector<8x32xf32>
    %735 = arith.truncf %734 : vector<8x32xf32> to vector<8x32xbf16>
    %cst_228 = arith.constant dense<0.000000e+00> : vector<8x96xf32>
    %736 = tpu.matmul %735, %12, %cst_228 {dimension_numbers = #tpu.dot_dimension_numbers<[1], [0], [0], [1], [0, 0, 1, 1], [], []>} : vector<8x32xbf16>, vector<32x96xbf16>, vector<8x96xf32> -> vector<8x96xf32>
    %737 = vector.extract_strided_slice %733 {offsets = [0, 0], sizes = [8, 32], strides = [1, 1]} : vector<8x96xf32> to vector<8x32xf32>
    %738 = vector.extract_strided_slice %736 {offsets = [0, 0], sizes = [8, 32], strides = [1, 1]} : vector<8x96xf32> to vector<8x32xf32>
    %739 = arith.addf %737, %738 : vector<8x32xf32>
    %740 = arith.negf %739 : vector<8x32xf32>
    %741 = math.exp %740 : vector<8x32xf32>
    %cst_229 = arith.constant 1.000000e+00 : f32
    %742 = vector.broadcast %cst_229 : f32 to vector<8x32xf32>
    %743 = arith.addf %742, %741 : vector<8x32xf32>
    %744 = arith.divf %742, %743 : vector<8x32xf32>
    %745 = vector.extract_strided_slice %733 {offsets = [0, 32], sizes = [8, 32], strides = [1, 1]} : vector<8x96xf32> to vector<8x32xf32>
    %746 = vector.extract_strided_slice %736 {offsets = [0, 32], sizes = [8, 32], strides = [1, 1]} : vector<8x96xf32> to vector<8x32xf32>
    %747 = arith.addf %745, %746 : vector<8x32xf32>
    %748 = arith.negf %747 : vector<8x32xf32>
    %749 = math.exp %748 : vector<8x32xf32>
    %cst_230 = arith.constant 1.000000e+00 : f32
    %750 = vector.broadcast %cst_230 : f32 to vector<8x32xf32>
    %751 = arith.addf %750, %749 : vector<8x32xf32>
    %752 = arith.divf %750, %751 : vector<8x32xf32>
    %753 = vector.extract_strided_slice %733 {offsets = [0, 64], sizes = [8, 32], strides = [1, 1]} : vector<8x96xf32> to vector<8x32xf32>
    %754 = vector.extract_strided_slice %736 {offsets = [0, 64], sizes = [8, 32], strides = [1, 1]} : vector<8x96xf32> to vector<8x32xf32>
    %755 = arith.mulf %744, %754 : vector<8x32xf32>
    %756 = arith.addf %753, %755 : vector<8x32xf32>
    %757 = math.tanh %756 : vector<8x32xf32>
    %cst_231 = arith.constant 1.000000e+00 : f32
    %758 = vector.broadcast %cst_231 : f32 to vector<8x32xf32>
    %759 = arith.subf %758, %752 : vector<8x32xf32>
    %760 = arith.mulf %759, %757 : vector<8x32xf32>
    %761 = arith.mulf %752, %734 : vector<8x32xf32>
    %762 = arith.addf %760, %761 : vector<8x32xf32>
    %763 = arith.index_cast %731 : i32 to index
    %c0_232 = arith.constant 0 : index
    %764 = vector.load %arg2[%763, %c0_232] : memref<64x1xf32, #tpu.memory_space<vmem>>, vector<8x1xf32>
    %765 = vector.broadcast %764 : vector<8x1xf32> to vector<8x32xf32>
    %766 = arith.mulf %765, %762 : vector<8x32xf32>
    %cst_233 = arith.constant 1.000000e+00 : f32
    %767 = vector.broadcast %cst_233 : f32 to vector<8x1xf32>
    %768 = arith.subf %767, %764 : vector<8x1xf32>
    %769 = vector.broadcast %768 : vector<8x1xf32> to vector<8x32xf32>
    %770 = arith.mulf %769, %734 : vector<8x32xf32>
    %771 = arith.addf %766, %770 : vector<8x32xf32>
    %c0_234 = arith.constant 0 : index
    %c0_235 = arith.constant 0 : index
    %772 = vector.load %arg9[%c0_234, %c0_235] : memref<8x32xf32, #tpu.memory_space<vmem>>, vector<8x32xf32>
    tpu.vector_store %arg9[%c0_234, %c0_235], %771 {strides = array<i32>} : memref<8x32xf32, #tpu.memory_space<vmem>>, vector<8x32xf32>,
    %773 = vector.broadcast %764 : vector<8x1xf32> to vector<8x32xf32>
    %774 = arith.mulf %773, %762 : vector<8x32xf32>
    %775 = arith.index_cast %731 : i32 to index
    %c32_236 = arith.constant 32 : index
    %776 = vector.load %arg5[%775, %c32_236] : memref<64x64xf32, #tpu.memory_space<vmem>>, vector<8x32xf32>
    tpu.vector_store %arg5[%775, %c32_236], %774 {strides = array<i32>} : memref<64x64xf32, #tpu.memory_space<vmem>>, vector<8x32xf32>,
    %c8_i32_237 = arith.constant 8 : i32
    return
  }
  func.func @transform_0(%arg0: i32) -> (i32, i32) {
    %c0_i32 = arith.constant 0 : i32
    %c0_i32_0 = arith.constant 0 : i32
    %c0_i32_1 = arith.constant 0 : i32
    return %c0_i32, %c0_i32_0 : i32, i32
  }
  func.func @transform_1(%arg0: i32) -> (i32, i32) {
    %c0_i32 = arith.constant 0 : i32
    %c0_i32_0 = arith.constant 0 : i32
    %c0_i32_1 = arith.constant 0 : i32
    return %c0_i32, %c0_i32_0 : i32, i32
  }
  func.func @transform_2(%arg0: i32) -> (i32, i32, i32) {
    %c0_i32 = arith.constant 0 : i32
    %c0_i32_0 = arith.constant 0 : i32
    %c0_i32_1 = arith.constant 0 : i32
    %c0_i32_2 = arith.constant 0 : i32
    return %c0_i32, %c0_i32_0, %c0_i32_1 : i32, i32, i32
  }
  func.func @transform_3(%arg0: i32) -> (i32, i32, i32) {
    %c0_i32 = arith.constant 0 : i32
    %c0_i32_0 = arith.constant 0 : i32
    %c0_i32_1 = arith.constant 0 : i32
    %c0_i32_2 = arith.constant 0 : i32
    return %c0_i32, %c0_i32_0, %c0_i32_1 : i32, i32, i32
  }
  func.func @transform_4(%arg0: i32) -> (i32, i32) {
    %c0_i32 = arith.constant 0 : i32
    %c0_i32_0 = arith.constant 0 : i32
    %c0_i32_1 = arith.constant 0 : i32
    return %c0_i32, %c0_i32_0 : i32, i32
  }
}

</mosaic_0001>

<llo_original>
// kernel: tpu_custom_call.1
$region0: #{tpu_custom_call.1}
  #allocation0 [shape = 'u32[]', space=smem, size = 0x4, offset = 0x4, fixed_abs, tag = 'smem constant byte address 0x4 - core index']
  #allocation1 [shape = 'u32[144,128]{1,0:T(1,128)}', space=vmem, size = 0x12000, scoped, tag = 'internal scratch']
  #allocation2 [shape = 'f32[64,96]{1,0:T(8,128)}', space=vmem, size = 0x8000, scoped, tag = 'scratch operand']
  #allocation3 [shape = 'f32[64,96]{1,0:T(8,128)}', space=vmem, size = 0x8000, scoped, tag = 'scratch operand']
  #allocation4 [shape = 'f32[8,32]{1,0:T(8,128)}', space=vmem, size = 0x1000, scoped, tag = 'scratch operand']
  #allocation5 [shape = 'f32[8,32]{1,0:T(8,128)}', space=vmem, size = 0x1000, scoped, tag = 'scratch operand']
  %s0 = inlined_call_operand.vmem [shape: bf16[64,32], index: 0, kind: input, shape index: {}]
  %s1 = inlined_call_operand.vmem [shape: f32[64,1], index: 1, kind: input, shape index: {}]
  %s2 = inlined_call_operand.vmem [shape: bf16[2,32,96], index: 2, kind: input, shape index: {}]
  %s3 = inlined_call_operand.vmem [shape: bf16[2,32,96], index: 3, kind: input, shape index: {}]
  %s4 = inlined_call_operand.hbm [shape: f32[64,64], index: 4, kind: output, shape index: {}]
  %s5 = sld [smem:[#allocation0]]
  $region26: #{tpu_custom_call.1} parent=0
    _
  %s7 = ssub.s32 1, %s5
  %s8 = scalar_select 0, %s7, %s5
  $region1: #{tpu_custom_call.1} parent=0
    #allocation6 [shape = 'u8[32768]{0}', space=vmem, size = 0x8000, scoped, tag = 'output window, operand 0, single buffered']
    #allocation7 [shape = 's32[1]{0}', space=sflag, size = 0x4, scoped, tag = 'scoped memory for tpu_custom_call.1']
    %9 = vsyncpa [#allocation7], 0
    // Predicated region
    $region2: #{tpu_custom_call.1} parent=1 // pred_check
      _
    $region3: #{tpu_custom_call.1} parent=1 // pred_check_branch
      %11 = sbr.rel (0) target = $region5
    $region4: #{tpu_custom_call.1} parent=1 // pred_region
      _
    $region5: #{tpu_custom_call.1} parent=1 // pred_fallthru
      _
    // Predicated region
    $region6: #{tpu_custom_call.1} parent=1 // pred_check
      _
    $region7: #{tpu_custom_call.1} parent=1 // pred_check_branch
      %13 = sbr.rel (0) target = $region9
    $region8: #{tpu_custom_call.1} parent=1 // pred_region
      _
    $region9: #{tpu_custom_call.1} parent=1 // pred_fallthru
      _
    // Predicated region
    $region10: #{tpu_custom_call.1} parent=1 // pred_check
      _
    $region11: #{tpu_custom_call.1} parent=1 // pred_check_branch
      %15 = sbr.rel (0) target = $region13
    $region12: #{tpu_custom_call.1} parent=1 // pred_region
      _
    $region13: #{tpu_custom_call.1} parent=1 // pred_fallthru
      _
    // Predicated region
    $region14: #{tpu_custom_call.1} parent=1 // pred_check
      _
    $region15: #{tpu_custom_call.1} parent=1 // pred_check_branch
      %17 = sbr.rel (0) target = $region17
    $region16: #{tpu_custom_call.1} parent=1 // pred_region
      _
    $region17: #{tpu_custom_call.1} parent=1 // pred_fallthru
      _
    %v19 = vld [vmem:[%s0] sm:$0xf]
    %v20 = vld [vmem:[%s0 + $0x4] sm:$0xf]
    %v21 = vld [vmem:[%s0 + $0x8] sm:$0xf]
    %v22 = vld [vmem:[%s0 + $0xc] sm:$0xf]
    %v23 = vld [vmem:[%s0 + $0x10] sm:$0xf]
    %v24 = vld [vmem:[%s0 + $0x14] sm:$0xf]
    %v25 = vld [vmem:[%s0 + $0x18] sm:$0xf]
    %v26 = vld [vmem:[%s0 + $0x1c] sm:$0xf]
    %v27 = vld [vmem:[%s2] sm:$0xf]
    %v28 = vld [vmem:[%s2 + $0x4] sm:$0xf]
    %v29 = vld [vmem:[%s2 + $0x8] sm:$0xf]
    %v30 = vld [vmem:[%s2 + $0xc] sm:$0xf]
    %v39 = vunpack.c.l.b16 %v19
    %v40 = vunpack.c.l.b16 %v20
    %v41 = vunpack.c.l.b16 %v21
    %v42 = vunpack.c.l.b16 %v22
    %v43 = vunpack.c.l.b16 %v23
    %v44 = vunpack.c.l.b16 %v24
    %v45 = vunpack.c.l.b16 %v25
    %v46 = vunpack.c.l.b16 %v26
    %v47 = vpack.c.b16 %v40, %v39
    %v48 = vpack.c.b16 %v42, %v41
    %v49 = vpack.c.b16 %v44, %v43
    %v50 = vpack.c.b16 %v46, %v45
    %v55 = vunpack.c.l.b16 %v27
    %v56 = vunpack.c.l.b16 %v28
    %v57 = vunpack.c.l.b16 %v29
    %v58 = vunpack.c.l.b16 %v30
    %v59 = vpack.c.b16 %v56, %v55
    %v60 = vpack.c.b16 %v58, %v57
    %vm63 = vcmask 261120
    %v65 = vsel %vm63, %v47, 0
    %v68 = vsel %vm63, %v48, 0
    %v71 = vsel %vm63, %v49, 0
    %v74 = vsel %vm63, %v50, 0
    %76 = vmatprep.subr.bf16.mxu0 0
    %77 = vmatpush1.bf16.msra.mxu0 0
    %78 = vmatprep.subr.bf16.mxu0 0
    %79 = vmatpush1.bf16.msra.mxu0 0
    %80 = vmatprep.subr.bf16.mxu0 0
    %81 = vmatpush1.bf16.msra.mxu0 0
    %82 = vmatprep.subr.bf16.mxu0 0
    %83 = vmatpush1.bf16.msra.mxu0 0
    %84 = vmatprep.subr.bf16.mxu0 0
    %85 = vmatpush1.bf16.msra.mxu0 0
    %86 = vmatprep.subr.bf16.mxu0 0
    %87 = vmatpush1.bf16.msra.mxu0 0
    %88 = vmatprep.subr.bf16.mxu0 0
    %89 = vmatpush1.bf16.msra.mxu0 %v60
    %90 = vmatprep.subr.bf16.mxu0 0
    %91 = vmatpush1.bf16.msra.mxu0 %v59
    %92 = vmatprep.subr.bf16.mxu0 0
    %93 = vmatpush2.bf16.msra.mxu0 0
    %94 = vmatprep.subr.bf16.mxu0 0
    %95 = vmatpush2.bf16.msra.mxu0 0
    %96 = vmatprep.subr.bf16.mxu0 0
    %97 = vmatpush2.bf16.msra.mxu0 0
    %98 = vmatprep.subr.bf16.mxu0 0
    %99 = vmatpush2.bf16.msra.mxu0 0
    %100 = vmatprep.subr.bf16.mxu0 0
    %101 = vmatpush2.bf16.msra.mxu0 0
    %102 = vmatprep.subr.bf16.mxu0 0
    %103 = vmatpush2.bf16.msra.mxu0 0
    %104 = vmatprep.subr.bf16.mxu0 0
    %105 = vmatpush2.bf16.msra.mxu0 0
    %106 = vmatprep.subr.bf16.mxu0 0
    %107 = vmatpush2.bf16.msra.mxu0 0
    %108 = vmatprep.mubr.bf16.mxu0 0
    %109 = vmatmul.mubr.bf16.gmra.mxu0 %v65
    %v110 = vpop.f32.mrf.mxu0
    %v111 = vadd.f32 0.0, %v110
    %v112 = vpop.f32.mrf.mxu0
    %v113 = vpop.f32.mrf.mxu0
    %v114 = vadd.f32 0.0, %v113
    %v115 = vpop.f32.mrf.mxu0
    %116 = vmatprep.mubr.bf16.mxu0 0
    %117 = vmatmul.mubr.bf16.gmra.mxu0 %v68
    %v118 = vpop.f32.mrf.mxu0
    %v119 = vadd.f32 0.0, %v118
    %v120 = vpop.f32.mrf.mxu0
    %v121 = vpop.f32.mrf.mxu0
    %v122 = vadd.f32 0.0, %v121
    %v123 = vpop.f32.mrf.mxu0
    %124 = vmatprep.mubr.bf16.mxu0 0
    %125 = vmatmul.mubr.bf16.gmra.mxu0 %v71
    %v126 = vpop.f32.mrf.mxu0
    %v127 = vadd.f32 0.0, %v126
    %v128 = vpop.f32.mrf.mxu0
    %v129 = vpop.f32.mrf.mxu0
    %v130 = vadd.f32 0.0, %v129
    %v131 = vpop.f32.mrf.mxu0
    %132 = vmatprep.mubr.bf16.mxu0 0
    %133 = vmatmul.mubr.bf16.gmra.mxu0 %v74
    %v134 = vpop.f32.mrf.mxu0
    %v135 = vadd.f32 0.0, %v134
    %v136 = vpop.f32.mrf.mxu0
    %v137 = vpop.f32.mrf.mxu0
    %v138 = vadd.f32 0.0, %v137
    %v139 = vpop.f32.mrf.mxu0
    %140 = vdwg.mxu0
    %vm141 = vcmask 785408
    %142 = vst.msk [vmem:[#allocation2] sm:$0xff] %vm141, %v111
    %143 = vst.msk [vmem:[#allocation2 + $0x8] sm:$0xff] %vm141, %v114
    %144 = vst.msk [vmem:[#allocation2 + $0x10] sm:$0xff] %vm141, %v119
    %145 = vst.msk [vmem:[#allocation2 + $0x18] sm:$0xff] %vm141, %v122
    %146 = vst.msk [vmem:[#allocation2 + $0x20] sm:$0xff] %vm141, %v127
    %147 = vst.msk [vmem:[#allocation2 + $0x28] sm:$0xff] %vm141, %v130
    %148 = vst.msk [vmem:[#allocation2 + $0x30] sm:$0xff] %vm141, %v135
    %149 = vst.msk [vmem:[#allocation2 + $0x38] sm:$0xff] %vm141, %v138
    %s150 = scalar_lea.vmem %s2, 16
    %v151 = vld [vmem:[%s150] sm:$0xf]
    %v152 = vld [vmem:[%s150 + $0x4] sm:$0xf]
    %v153 = vld [vmem:[%s150 + $0x8] sm:$0xf]
    %v154 = vld [vmem:[%s150 + $0xc] sm:$0xf]
    %v159 = vunpack.c.l.b16 %v151
    %v160 = vunpack.c.l.b16 %v152
    %v161 = vunpack.c.l.b16 %v153
    %v162 = vunpack.c.l.b16 %v154
    %v163 = vpack.c.b16 %v160, %v159
    %v164 = vpack.c.b16 %v162, %v161
    %167 = vmatprep.subr.bf16.mxu0 0
    %168 = vmatpush1.bf16.msra.mxu0 0
    %169 = vmatprep.subr.bf16.mxu0 0
    %170 = vmatpush1.bf16.msra.mxu0 0
    %171 = vmatprep.subr.bf16.mxu0 0
    %172 = vmatpush1.bf16.msra.mxu0 0
    %173 = vmatprep.subr.bf16.mxu0 0
    %174 = vmatpush1.bf16.msra.mxu0 0
    %175 = vmatprep.subr.bf16.mxu0 0
    %176 = vmatpush1.bf16.msra.mxu0 0
    %177 = vmatprep.subr.bf16.mxu0 0
    %178 = vmatpush1.bf16.msra.mxu0 0
    %179 = vmatprep.subr.bf16.mxu0 0
    %180 = vmatpush1.bf16.msra.mxu0 %v164
    %181 = vmatprep.subr.bf16.mxu0 0
    %182 = vmatpush1.bf16.msra.mxu0 %v163
    %183 = vmatprep.subr.bf16.mxu0 0
    %184 = vmatpush2.bf16.msra.mxu0 0
    %185 = vmatprep.subr.bf16.mxu0 0
    %186 = vmatpush2.bf16.msra.mxu0 0
    %187 = vmatprep.subr.bf16.mxu0 0
    %188 = vmatpush2.bf16.msra.mxu0 0
    %189 = vmatprep.subr.bf16.mxu0 0
    %190 = vmatpush2.bf16.msra.mxu0 0
    %191 = vmatprep.subr.bf16.mxu0 0
    %192 = vmatpush2.bf16.msra.mxu0 0
    %193 = vmatprep.subr.bf16.mxu0 0
    %194 = vmatpush2.bf16.msra.mxu0 0
    %195 = vmatprep.subr.bf16.mxu0 0
    %196 = vmatpush2.bf16.msra.mxu0 0
    %197 = vmatprep.subr.bf16.mxu0 0
    %198 = vmatpush2.bf16.msra.mxu0 0
    %199 = vmatprep.mubr.bf16.mxu0 0
    %200 = vmatmul.mubr.bf16.gmra.mxu0 %v65
    %v201 = vpop.f32.mrf.mxu0
    %v202 = vadd.f32 0.0, %v201
    %v203 = vpop.f32.mrf.mxu0
    %v204 = vpop.f32.mrf.mxu0
    %v205 = vadd.f32 0.0, %v204
    %v206 = vpop.f32.mrf.mxu0
    %207 = vmatprep.mubr.bf16.mxu0 0
    %208 = vmatmul.mubr.bf16.gmra.mxu0 %v68
    %v209 = vpop.f32.mrf.mxu0
    %v210 = vadd.f32 0.0, %v209
    %v211 = vpop.f32.mrf.mxu0
    %v212 = vpop.f32.mrf.mxu0
    %v213 = vadd.f32 0.0, %v212
    %v214 = vpop.f32.mrf.mxu0
    %215 = vmatprep.mubr.bf16.mxu0 0
    %216 = vmatmul.mubr.bf16.gmra.mxu0 %v71
    %v217 = vpop.f32.mrf.mxu0
    %v218 = vadd.f32 0.0, %v217
    %v219 = vpop.f32.mrf.mxu0
    %v220 = vpop.f32.mrf.mxu0
    %v221 = vadd.f32 0.0, %v220
    %v222 = vpop.f32.mrf.mxu0
    %223 = vmatprep.mubr.bf16.mxu0 0
    %224 = vmatmul.mubr.bf16.gmra.mxu0 %v74
    %v225 = vpop.f32.mrf.mxu0
    %v226 = vadd.f32 0.0, %v225
    %v227 = vpop.f32.mrf.mxu0
    %v228 = vpop.f32.mrf.mxu0
    %v229 = vadd.f32 0.0, %v228
    %v230 = vpop.f32.mrf.mxu0
    %231 = vdwg.mxu0
    %232 = vst.msk [vmem:[#allocation3] sm:$0xff] %vm141, %v202
    %233 = vst.msk [vmem:[#allocation3 + $0x8] sm:$0xff] %vm141, %v205
    %234 = vst.msk [vmem:[#allocation3 + $0x10] sm:$0xff] %vm141, %v210
    %235 = vst.msk [vmem:[#allocation3 + $0x18] sm:$0xff] %vm141, %v213
    %236 = vst.msk [vmem:[#allocation3 + $0x20] sm:$0xff] %vm141, %v218
    %237 = vst.msk [vmem:[#allocation3 + $0x28] sm:$0xff] %vm141, %v221
    %238 = vst.msk [vmem:[#allocation3 + $0x30] sm:$0xff] %vm141, %v226
    %239 = vst.msk [vmem:[#allocation3 + $0x38] sm:$0xff] %vm141, %v229
    %v240 = vld [vmem:[%s3] sm:$0xf]
    %v241 = vld [vmem:[%s3 + $0x4] sm:$0xf]
    %v242 = vld [vmem:[%s3 + $0x8] sm:$0xf]
    %v243 = vld [vmem:[%s3 + $0xc] sm:$0xf]
    %s244 = scalar_lea.vmem %s3, 16
    %v245 = vld [vmem:[%s244] sm:$0xf]
    %v246 = vld [vmem:[%s244 + $0x4] sm:$0xf]
    %v247 = vld [vmem:[%s244 + $0x8] sm:$0xf]
    %v248 = vld [vmem:[%s244 + $0xc] sm:$0xf]
    %249 = vst.msk [vmem:[#allocation4] sm:$0xff] %vm63, 0.0
    %250 = vst.msk [vmem:[#allocation5] sm:$0xff] %vm63, 0.0
    %v251 = vld [vmem:[#allocation2] sm:$0xff]
    %v252 = vld [vmem:[#allocation4] sm:$0xff]
    %v253 = vpack.c.bf16 %v252, %v252
    %v258 = vunpack.c.l.b16 %v240
    %v259 = vunpack.c.l.b16 %v241
    %v260 = vunpack.c.l.b16 %v242
    %v261 = vunpack.c.l.b16 %v243
    %v262 = vpack.c.b16 %v259, %v258
    %v263 = vpack.c.b16 %v261, %v260
    %v267 = vsel %vm63, %v253, 0
    %269 = vmatprep.subr.bf16.mxu0 0
    %270 = vmatpush1.bf16.msra.mxu0 0
    %271 = vmatprep.subr.bf16.mxu0 0
    %272 = vmatpush1.bf16.msra.mxu0 0
    %273 = vmatprep.subr.bf16.mxu0 0
    %274 = vmatpush1.bf16.msra.mxu0 0
    %275 = vmatprep.subr.bf16.mxu0 0
    %276 = vmatpush1.bf16.msra.mxu0 0
    %277 = vmatprep.subr.bf16.mxu0 0
    %278 = vmatpush1.bf16.msra.mxu0 0
    %279 = vmatprep.subr.bf16.mxu0 0
    %280 = vmatpush1.bf16.msra.mxu0 0
    %281 = vmatprep.subr.bf16.mxu0 0
    %282 = vmatpush1.bf16.msra.mxu0 %v263
    %283 = vmatprep.subr.bf16.mxu0 0
    %284 = vmatpush1.bf16.msra.mxu0 %v262
    %285 = vmatprep.subr.bf16.mxu0 0
    %286 = vmatpush2.bf16.msra.mxu0 0
    %287 = vmatprep.subr.bf16.mxu0 0
    %288 = vmatpush2.bf16.msra.mxu0 0
    %289 = vmatprep.subr.bf16.mxu0 0
    %290 = vmatpush2.bf16.msra.mxu0 0
    %291 = vmatprep.subr.bf16.mxu0 0
    %292 = vmatpush2.bf16.msra.mxu0 0
    %293 = vmatprep.subr.bf16.mxu0 0
    %294 = vmatpush2.bf16.msra.mxu0 0
    %295 = vmatprep.subr.bf16.mxu0 0
    %296 = vmatpush2.bf16.msra.mxu0 0
    %297 = vmatprep.subr.bf16.mxu0 0
    %298 = vmatpush2.bf16.msra.mxu0 0
    %299 = vmatprep.subr.bf16.mxu0 0
    %300 = vmatpush2.bf16.msra.mxu0 0
    %301 = vmatprep.mubr.bf16.mxu0 0
    %302 = vmatmul.mubr.bf16.gmra.mxu0 %v267
    %v303 = vpop.f32.mrf.mxu0
    %v304 = vadd.f32 0.0, %v303
    %v305 = vpop.f32.mrf.mxu0
    %v306 = vpop.f32.mrf.mxu0
    %v307 = vpop.f32.mrf.mxu0
    %308 = vdwg.mxu0
    %v309 = vadd.f32 %v251, %v304
    %v310 = vxor.u32 %v309, 2147483648
    %v311 = vmul.f32 %v310, 1.442695
    %v312 = vpow.pop %v311
    %v313 = vadd.f32 %v312, 1.0
    %v314 = vrcp.pop %v313
    %v315 = vmul.f32 1.0, %v314
    %317 = vrot.lane.b32.xlu0 %v304, 64
    %v318 = vpop.permute.xlu0 %317
    %v320 = vmul.f32 %v315, %v318
    %322 = vrot.lane.b32.xlu0 %v320, 64
    %v323 = vpop.permute.xlu0 %322
    %v325 = vadd.f32 %v251, %v323
    %v326 = vtanh.pop %v325
    %v327 = vsub.f32 1.0, %v315
    %329 = vrot.lane.b32.xlu0 %v326, 96
    %v330 = vpop.permute.xlu0 %329
    %v332 = vmul.f32 %v327, %v330
    %334 = vrot.lane.b32.xlu0 %v252, 32
    %v335 = vpop.permute.xlu0 %334
    %v337 = vmul.f32 %v315, %v335
    %v338 = vadd.f32 %v332, %v337
    %v339 = vld [vmem:[%s1] sm:$0xff]
    %341 = vset.pattern.permute.xlu0 0
    %342 = vperm.xlu0 %341, %v339
    %v343 = vpop.permute.xlu0 %342
    %v345 = vmul.f32 %v343, %v338
    %v346 = vsub.f32 1.0, %v339
    %348 = vset.pattern.permute.xlu0 0
    %349 = vperm.xlu0 %348, %v346
    %v350 = vpop.permute.xlu0 %349
    %v352 = vmul.f32 %v350, %v252
    %354 = vrot.lane.b32.xlu0 %v352, 32
    %v355 = vpop.permute.xlu0 %354
    %v357 = vadd.f32 %v345, %v355
    %359 = vrot.lane.b32.xlu0 %v357, 96
    %v360 = vpop.permute.xlu0 %359
    %362 = vst.msk [vmem:[#allocation4] sm:$0xff] %vm63, %v360
    %364 = vrot.lane.b32.xlu0 %v345, 96
    %v365 = vpop.permute.xlu0 %364
    %367 = vst.msk [vmem:[#allocation6] sm:$0xff] %vm63, %v365
    %s368 = scalar_lea.vmem [#allocation3], 56
    %v369 = vld [vmem:[%s368] sm:$0xff]
    %v370 = vld [vmem:[#allocation5] sm:$0xff]
    %v371 = vpack.c.bf16 %v370, %v370
    %v376 = vunpack.c.l.b16 %v245
    %v377 = vunpack.c.l.b16 %v246
    %v378 = vunpack.c.l.b16 %v247
    %v379 = vunpack.c.l.b16 %v248
    %v380 = vpack.c.b16 %v377, %v376
    %v381 = vpack.c.b16 %v379, %v378
    %v385 = vsel %vm63, %v371, 0
    %387 = vmatprep.subr.bf16.mxu0 0
    %388 = vmatpush1.bf16.msra.mxu0 0
    %389 = vmatprep.subr.bf16.mxu0 0
    %390 = vmatpush1.bf16.msra.mxu0 0
    %391 = vmatprep.subr.bf16.mxu0 0
    %392 = vmatpush1.bf16.msra.mxu0 0
    %393 = vmatprep.subr.bf16.mxu0 0
    %394 = vmatpush1.bf16.msra.mxu0 0
    %395 = vmatprep.subr.bf16.mxu0 0
    %396 = vmatpush1.bf16.msra.mxu0 0
    %397 = vmatprep.subr.bf16.mxu0 0
    %398 = vmatpush1.bf16.msra.mxu0 0
    %399 = vmatprep.subr.bf16.mxu0 0
    %400 = vmatpush1.bf16.msra.mxu0 %v381
    %401 = vmatprep.subr.bf16.mxu0 0
    %402 = vmatpush1.bf16.msra.mxu0 %v380
    %403 = vmatprep.subr.bf16.mxu0 0
    %404 = vmatpush2.bf16.msra.mxu0 0
    %405 = vmatprep.subr.bf16.mxu0 0
    %406 = vmatpush2.bf16.msra.mxu0 0
    %407 = vmatprep.subr.bf16.mxu0 0
    %408 = vmatpush2.bf16.msra.mxu0 0
    %409 = vmatprep.subr.bf16.mxu0 0
    %410 = vmatpush2.bf16.msra.mxu0 0
    %411 = vmatprep.subr.bf16.mxu0 0
    %412 = vmatpush2.bf16.msra.mxu0 0
    %413 = vmatprep.subr.bf16.mxu0 0
    %414 = vmatpush2.bf16.msra.mxu0 0
    %415 = vmatprep.subr.bf16.mxu0 0
    %416 = vmatpush2.bf16.msra.mxu0 0
    %417 = vmatprep.subr.bf16.mxu0 0
    %418 = vmatpush2.bf16.msra.mxu0 0
    %419 = vmatprep.mubr.bf16.mxu0 0
    %420 = vmatmul.mubr.bf16.gmra.mxu0 %v385
    %v421 = vpop.f32.mrf.mxu0
    %v422 = vadd.f32 0.0, %v421
    %v423 = vpop.f32.mrf.mxu0
    %v424 = vpop.f32.mrf.mxu0
    %v425 = vpop.f32.mrf.mxu0
    %426 = vdwg.mxu0
    %v427 = vadd.f32 %v369, %v422
    %v428 = vxor.u32 %v427, 2147483648
    %v429 = vmul.f32 %v428, 1.442695
    %v430 = vpow.pop %v429
    %v431 = vadd.f32 %v430, 1.0
    %v432 = vrcp.pop %v431
    %v433 = vmul.f32 1.0, %v432
    %435 = vrot.lane.b32.xlu0 %v422, 64
    %v436 = vpop.permute.xlu0 %435
    %v438 = vmul.f32 %v433, %v436
    %440 = vrot.lane.b32.xlu0 %v438, 64
    %v441 = vpop.permute.xlu0 %440
    %v443 = vadd.f32 %v369, %v441
    %v444 = vtanh.pop %v443
    %v445 = vsub.f32 1.0, %v433
    %447 = vrot.lane.b32.xlu0 %v444, 96
    %v448 = vpop.permute.xlu0 %447
    %v450 = vmul.f32 %v445, %v448
    %452 = vrot.lane.b32.xlu0 %v370, 32
    %v453 = vpop.permute.xlu0 %452
    %v455 = vmul.f32 %v433, %v453
    %v456 = vadd.f32 %v450, %v455
    %s457 = scalar_lea.vmem %s1, 56
    %v458 = vld [vmem:[%s457] sm:$0xff]
    %460 = vset.pattern.permute.xlu0 0
    %461 = vperm.xlu0 %460, %v458
    %v462 = vpop.permute.xlu0 %461
    %v464 = vmul.f32 %v462, %v456
    %v465 = vsub.f32 1.0, %v458
    %467 = vset.pattern.permute.xlu0 0
    %468 = vperm.xlu0 %467, %v465
    %v469 = vpop.permute.xlu0 %468
    %v471 = vmul.f32 %v469, %v370
    %473 = vrot.lane.b32.xlu0 %v471, 32
    %v474 = vpop.permute.xlu0 %473
    %v476 = vadd.f32 %v464, %v474
    %478 = vrot.lane.b32.xlu0 %v476, 96
    %v479 = vpop.permute.xlu0 %478
    %481 = vst.msk [vmem:[#allocation5] sm:$0xff] %vm63, %v479
    %s482 = scalar_lea.vmem [#allocation6], 56
    %vm483 = vcmask 523520
    %484 = vst.msk [vmem:[%s482] sm:$0xff] %vm483, %v464
    %s485 = scalar_lea.vmem [#allocation2], 8
    %v486 = vld [vmem:[%s485] sm:$0xff]
    %v487 = vld [vmem:[#allocation4] sm:$0xff]
    %v488 = vpack.c.bf16 %v487, %v487
    %v490 = vsel %vm63, %v488, 0
    %492 = vmatprep.subr.bf16.mxu0 0
    %493 = vmatpush1.bf16.msra.mxu0 0
    %494 = vmatprep.subr.bf16.mxu0 0
    %495 = vmatpush1.bf16.msra.mxu0 0
    %496 = vmatprep.subr.bf16.mxu0 0
    %497 = vmatpush1.bf16.msra.mxu0 0
    %498 = vmatprep.subr.bf16.mxu0 0
    %499 = vmatpush1.bf16.msra.mxu0 0
    %500 = vmatprep.subr.bf16.mxu0 0
    %501 = vmatpush1.bf16.msra.mxu0 0
    %502 = vmatprep.subr.bf16.mxu0 0
    %503 = vmatpush1.bf16.msra.mxu0 0
    %504 = vmatprep.subr.bf16.mxu0 0
    %505 = vmatpush1.bf16.msra.mxu0 %v263
    %506 = vmatprep.subr.bf16.mxu0 0
    %507 = vmatpush1.bf16.msra.mxu0 %v262
    %508 = vmatprep.subr.bf16.mxu0 0
    %509 = vmatpush2.bf16.msra.mxu0 0
    %510 = vmatprep.subr.bf16.mxu0 0
    %511 = vmatpush2.bf16.msra.mxu0 0
    %512 = vmatprep.subr.bf16.mxu0 0
    %513 = vmatpush2.bf16.msra.mxu0 0
    %514 = vmatprep.subr.bf16.mxu0 0
    %515 = vmatpush2.bf16.msra.mxu0 0
    %516 = vmatprep.subr.bf16.mxu0 0
    %517 = vmatpush2.bf16.msra.mxu0 0
    %518 = vmatprep.subr.bf16.mxu0 0
    %519 = vmatpush2.bf16.msra.mxu0 0
    %520 = vmatprep.subr.bf16.mxu0 0
    %521 = vmatpush2.bf16.msra.mxu0 0
    %522 = vmatprep.subr.bf16.mxu0 0
    %523 = vmatpush2.bf16.msra.mxu0 0
    %524 = vmatprep.mubr.bf16.mxu0 0
    %525 = vmatmul.mubr.bf16.gmra.mxu0 %v490
    %v526 = vpop.f32.mrf.mxu0
    %v527 = vadd.f32 0.0, %v526
    %v528 = vpop.f32.mrf.mxu0
    %v529 = vpop.f32.mrf.mxu0
    %v530 = vpop.f32.mrf.mxu0
    %531 = vdwg.mxu0
    %v532 = vadd.f32 %v486, %v527
    %v533 = vxor.u32 %v532, 2147483648
    %v534 = vmul.f32 %v533, 1.442695
    %v535 = vpow.pop %v534
    %v536 = vadd.f32 %v535, 1.0
    %v537 = vrcp.pop %v536
    %v538 = vmul.f32 1.0, %v537
    %540 = vrot.lane.b32.xlu0 %v527, 64
    %v541 = vpop.permute.xlu0 %540
    %v543 = vmul.f32 %v538, %v541
    %545 = vrot.lane.b32.xlu0 %v543, 64
    %v546 = vpop.permute.xlu0 %545
    %v548 = vadd.f32 %v486, %v546
    %v549 = vtanh.pop %v548
    %v550 = vsub.f32 1.0, %v538
    %552 = vrot.lane.b32.xlu0 %v549, 96
    %v553 = vpop.permute.xlu0 %552
    %v555 = vmul.f32 %v550, %v553
    %557 = vrot.lane.b32.xlu0 %v487, 32
    %v558 = vpop.permute.xlu0 %557
    %v560 = vmul.f32 %v538, %v558
    %v561 = vadd.f32 %v555, %v560
    %s562 = scalar_lea.vmem %s1, 8
    %v563 = vld [vmem:[%s562] sm:$0xff]
    %565 = vset.pattern.permute.xlu0 0
    %566 = vperm.xlu0 %565, %v563
    %v567 = vpop.permute.xlu0 %566
    %v569 = vmul.f32 %v567, %v561
    %v570 = vsub.f32 1.0, %v563
    %572 = vset.pattern.permute.xlu0 0
    %573 = vperm.xlu0 %572, %v570
    %v574 = vpop.permute.xlu0 %573
    %v576 = vmul.f32 %v574, %v487
    %578 = vrot.lane.b32.xlu0 %v576, 32
    %v579 = vpop.permute.xlu0 %578
    %v581 = vadd.f32 %v569, %v579
    %583 = vrot.lane.b32.xlu0 %v581, 96
    %v584 = vpop.permute.xlu0 %583
    %586 = vst.msk [vmem:[#allocation4] sm:$0xff] %vm63, %v584
    %588 = vrot.lane.b32.xlu0 %v569, 96
    %v589 = vpop.permute.xlu0 %588
    %s591 = scalar_lea.vmem [#allocation6], 8
    %592 = vst.msk [vmem:[%s591] sm:$0xff] %vm63, %v589
    %s593 = scalar_lea.vmem [#allocation3], 48
    %v594 = vld [vmem:[%s593] sm:$0xff]
    %v595 = vld [vmem:[#allocation5] sm:$0xff]
    %v596 = vpack.c.bf16 %v595, %v595
    %v598 = vsel %vm63, %v596, 0
    %600 = vmatprep.subr.bf16.mxu0 0
    %601 = vmatpush1.bf16.msra.mxu0 0
    %602 = vmatprep.subr.bf16.mxu0 0
    %603 = vmatpush1.bf16.msra.mxu0 0
    %604 = vmatprep.subr.bf16.mxu0 0
    %605 = vmatpush1.bf16.msra.mxu0 0
    %606 = vmatprep.subr.bf16.mxu0 0
    %607 = vmatpush1.bf16.msra.mxu0 0
    %608 = vmatprep.subr.bf16.mxu0 0
    %609 = vmatpush1.bf16.msra.mxu0 0
    %610 = vmatprep.subr.bf16.mxu0 0
    %611 = vmatpush1.bf16.msra.mxu0 0
    %612 = vmatprep.subr.bf16.mxu0 0
    %613 = vmatpush1.bf16.msra.mxu0 %v381
    %614 = vmatprep.subr.bf16.mxu0 0
    %615 = vmatpush1.bf16.msra.mxu0 %v380
    %616 = vmatprep.subr.bf16.mxu0 0
    %617 = vmatpush2.bf16.msra.mxu0 0
    %618 = vmatprep.subr.bf16.mxu0 0
    %619 = vmatpush2.bf16.msra.mxu0 0
    %620 = vmatprep.subr.bf16.mxu0 0
    %621 = vmatpush2.bf16.msra.mxu0 0
    %622 = vmatprep.subr.bf16.mxu0 0
    %623 = vmatpush2.bf16.msra.mxu0 0
    %624 = vmatprep.subr.bf16.mxu0 0
    %625 = vmatpush2.bf16.msra.mxu0 0
    %626 = vmatprep.subr.bf16.mxu0 0
    %627 = vmatpush2.bf16.msra.mxu0 0
    %628 = vmatprep.subr.bf16.mxu0 0
    %629 = vmatpush2.bf16.msra.mxu0 0
    %630 = vmatprep.subr.bf16.mxu0 0
    %631 = vmatpush2.bf16.msra.mxu0 0
    %632 = vmatprep.mubr.bf16.mxu0 0
    %633 = vmatmul.mubr.bf16.gmra.mxu0 %v598
    %v634 = vpop.f32.mrf.mxu0
    %v635 = vadd.f32 0.0, %v634
    %v636 = vpop.f32.mrf.mxu0
    %v637 = vpop.f32.mrf.mxu0
    %v638 = vpop.f32.mrf.mxu0
    %639 = vdwg.mxu0
    %v640 = vadd.f32 %v594, %v635
    %v641 = vxor.u32 %v640, 2147483648
    %v642 = vmul.f32 %v641, 1.442695
    %v643 = vpow.pop %v642
    %v644 = vadd.f32 %v643, 1.0
    %v645 = vrcp.pop %v644
    %v646 = vmul.f32 1.0, %v645
    %648 = vrot.lane.b32.xlu0 %v635, 64
    %v649 = vpop.permute.xlu0 %648
    %v651 = vmul.f32 %v646, %v649
    %653 = vrot.lane.b32.xlu0 %v651, 64
    %v654 = vpop.permute.xlu0 %653
    %v656 = vadd.f32 %v594, %v654
    %v657 = vtanh.pop %v656
    %v658 = vsub.f32 1.0, %v646
    %660 = vrot.lane.b32.xlu0 %v657, 96
    %v661 = vpop.permute.xlu0 %660
    %v663 = vmul.f32 %v658, %v661
    %665 = vrot.lane.b32.xlu0 %v595, 32
    %v666 = vpop.permute.xlu0 %665
    %v668 = vmul.f32 %v646, %v666
    %v669 = vadd.f32 %v663, %v668
    %s670 = scalar_lea.vmem %s1, 48
    %v671 = vld [vmem:[%s670] sm:$0xff]
    %673 = vset.pattern.permute.xlu0 0
    %674 = vperm.xlu0 %673, %v671
    %v675 = vpop.permute.xlu0 %674
    %v677 = vmul.f32 %v675, %v669
    %v678 = vsub.f32 1.0, %v671
    %680 = vset.pattern.permute.xlu0 0
    %681 = vperm.xlu0 %680, %v678
    %v682 = vpop.permute.xlu0 %681
    %v684 = vmul.f32 %v682, %v595
    %686 = vrot.lane.b32.xlu0 %v684, 32
    %v687 = vpop.permute.xlu0 %686
    %v689 = vadd.f32 %v677, %v687
    %691 = vrot.lane.b32.xlu0 %v689, 96
    %v692 = vpop.permute.xlu0 %691
    %694 = vst.msk [vmem:[#allocation5] sm:$0xff] %vm63, %v692
    %s695 = scalar_lea.vmem [#allocation6], 48
    %696 = vst.msk [vmem:[%s695] sm:$0xff] %vm483, %v677
    %s697 = scalar_lea.vmem [#allocation2], 16
    %v698 = vld [vmem:[%s697] sm:$0xff]
    %v699 = vld [vmem:[#allocation4] sm:$0xff]
    %v700 = vpack.c.bf16 %v699, %v699
    %v702 = vsel %vm63, %v700, 0
    %704 = vmatprep.subr.bf16.mxu0 0
    %705 = vmatpush1.bf16.msra.mxu0 0
    %706 = vmatprep.subr.bf16.mxu0 0
    %707 = vmatpush1.bf16.msra.mxu0 0
    %708 = vmatprep.subr.bf16.mxu0 0
    %709 = vmatpush1.bf16.msra.mxu0 0
    %710 = vmatprep.subr.bf16.mxu0 0
    %711 = vmatpush1.bf16.msra.mxu0 0
    %712 = vmatprep.subr.bf16.mxu0 0
    %713 = vmatpush1.bf16.msra.mxu0 0
    %714 = vmatprep.subr.bf16.mxu0 0
    %715 = vmatpush1.bf16.msra.mxu0 0
    %716 = vmatprep.subr.bf16.mxu0 0
    %717 = vmatpush1.bf16.msra.mxu0 %v263
    %718 = vmatprep.subr.bf16.mxu0 0
    %719 = vmatpush1.bf16.msra.mxu0 %v262
    %720 = vmatprep.subr.bf16.mxu0 0
    %721 = vmatpush2.bf16.msra.mxu0 0
    %722 = vmatprep.subr.bf16.mxu0 0
    %723 = vmatpush2.bf16.msra.mxu0 0
    %724 = vmatprep.subr.bf16.mxu0 0
    %725 = vmatpush2.bf16.msra.mxu0 0
    %726 = vmatprep.subr.bf16.mxu0 0
    %727 = vmatpush2.bf16.msra.mxu0 0
    %728 = vmatprep.subr.bf16.mxu0 0
    %729 = vmatpush2.bf16.msra.mxu0 0
    %730 = vmatprep.subr.bf16.mxu0 0
    %731 = vmatpush2.bf16.msra.mxu0 0
    %732 = vmatprep.subr.bf16.mxu0 0
    %733 = vmatpush2.bf16.msra.mxu0 0
    %734 = vmatprep.subr.bf16.mxu0 0
    %735 = vmatpush2.bf16.msra.mxu0 0
    %736 = vmatprep.mubr.bf16.mxu0 0
    %737 = vmatmul.mubr.bf16.gmra.mxu0 %v702
    %v738 = vpop.f32.mrf.mxu0
    %v739 = vadd.f32 0.0, %v738
    %v740 = vpop.f32.mrf.mxu0
    %v741 = vpop.f32.mrf.mxu0
    %v742 = vpop.f32.mrf.mxu0
    %743 = vdwg.mxu0
    %v744 = vadd.f32 %v698, %v739
    %v745 = vxor.u32 %v744, 2147483648
    %v746 = vmul.f32 %v745, 1.442695
    %v747 = vpow.pop %v746
    %v748 = vadd.f32 %v747, 1.0
    %v749 = vrcp.pop %v748
    %v750 = vmul.f32 1.0, %v749
    %752 = vrot.lane.b32.xlu0 %v739, 64
    %v753 = vpop.permute.xlu0 %752
    %v755 = vmul.f32 %v750, %v753
    %757 = vrot.lane.b32.xlu0 %v755, 64
    %v758 = vpop.permute.xlu0 %757
    %v760 = vadd.f32 %v698, %v758
    %v761 = vtanh.pop %v760
    %v762 = vsub.f32 1.0, %v750
    %764 = vrot.lane.b32.xlu0 %v761, 96
    %v765 = vpop.permute.xlu0 %764
    %v767 = vmul.f32 %v762, %v765
    %769 = vrot.lane.b32.xlu0 %v699, 32
    %v770 = vpop.permute.xlu0 %769
    %v772 = vmul.f32 %v750, %v770
    %v773 = vadd.f32 %v767, %v772
    %s774 = scalar_lea.vmem %s1, 16
    %v775 = vld [vmem:[%s774] sm:$0xff]
    %777 = vset.pattern.permute.xlu0 0
    %778 = vperm.xlu0 %777, %v775
    %v779 = vpop.permute.xlu0 %778
    %v781 = vmul.f32 %v779, %v773
    %v782 = vsub.f32 1.0, %v775
    %784 = vset.pattern.permute.xlu0 0
    %785 = vperm.xlu0 %784, %v782
    %v786 = vpop.permute.xlu0 %785
    %v788 = vmul.f32 %v786, %v699
    %790 = vrot.lane.b32.xlu0 %v788, 32
    %v791 = vpop.permute.xlu0 %790
    %v793 = vadd.f32 %v781, %v791
    %795 = vrot.lane.b32.xlu0 %v793, 96
    %v796 = vpop.permute.xlu0 %795
    %798 = vst.msk [vmem:[#allocation4] sm:$0xff] %vm63, %v796
    %800 = vrot.lane.b32.xlu0 %v781, 96
    %v801 = vpop.permute.xlu0 %800
    %s803 = scalar_lea.vmem [#allocation6], 16
    %804 = vst.msk [vmem:[%s803] sm:$0xff] %vm63, %v801
    %s805 = scalar_lea.vmem [#allocation3], 40
    %v806 = vld [vmem:[%s805] sm:$0xff]
    %v807 = vld [vmem:[#allocation5] sm:$0xff]
    %v808 = vpack.c.bf16 %v807, %v807
    %v810 = vsel %vm63, %v808, 0
    %812 = vmatprep.subr.bf16.mxu0 0
    %813 = vmatpush1.bf16.msra.mxu0 0
    %814 = vmatprep.subr.bf16.mxu0 0
    %815 = vmatpush1.bf16.msra.mxu0 0
    %816 = vmatprep.subr.bf16.mxu0 0
    %817 = vmatpush1.bf16.msra.mxu0 0
    %818 = vmatprep.subr.bf16.mxu0 0
    %819 = vmatpush1.bf16.msra.mxu0 0
    %820 = vmatprep.subr.bf16.mxu0 0
    %821 = vmatpush1.bf16.msra.mxu0 0
    %822 = vmatprep.subr.bf16.mxu0 0
    %823 = vmatpush1.bf16.msra.mxu0 0
    %824 = vmatprep.subr.bf16.mxu0 0
    %825 = vmatpush1.bf16.msra.mxu0 %v381
    %826 = vmatprep.subr.bf16.mxu0 0
    %827 = vmatpush1.bf16.msra.mxu0 %v380
    %828 = vmatprep.subr.bf16.mxu0 0
    %829 = vmatpush2.bf16.msra.mxu0 0
    %830 = vmatprep.subr.bf16.mxu0 0
    %831 = vmatpush2.bf16.msra.mxu0 0
    %832 = vmatprep.subr.bf16.mxu0 0
    %833 = vmatpush2.bf16.msra.mxu0 0
    %834 = vmatprep.subr.bf16.mxu0 0
    %835 = vmatpush2.bf16.msra.mxu0 0
    %836 = vmatprep.subr.bf16.mxu0 0
    %837 = vmatpush2.bf16.msra.mxu0 0
    %838 = vmatprep.subr.bf16.mxu0 0
    %839 = vmatpush2.bf16.msra.mxu0 0
    %840 = vmatprep.subr.bf16.mxu0 0
    %841 = vmatpush2.bf16.msra.mxu0 0
    %842 = vmatprep.subr.bf16.mxu0 0
    %843 = vmatpush2.bf16.msra.mxu0 0
    %844 = vmatprep.mubr.bf16.mxu0 0
    %845 = vmatmul.mubr.bf16.gmra.mxu0 %v810
    %v846 = vpop.f32.mrf.mxu0
    %v847 = vadd.f32 0.0, %v846
    %v848 = vpop.f32.mrf.mxu0
    %v849 = vpop.f32.mrf.mxu0
    %v850 = vpop.f32.mrf.mxu0
    %851 = vdwg.mxu0
    %v852 = vadd.f32 %v806, %v847
    %v853 = vxor.u32 %v852, 2147483648
    %v854 = vmul.f32 %v853, 1.442695
    %v855 = vpow.pop %v854
    %v856 = vadd.f32 %v855, 1.0
    %v857 = vrcp.pop %v856
    %v858 = vmul.f32 1.0, %v857
    %860 = vrot.lane.b32.xlu0 %v847, 64
    %v861 = vpop.permute.xlu0 %860
    %v863 = vmul.f32 %v858, %v861
    %865 = vrot.lane.b32.xlu0 %v863, 64
    %v866 = vpop.permute.xlu0 %865
    %v868 = vadd.f32 %v806, %v866
    %v869 = vtanh.pop %v868
    %v870 = vsub.f32 1.0, %v858
    %872 = vrot.lane.b32.xlu0 %v869, 96
    %v873 = vpop.permute.xlu0 %872
    %v875 = vmul.f32 %v870, %v873
    %877 = vrot.lane.b32.xlu0 %v807, 32
    %v878 = vpop.permute.xlu0 %877
    %v880 = vmul.f32 %v858, %v878
    %v881 = vadd.f32 %v875, %v880
    %s882 = scalar_lea.vmem %s1, 40
    %v883 = vld [vmem:[%s882] sm:$0xff]
    %885 = vset.pattern.permute.xlu0 0
    %886 = vperm.xlu0 %885, %v883
    %v887 = vpop.permute.xlu0 %886
    %v889 = vmul.f32 %v887, %v881
    %v890 = vsub.f32 1.0, %v883
    %892 = vset.pattern.permute.xlu0 0
    %893 = vperm.xlu0 %892, %v890
    %v894 = vpop.permute.xlu0 %893
    %v896 = vmul.f32 %v894, %v807
    %898 = vrot.lane.b32.xlu0 %v896, 32
    %v899 = vpop.permute.xlu0 %898
    %v901 = vadd.f32 %v889, %v899
    %903 = vrot.lane.b32.xlu0 %v901, 96
    %v904 = vpop.permute.xlu0 %903
    %906 = vst.msk [vmem:[#allocation5] sm:$0xff] %vm63, %v904
    %s907 = scalar_lea.vmem [#allocation6], 40
    %908 = vst.msk [vmem:[%s907] sm:$0xff] %vm483, %v889
    %s909 = scalar_lea.vmem [#allocation2], 24
    %v910 = vld [vmem:[%s909] sm:$0xff]
    %v911 = vld [vmem:[#allocation4] sm:$0xff]
    %v912 = vpack.c.bf16 %v911, %v911
    %v914 = vsel %vm63, %v912, 0
    %916 = vmatprep.subr.bf16.mxu0 0
    %917 = vmatpush1.bf16.msra.mxu0 0
    %918 = vmatprep.subr.bf16.mxu0 0
    %919 = vmatpush1.bf16.msra.mxu0 0
    %920 = vmatprep.subr.bf16.mxu0 0
    %921 = vmatpush1.bf16.msra.mxu0 0
    %922 = vmatprep.subr.bf16.mxu0 0
    %923 = vmatpush1.bf16.msra.mxu0 0
    %924 = vmatprep.subr.bf16.mxu0 0
    %925 = vmatpush1.bf16.msra.mxu0 0
    %926 = vmatprep.subr.bf16.mxu0 0
    %927 = vmatpush1.bf16.msra.mxu0 0
    %928 = vmatprep.subr.bf16.mxu0 0
    %929 = vmatpush1.bf16.msra.mxu0 %v263
    %930 = vmatprep.subr.bf16.mxu0 0
    %931 = vmatpush1.bf16.msra.mxu0 %v262
    %932 = vmatprep.subr.bf16.mxu0 0
    %933 = vmatpush2.bf16.msra.mxu0 0
    %934 = vmatprep.subr.bf16.mxu0 0
    %935 = vmatpush2.bf16.msra.mxu0 0
    %936 = vmatprep.subr.bf16.mxu0 0
    %937 = vmatpush2.bf16.msra.mxu0 0
    %938 = vmatprep.subr.bf16.mxu0 0
    %939 = vmatpush2.bf16.msra.mxu0 0
    %940 = vmatprep.subr.bf16.mxu0 0
    %941 = vmatpush2.bf16.msra.mxu0 0
    %942 = vmatprep.subr.bf16.mxu0 0
    %943 = vmatpush2.bf16.msra.mxu0 0
    %944 = vmatprep.subr.bf16.mxu0 0
    %945 = vmatpush2.bf16.msra.mxu0 0
    %946 = vmatprep.subr.bf16.mxu0 0
    %947 = vmatpush2.bf16.msra.mxu0 0
    %948 = vmatprep.mubr.bf16.mxu0 0
    %949 = vmatmul.mubr.bf16.gmra.mxu0 %v914
    %v950 = vpop.f32.mrf.mxu0
    %v951 = vadd.f32 0.0, %v950
    %v952 = vpop.f32.mrf.mxu0
    %v953 = vpop.f32.mrf.mxu0
    %v954 = vpop.f32.mrf.mxu0
    %955 = vdwg.mxu0
    %v956 = vadd.f32 %v910, %v951
    %v957 = vxor.u32 %v956, 2147483648
    %v958 = vmul.f32 %v957, 1.442695
    %v959 = vpow.pop %v958
    %v960 = vadd.f32 %v959, 1.0
    %v961 = vrcp.pop %v960
    %v962 = vmul.f32 1.0, %v961
    %964 = vrot.lane.b32.xlu0 %v951, 64
    %v965 = vpop.permute.xlu0 %964
    %v967 = vmul.f32 %v962, %v965
    %969 = vrot.lane.b32.xlu0 %v967, 64
    %v970 = vpop.permute.xlu0 %969
    %v972 = vadd.f32 %v910, %v970
    %v973 = vtanh.pop %v972
    %v974 = vsub.f32 1.0, %v962
    %976 = vrot.lane.b32.xlu0 %v973, 96
    %v977 = vpop.permute.xlu0 %976
    %v979 = vmul.f32 %v974, %v977
    %981 = vrot.lane.b32.xlu0 %v911, 32
    %v982 = vpop.permute.xlu0 %981
    %v984 = vmul.f32 %v962, %v982
    %v985 = vadd.f32 %v979, %v984
    %s986 = scalar_lea.vmem %s1, 24
    %v987 = vld [vmem:[%s986] sm:$0xff]
    %989 = vset.pattern.permute.xlu0 0
    %990 = vperm.xlu0 %989, %v987
    %v991 = vpop.permute.xlu0 %990
    %v993 = vmul.f32 %v991, %v985
    %v994 = vsub.f32 1.0, %v987
    %996 = vset.pattern.permute.xlu0 0
    %997 = vperm.xlu0 %996, %v994
    %v998 = vpop.permute.xlu0 %997
    %v1000 = vmul.f32 %v998, %v911
    %1002 = vrot.lane.b32.xlu0 %v1000, 32
    %v1003 = vpop.permute.xlu0 %1002
    %v1005 = vadd.f32 %v993, %v1003
    %1007 = vrot.lane.b32.xlu0 %v1005, 96
    %v1008 = vpop.permute.xlu0 %1007
    %1010 = vst.msk [vmem:[#allocation4] sm:$0xff] %vm63, %v1008
    %1012 = vrot.lane.b32.xlu0 %v993, 96
    %v1013 = vpop.permute.xlu0 %1012
    %s1015 = scalar_lea.vmem [#allocation6], 24
    %1016 = vst.msk [vmem:[%s1015] sm:$0xff] %vm63, %v1013
    %s1017 = scalar_lea.vmem [#allocation3], 32
    %v1018 = vld [vmem:[%s1017] sm:$0xff]
    %v1019 = vld [vmem:[#allocation5] sm:$0xff]
    %v1020 = vpack.c.bf16 %v1019, %v1019
    %v1022 = vsel %vm63, %v1020, 0
    %1024 = vmatprep.subr.bf16.mxu0 0
    %1025 = vmatpush1.bf16.msra.mxu0 0
    %1026 = vmatprep.subr.bf16.mxu0 0
    %1027 = vmatpush1.bf16.msra.mxu0 0
    %1028 = vmatprep.subr.bf16.mxu0 0
    %1029 = vmatpush1.bf16.msra.mxu0 0
    %1030 = vmatprep.subr.bf16.mxu0 0
    %1031 = vmatpush1.bf16.msra.mxu0 0
    %1032 = vmatprep.subr.bf16.mxu0 0
    %1033 = vmatpush1.bf16.msra.mxu0 0
    %1034 = vmatprep.subr.bf16.mxu0 0
    %1035 = vmatpush1.bf16.msra.mxu0 0
    %1036 = vmatprep.subr.bf16.mxu0 0
    %1037 = vmatpush1.bf16.msra.mxu0 %v381
    %1038 = vmatprep.subr.bf16.mxu0 0
    %1039 = vmatpush1.bf16.msra.mxu0 %v380
    %1040 = vmatprep.subr.bf16.mxu0 0
    %1041 = vmatpush2.bf16.msra.mxu0 0
    %1042 = vmatprep.subr.bf16.mxu0 0
    %1043 = vmatpush2.bf16.msra.mxu0 0
    %1044 = vmatprep.subr.bf16.mxu0 0
    %1045 = vmatpush2.bf16.msra.mxu0 0
    %1046 = vmatprep.subr.bf16.mxu0 0
    %1047 = vmatpush2.bf16.msra.mxu0 0
    %1048 = vmatprep.subr.bf16.mxu0 0
    %1049 = vmatpush2.bf16.msra.mxu0 0
    %1050 = vmatprep.subr.bf16.mxu0 0
    %1051 = vmatpush2.bf16.msra.mxu0 0
    %1052 = vmatprep.subr.bf16.mxu0 0
    %1053 = vmatpush2.bf16.msra.mxu0 0
    %1054 = vmatprep.subr.bf16.mxu0 0
    %1055 = vmatpush2.bf16.msra.mxu0 0
    %1056 = vmatprep.mubr.bf16.mxu0 0
    %1057 = vmatmul.mubr.bf16.gmra.mxu0 %v1022
    %v1058 = vpop.f32.mrf.mxu0
    %v1059 = vadd.f32 0.0, %v1058
    %v1060 = vpop.f32.mrf.mxu0
    %v1061 = vpop.f32.mrf.mxu0
    %v1062 = vpop.f32.mrf.mxu0
    %1063 = vdwg.mxu0
    %v1064 = vadd.f32 %v1018, %v1059
    %v1065 = vxor.u32 %v1064, 2147483648
    %v1066 = vmul.f32 %v1065, 1.442695
    %v1067 = vpow.pop %v1066
    %v1068 = vadd.f32 %v1067, 1.0
    %v1069 = vrcp.pop %v1068
    %v1070 = vmul.f32 1.0, %v1069
    %1072 = vrot.lane.b32.xlu0 %v1059, 64
    %v1073 = vpop.permute.xlu0 %1072
    %v1075 = vmul.f32 %v1070, %v1073
    %1077 = vrot.lane.b32.xlu0 %v1075, 64
    %v1078 = vpop.permute.xlu0 %1077
    %v1080 = vadd.f32 %v1018, %v1078
    %v1081 = vtanh.pop %v1080
    %v1082 = vsub.f32 1.0, %v1070
    %1084 = vrot.lane.b32.xlu0 %v1081, 96
    %v1085 = vpop.permute.xlu0 %1084
    %v1087 = vmul.f32 %v1082, %v1085
    %1089 = vrot.lane.b32.xlu0 %v1019, 32
    %v1090 = vpop.permute.xlu0 %1089
    %v1092 = vmul.f32 %v1070, %v1090
    %v1093 = vadd.f32 %v1087, %v1092
    %s1094 = scalar_lea.vmem %s1, 32
    %v1095 = vld [vmem:[%s1094] sm:$0xff]
    %1097 = vset.pattern.permute.xlu0 0
    %1098 = vperm.xlu0 %1097, %v1095
    %v1099 = vpop.permute.xlu0 %1098
    %v1101 = vmul.f32 %v1099, %v1093
    %v1102 = vsub.f32 1.0, %v1095
    %1104 = vset.pattern.permute.xlu0 0
    %1105 = vperm.xlu0 %1104, %v1102
    %v1106 = vpop.permute.xlu0 %1105
    %v1108 = vmul.f32 %v1106, %v1019
    %1110 = vrot.lane.b32.xlu0 %v1108, 32
    %v1111 = vpop.permute.xlu0 %1110
    %v1113 = vadd.f32 %v1101, %v1111
    %1115 = vrot.lane.b32.xlu0 %v1113, 96
    %v1116 = vpop.permute.xlu0 %1115
    %1118 = vst.msk [vmem:[#allocation5] sm:$0xff] %vm63, %v1116
    %s1119 = scalar_lea.vmem [#allocation6], 32
    %1120 = vst.msk [vmem:[%s1119] sm:$0xff] %vm483, %v1101
    %s1121 = scalar_lea.vmem [#allocation2], 32
    %v1122 = vld [vmem:[%s1121] sm:$0xff]
    %v1123 = vld [vmem:[#allocation4] sm:$0xff]
    %v1124 = vpack.c.bf16 %v1123, %v1123
    %v1126 = vsel %vm63, %v1124, 0
    %1128 = vmatprep.subr.bf16.mxu0 0
    %1129 = vmatpush1.bf16.msra.mxu0 0
    %1130 = vmatprep.subr.bf16.mxu0 0
    %1131 = vmatpush1.bf16.msra.mxu0 0
    %1132 = vmatprep.subr.bf16.mxu0 0
    %1133 = vmatpush1.bf16.msra.mxu0 0
    %1134 = vmatprep.subr.bf16.mxu0 0
    %1135 = vmatpush1.bf16.msra.mxu0 0
    %1136 = vmatprep.subr.bf16.mxu0 0
    %1137 = vmatpush1.bf16.msra.mxu0 0
    %1138 = vmatprep.subr.bf16.mxu0 0
    %1139 = vmatpush1.bf16.msra.mxu0 0
    %1140 = vmatprep.subr.bf16.mxu0 0
    %1141 = vmatpush1.bf16.msra.mxu0 %v263
    %1142 = vmatprep.subr.bf16.mxu0 0
    %1143 = vmatpush1.bf16.msra.mxu0 %v262
    %1144 = vmatprep.subr.bf16.mxu0 0
    %1145 = vmatpush2.bf16.msra.mxu0 0
    %1146 = vmatprep.subr.bf16.mxu0 0
    %1147 = vmatpush2.bf16.msra.mxu0 0
    %1148 = vmatprep.subr.bf16.mxu0 0
    %1149 = vmatpush2.bf16.msra.mxu0 0
    %1150 = vmatprep.subr.bf16.mxu0 0
    %1151 = vmatpush2.bf16.msra.mxu0 0
    %1152 = vmatprep.subr.bf16.mxu0 0
    %1153 = vmatpush2.bf16.msra.mxu0 0
    %1154 = vmatprep.subr.bf16.mxu0 0
    %1155 = vmatpush2.bf16.msra.mxu0 0
    %1156 = vmatprep.subr.bf16.mxu0 0
    %1157 = vmatpush2.bf16.msra.mxu0 0
    %1158 = vmatprep.subr.bf16.mxu0 0
    %1159 = vmatpush2.bf16.msra.mxu0 0
    %1160 = vmatprep.mubr.bf16.mxu0 0
    %1161 = vmatmul.mubr.bf16.gmra.mxu0 %v1126
    %v1162 = vpop.f32.mrf.mxu0
    %v1163 = vadd.f32 0.0, %v1162
    %v1164 = vpop.f32.mrf.mxu0
    %v1165 = vpop.f32.mrf.mxu0
    %v1166 = vpop.f32.mrf.mxu0
    %1167 = vdwg.mxu0
    %v1168 = vadd.f32 %v1122, %v1163
    %v1169 = vxor.u32 %v1168, 2147483648
    %v1170 = vmul.f32 %v1169, 1.442695
    %v1171 = vpow.pop %v1170
    %v1172 = vadd.f32 %v1171, 1.0
    %v1173 = vrcp.pop %v1172
    %v1174 = vmul.f32 1.0, %v1173
    %1176 = vrot.lane.b32.xlu0 %v1163, 64
    %v1177 = vpop.permute.xlu0 %1176
    %v1179 = vmul.f32 %v1174, %v1177
    %1181 = vrot.lane.b32.xlu0 %v1179, 64
    %v1182 = vpop.permute.xlu0 %1181
    %v1184 = vadd.f32 %v1122, %v1182
    %v1185 = vtanh.pop %v1184
    %v1186 = vsub.f32 1.0, %v1174
    %1188 = vrot.lane.b32.xlu0 %v1185, 96
    %v1189 = vpop.permute.xlu0 %1188
    %v1191 = vmul.f32 %v1186, %v1189
    %1193 = vrot.lane.b32.xlu0 %v1123, 32
    %v1194 = vpop.permute.xlu0 %1193
    %v1196 = vmul.f32 %v1174, %v1194
    %v1197 = vadd.f32 %v1191, %v1196
    %v1198 = vld [vmem:[%s1094] sm:$0xff]
    %1200 = vset.pattern.permute.xlu0 0
    %1201 = vperm.xlu0 %1200, %v1198
    %v1202 = vpop.permute.xlu0 %1201
    %v1204 = vmul.f32 %v1202, %v1197
    %v1205 = vsub.f32 1.0, %v1198
    %1207 = vset.pattern.permute.xlu0 0
    %1208 = vperm.xlu0 %1207, %v1205
    %v1209 = vpop.permute.xlu0 %1208
    %v1211 = vmul.f32 %v1209, %v1123
    %1213 = vrot.lane.b32.xlu0 %v1211, 32
    %v1214 = vpop.permute.xlu0 %1213
    %v1216 = vadd.f32 %v1204, %v1214
    %1218 = vrot.lane.b32.xlu0 %v1216, 96
    %v1219 = vpop.permute.xlu0 %1218
    %1221 = vst.msk [vmem:[#allocation4] sm:$0xff] %vm63, %v1219
    %1223 = vrot.lane.b32.xlu0 %v1204, 96
    %v1224 = vpop.permute.xlu0 %1223
    %1226 = vst.msk [vmem:[%s1119] sm:$0xff] %vm63, %v1224
    %s1227 = scalar_lea.vmem [#allocation3], 24
    %v1228 = vld [vmem:[%s1227] sm:$0xff]
    %v1229 = vld [vmem:[#allocation5] sm:$0xff]
    %v1230 = vpack.c.bf16 %v1229, %v1229
    %v1232 = vsel %vm63, %v1230, 0
    %1234 = vmatprep.subr.bf16.mxu0 0
    %1235 = vmatpush1.bf16.msra.mxu0 0
    %1236 = vmatprep.subr.bf16.mxu0 0
    %1237 = vmatpush1.bf16.msra.mxu0 0
    %1238 = vmatprep.subr.bf16.mxu0 0
    %1239 = vmatpush1.bf16.msra.mxu0 0
    %1240 = vmatprep.subr.bf16.mxu0 0
    %1241 = vmatpush1.bf16.msra.mxu0 0
    %1242 = vmatprep.subr.bf16.mxu0 0
    %1243 = vmatpush1.bf16.msra.mxu0 0
    %1244 = vmatprep.subr.bf16.mxu0 0
    %1245 = vmatpush1.bf16.msra.mxu0 0
    %1246 = vmatprep.subr.bf16.mxu0 0
    %1247 = vmatpush1.bf16.msra.mxu0 %v381
    %1248 = vmatprep.subr.bf16.mxu0 0
    %1249 = vmatpush1.bf16.msra.mxu0 %v380
    %1250 = vmatprep.subr.bf16.mxu0 0
    %1251 = vmatpush2.bf16.msra.mxu0 0
    %1252 = vmatprep.subr.bf16.mxu0 0
    %1253 = vmatpush2.bf16.msra.mxu0 0
    %1254 = vmatprep.subr.bf16.mxu0 0
    %1255 = vmatpush2.bf16.msra.mxu0 0
    %1256 = vmatprep.subr.bf16.mxu0 0
    %1257 = vmatpush2.bf16.msra.mxu0 0
    %1258 = vmatprep.subr.bf16.mxu0 0
    %1259 = vmatpush2.bf16.msra.mxu0 0
    %1260 = vmatprep.subr.bf16.mxu0 0
    %1261 = vmatpush2.bf16.msra.mxu0 0
    %1262 = vmatprep.subr.bf16.mxu0 0
    %1263 = vmatpush2.bf16.msra.mxu0 0
    %1264 = vmatprep.subr.bf16.mxu0 0
    %1265 = vmatpush2.bf16.msra.mxu0 0
    %1266 = vmatprep.mubr.bf16.mxu0 0
    %1267 = vmatmul.mubr.bf16.gmra.mxu0 %v1232
    %v1268 = vpop.f32.mrf.mxu0
    %v1269 = vadd.f32 0.0, %v1268
    %v1270 = vpop.f32.mrf.mxu0
    %v1271 = vpop.f32.mrf.mxu0
    %v1272 = vpop.f32.mrf.mxu0
    %1273 = vdwg.mxu0
    %v1274 = vadd.f32 %v1228, %v1269
    %v1275 = vxor.u32 %v1274, 2147483648
    %v1276 = vmul.f32 %v1275, 1.442695
    %v1277 = vpow.pop %v1276
    %v1278 = vadd.f32 %v1277, 1.0
    %v1279 = vrcp.pop %v1278
    %v1280 = vmul.f32 1.0, %v1279
    %1282 = vrot.lane.b32.xlu0 %v1269, 64
    %v1283 = vpop.permute.xlu0 %1282
    %v1285 = vmul.f32 %v1280, %v1283
    %1287 = vrot.lane.b32.xlu0 %v1285, 64
    %v1288 = vpop.permute.xlu0 %1287
    %v1290 = vadd.f32 %v1228, %v1288
    %v1291 = vtanh.pop %v1290
    %v1292 = vsub.f32 1.0, %v1280
    %1294 = vrot.lane.b32.xlu0 %v1291, 96
    %v1295 = vpop.permute.xlu0 %1294
    %v1297 = vmul.f32 %v1292, %v1295
    %1299 = vrot.lane.b32.xlu0 %v1229, 32
    %v1300 = vpop.permute.xlu0 %1299
    %v1302 = vmul.f32 %v1280, %v1300
    %v1303 = vadd.f32 %v1297, %v1302
    %v1304 = vld [vmem:[%s986] sm:$0xff]
    %1306 = vset.pattern.permute.xlu0 0
    %1307 = vperm.xlu0 %1306, %v1304
    %v1308 = vpop.permute.xlu0 %1307
    %v1310 = vmul.f32 %v1308, %v1303
    %v1311 = vsub.f32 1.0, %v1304
    %1313 = vset.pattern.permute.xlu0 0
    %1314 = vperm.xlu0 %1313, %v1311
    %v1315 = vpop.permute.xlu0 %1314
    %v1317 = vmul.f32 %v1315, %v1229
    %1319 = vrot.lane.b32.xlu0 %v1317, 32
    %v1320 = vpop.permute.xlu0 %1319
    %v1322 = vadd.f32 %v1310, %v1320
    %1324 = vrot.lane.b32.xlu0 %v1322, 96
    %v1325 = vpop.permute.xlu0 %1324
    %1327 = vst.msk [vmem:[#allocation5] sm:$0xff] %vm63, %v1325
    %1328 = vst.msk [vmem:[%s1015] sm:$0xff] %vm483, %v1310
    %s1329 = scalar_lea.vmem [#allocation2], 40
    %v1330 = vld [vmem:[%s1329] sm:$0xff]
    %v1331 = vld [vmem:[#allocation4] sm:$0xff]
    %v1332 = vpack.c.bf16 %v1331, %v1331
    %v1334 = vsel %vm63, %v1332, 0
    %1336 = vmatprep.subr.bf16.mxu0 0
    %1337 = vmatpush1.bf16.msra.mxu0 0
    %1338 = vmatprep.subr.bf16.mxu0 0
    %1339 = vmatpush1.bf16.msra.mxu0 0
    %1340 = vmatprep.subr.bf16.mxu0 0
    %1341 = vmatpush1.bf16.msra.mxu0 0
    %1342 = vmatprep.subr.bf16.mxu0 0
    %1343 = vmatpush1.bf16.msra.mxu0 0
    %1344 = vmatprep.subr.bf16.mxu0 0
    %1345 = vmatpush1.bf16.msra.mxu0 0
    %1346 = vmatprep.subr.bf16.mxu0 0
    %1347 = vmatpush1.bf16.msra.mxu0 0
    %1348 = vmatprep.subr.bf16.mxu0 0
    %1349 = vmatpush1.bf16.msra.mxu0 %v263
    %1350 = vmatprep.subr.bf16.mxu0 0
    %1351 = vmatpush1.bf16.msra.mxu0 %v262
    %1352 = vmatprep.subr.bf16.mxu0 0
    %1353 = vmatpush2.bf16.msra.mxu0 0
    %1354 = vmatprep.subr.bf16.mxu0 0
    %1355 = vmatpush2.bf16.msra.mxu0 0
    %1356 = vmatprep.subr.bf16.mxu0 0
    %1357 = vmatpush2.bf16.msra.mxu0 0
    %1358 = vmatprep.subr.bf16.mxu0 0
    %1359 = vmatpush2.bf16.msra.mxu0 0
    %1360 = vmatprep.subr.bf16.mxu0 0
    %1361 = vmatpush2.bf16.msra.mxu0 0
    %1362 = vmatprep.subr.bf16.mxu0 0
    %1363 = vmatpush2.bf16.msra.mxu0 0
    %1364 = vmatprep.subr.bf16.mxu0 0
    %1365 = vmatpush2.bf16.msra.mxu0 0
    %1366 = vmatprep.subr.bf16.mxu0 0
    %1367 = vmatpush2.bf16.msra.mxu0 0
    %1368 = vmatprep.mubr.bf16.mxu0 0
    %1369 = vmatmul.mubr.bf16.gmra.mxu0 %v1334
    %v1370 = vpop.f32.mrf.mxu0
    %v1371 = vadd.f32 0.0, %v1370
    %v1372 = vpop.f32.mrf.mxu0
    %v1373 = vpop.f32.mrf.mxu0
    %v1374 = vpop.f32.mrf.mxu0
    %1375 = vdwg.mxu0
    %v1376 = vadd.f32 %v1330, %v1371
    %v1377 = vxor.u32 %v1376, 2147483648
    %v1378 = vmul.f32 %v1377, 1.442695
    %v1379 = vpow.pop %v1378
    %v1380 = vadd.f32 %v1379, 1.0
    %v1381 = vrcp.pop %v1380
    %v1382 = vmul.f32 1.0, %v1381
    %1384 = vrot.lane.b32.xlu0 %v1371, 64
    %v1385 = vpop.permute.xlu0 %1384
    %v1387 = vmul.f32 %v1382, %v1385
    %1389 = vrot.lane.b32.xlu0 %v1387, 64
    %v1390 = vpop.permute.xlu0 %1389
    %v1392 = vadd.f32 %v1330, %v1390
    %v1393 = vtanh.pop %v1392
    %v1394 = vsub.f32 1.0, %v1382
    %1396 = vrot.lane.b32.xlu0 %v1393, 96
    %v1397 = vpop.permute.xlu0 %1396
    %v1399 = vmul.f32 %v1394, %v1397
    %1401 = vrot.lane.b32.xlu0 %v1331, 32
    %v1402 = vpop.permute.xlu0 %1401
    %v1404 = vmul.f32 %v1382, %v1402
    %v1405 = vadd.f32 %v1399, %v1404
    %v1406 = vld [vmem:[%s882] sm:$0xff]
    %1408 = vset.pattern.permute.xlu0 0
    %1409 = vperm.xlu0 %1408, %v1406
    %v1410 = vpop.permute.xlu0 %1409
    %v1412 = vmul.f32 %v1410, %v1405
    %v1413 = vsub.f32 1.0, %v1406
    %1415 = vset.pattern.permute.xlu0 0
    %1416 = vperm.xlu0 %1415, %v1413
    %v1417 = vpop.permute.xlu0 %1416
    %v1419 = vmul.f32 %v1417, %v1331
    %1421 = vrot.lane.b32.xlu0 %v1419, 32
    %v1422 = vpop.permute.xlu0 %1421
    %v1424 = vadd.f32 %v1412, %v1422
    %1426 = vrot.lane.b32.xlu0 %v1424, 96
    %v1427 = vpop.permute.xlu0 %1426
    %1429 = vst.msk [vmem:[#allocation4] sm:$0xff] %vm63, %v1427
    %1431 = vrot.lane.b32.xlu0 %v1412, 96
    %v1432 = vpop.permute.xlu0 %1431
    %1434 = vst.msk [vmem:[%s907] sm:$0xff] %vm63, %v1432
    %s1435 = scalar_lea.vmem [#allocation3], 16
    %v1436 = vld [vmem:[%s1435] sm:$0xff]
    %v1437 = vld [vmem:[#allocation5] sm:$0xff]
    %v1438 = vpack.c.bf16 %v1437, %v1437
    %v1440 = vsel %vm63, %v1438, 0
    %1442 = vmatprep.subr.bf16.mxu0 0
    %1443 = vmatpush1.bf16.msra.mxu0 0
    %1444 = vmatprep.subr.bf16.mxu0 0
    %1445 = vmatpush1.bf16.msra.mxu0 0
    %1446 = vmatprep.subr.bf16.mxu0 0
    %1447 = vmatpush1.bf16.msra.mxu0 0
    %1448 = vmatprep.subr.bf16.mxu0 0
    %1449 = vmatpush1.bf16.msra.mxu0 0
    %1450 = vmatprep.subr.bf16.mxu0 0
    %1451 = vmatpush1.bf16.msra.mxu0 0
    %1452 = vmatprep.subr.bf16.mxu0 0
    %1453 = vmatpush1.bf16.msra.mxu0 0
    %1454 = vmatprep.subr.bf16.mxu0 0
    %1455 = vmatpush1.bf16.msra.mxu0 %v381
    %1456 = vmatprep.subr.bf16.mxu0 0
    %1457 = vmatpush1.bf16.msra.mxu0 %v380
    %1458 = vmatprep.subr.bf16.mxu0 0
    %1459 = vmatpush2.bf16.msra.mxu0 0
    %1460 = vmatprep.subr.bf16.mxu0 0
    %1461 = vmatpush2.bf16.msra.mxu0 0
    %1462 = vmatprep.subr.bf16.mxu0 0
    %1463 = vmatpush2.bf16.msra.mxu0 0
    %1464 = vmatprep.subr.bf16.mxu0 0
    %1465 = vmatpush2.bf16.msra.mxu0 0
    %1466 = vmatprep.subr.bf16.mxu0 0
    %1467 = vmatpush2.bf16.msra.mxu0 0
    %1468 = vmatprep.subr.bf16.mxu0 0
    %1469 = vmatpush2.bf16.msra.mxu0 0
    %1470 = vmatprep.subr.bf16.mxu0 0
    %1471 = vmatpush2.bf16.msra.mxu0 0
    %1472 = vmatprep.subr.bf16.mxu0 0
    %1473 = vmatpush2.bf16.msra.mxu0 0
    %1474 = vmatprep.mubr.bf16.mxu0 0
    %1475 = vmatmul.mubr.bf16.gmra.mxu0 %v1440
    %v1476 = vpop.f32.mrf.mxu0
    %v1477 = vadd.f32 0.0, %v1476
    %v1478 = vpop.f32.mrf.mxu0
    %v1479 = vpop.f32.mrf.mxu0
    %v1480 = vpop.f32.mrf.mxu0
    %1481 = vdwg.mxu0
    %v1482 = vadd.f32 %v1436, %v1477
    %v1483 = vxor.u32 %v1482, 2147483648
    %v1484 = vmul.f32 %v1483, 1.442695
    %v1485 = vpow.pop %v1484
    %v1486 = vadd.f32 %v1485, 1.0
    %v1487 = vrcp.pop %v1486
    %v1488 = vmul.f32 1.0, %v1487
    %1490 = vrot.lane.b32.xlu0 %v1477, 64
    %v1491 = vpop.permute.xlu0 %1490
    %v1493 = vmul.f32 %v1488, %v1491
    %1495 = vrot.lane.b32.xlu0 %v1493, 64
    %v1496 = vpop.permute.xlu0 %1495
    %v1498 = vadd.f32 %v1436, %v1496
    %v1499 = vtanh.pop %v1498
    %v1500 = vsub.f32 1.0, %v1488
    %1502 = vrot.lane.b32.xlu0 %v1499, 96
    %v1503 = vpop.permute.xlu0 %1502
    %v1505 = vmul.f32 %v1500, %v1503
    %1507 = vrot.lane.b32.xlu0 %v1437, 32
    %v1508 = vpop.permute.xlu0 %1507
    %v1510 = vmul.f32 %v1488, %v1508
    %v1511 = vadd.f32 %v1505, %v1510
    %v1512 = vld [vmem:[%s774] sm:$0xff]
    %1514 = vset.pattern.permute.xlu0 0
    %1515 = vperm.xlu0 %1514, %v1512
    %v1516 = vpop.permute.xlu0 %1515
    %v1518 = vmul.f32 %v1516, %v1511
    %v1519 = vsub.f32 1.0, %v1512
    %1521 = vset.pattern.permute.xlu0 0
    %1522 = vperm.xlu0 %1521, %v1519
    %v1523 = vpop.permute.xlu0 %1522
    %v1525 = vmul.f32 %v1523, %v1437
    %1527 = vrot.lane.b32.xlu0 %v1525, 32
    %v1528 = vpop.permute.xlu0 %1527
    %v1530 = vadd.f32 %v1518, %v1528
    %1532 = vrot.lane.b32.xlu0 %v1530, 96
    %v1533 = vpop.permute.xlu0 %1532
    %1535 = vst.msk [vmem:[#allocation5] sm:$0xff] %vm63, %v1533
    %1536 = vst.msk [vmem:[%s803] sm:$0xff] %vm483, %v1518
    %s1537 = scalar_lea.vmem [#allocation2], 48
    %v1538 = vld [vmem:[%s1537] sm:$0xff]
    %v1539 = vld [vmem:[#allocation4] sm:$0xff]
    %v1540 = vpack.c.bf16 %v1539, %v1539
    %v1542 = vsel %vm63, %v1540, 0
    %1544 = vmatprep.subr.bf16.mxu0 0
    %1545 = vmatpush1.bf16.msra.mxu0 0
    %1546 = vmatprep.subr.bf16.mxu0 0
    %1547 = vmatpush1.bf16.msra.mxu0 0
    %1548 = vmatprep.subr.bf16.mxu0 0
    %1549 = vmatpush1.bf16.msra.mxu0 0
    %1550 = vmatprep.subr.bf16.mxu0 0
    %1551 = vmatpush1.bf16.msra.mxu0 0
    %1552 = vmatprep.subr.bf16.mxu0 0
    %1553 = vmatpush1.bf16.msra.mxu0 0
    %1554 = vmatprep.subr.bf16.mxu0 0
    %1555 = vmatpush1.bf16.msra.mxu0 0
    %1556 = vmatprep.subr.bf16.mxu0 0
    %1557 = vmatpush1.bf16.msra.mxu0 %v263
    %1558 = vmatprep.subr.bf16.mxu0 0
    %1559 = vmatpush1.bf16.msra.mxu0 %v262
    %1560 = vmatprep.subr.bf16.mxu0 0
    %1561 = vmatpush2.bf16.msra.mxu0 0
    %1562 = vmatprep.subr.bf16.mxu0 0
    %1563 = vmatpush2.bf16.msra.mxu0 0
    %1564 = vmatprep.subr.bf16.mxu0 0
    %1565 = vmatpush2.bf16.msra.mxu0 0
    %1566 = vmatprep.subr.bf16.mxu0 0
    %1567 = vmatpush2.bf16.msra.mxu0 0
    %1568 = vmatprep.subr.bf16.mxu0 0
    %1569 = vmatpush2.bf16.msra.mxu0 0
    %1570 = vmatprep.subr.bf16.mxu0 0
    %1571 = vmatpush2.bf16.msra.mxu0 0
    %1572 = vmatprep.subr.bf16.mxu0 0
    %1573 = vmatpush2.bf16.msra.mxu0 0
    %1574 = vmatprep.subr.bf16.mxu0 0
    %1575 = vmatpush2.bf16.msra.mxu0 0
    %1576 = vmatprep.mubr.bf16.mxu0 0
    %1577 = vmatmul.mubr.bf16.gmra.mxu0 %v1542
    %v1578 = vpop.f32.mrf.mxu0
    %v1579 = vadd.f32 0.0, %v1578
    %v1580 = vpop.f32.mrf.mxu0
    %v1581 = vpop.f32.mrf.mxu0
    %v1582 = vpop.f32.mrf.mxu0
    %1583 = vdwg.mxu0
    %v1584 = vadd.f32 %v1538, %v1579
    %v1585 = vxor.u32 %v1584, 2147483648
    %v1586 = vmul.f32 %v1585, 1.442695
    %v1587 = vpow.pop %v1586
    %v1588 = vadd.f32 %v1587, 1.0
    %v1589 = vrcp.pop %v1588
    %v1590 = vmul.f32 1.0, %v1589
    %1592 = vrot.lane.b32.xlu0 %v1579, 64
    %v1593 = vpop.permute.xlu0 %1592
    %v1595 = vmul.f32 %v1590, %v1593
    %1597 = vrot.lane.b32.xlu0 %v1595, 64
    %v1598 = vpop.permute.xlu0 %1597
    %v1600 = vadd.f32 %v1538, %v1598
    %v1601 = vtanh.pop %v1600
    %v1602 = vsub.f32 1.0, %v1590
    %1604 = vrot.lane.b32.xlu0 %v1601, 96
    %v1605 = vpop.permute.xlu0 %1604
    %v1607 = vmul.f32 %v1602, %v1605
    %1609 = vrot.lane.b32.xlu0 %v1539, 32
    %v1610 = vpop.permute.xlu0 %1609
    %v1612 = vmul.f32 %v1590, %v1610
    %v1613 = vadd.f32 %v1607, %v1612
    %v1614 = vld [vmem:[%s670] sm:$0xff]
    %1616 = vset.pattern.permute.xlu0 0
    %1617 = vperm.xlu0 %1616, %v1614
    %v1618 = vpop.permute.xlu0 %1617
    %v1620 = vmul.f32 %v1618, %v1613
    %v1621 = vsub.f32 1.0, %v1614
    %1623 = vset.pattern.permute.xlu0 0
    %1624 = vperm.xlu0 %1623, %v1621
    %v1625 = vpop.permute.xlu0 %1624
    %v1627 = vmul.f32 %v1625, %v1539
    %1629 = vrot.lane.b32.xlu0 %v1627, 32
    %v1630 = vpop.permute.xlu0 %1629
    %v1632 = vadd.f32 %v1620, %v1630
    %1634 = vrot.lane.b32.xlu0 %v1632, 96
    %v1635 = vpop.permute.xlu0 %1634
    %1637 = vst.msk [vmem:[#allocation4] sm:$0xff] %vm63, %v1635
    %1639 = vrot.lane.b32.xlu0 %v1620, 96
    %v1640 = vpop.permute.xlu0 %1639
    %1642 = vst.msk [vmem:[%s695] sm:$0xff] %vm63, %v1640
    %s1643 = scalar_lea.vmem [#allocation3], 8
    %v1644 = vld [vmem:[%s1643] sm:$0xff]
    %v1645 = vld [vmem:[#allocation5] sm:$0xff]
    %v1646 = vpack.c.bf16 %v1645, %v1645
    %v1648 = vsel %vm63, %v1646, 0
    %1650 = vmatprep.subr.bf16.mxu0 0
    %1651 = vmatpush1.bf16.msra.mxu0 0
    %1652 = vmatprep.subr.bf16.mxu0 0
    %1653 = vmatpush1.bf16.msra.mxu0 0
    %1654 = vmatprep.subr.bf16.mxu0 0
    %1655 = vmatpush1.bf16.msra.mxu0 0
    %1656 = vmatprep.subr.bf16.mxu0 0
    %1657 = vmatpush1.bf16.msra.mxu0 0
    %1658 = vmatprep.subr.bf16.mxu0 0
    %1659 = vmatpush1.bf16.msra.mxu0 0
    %1660 = vmatprep.subr.bf16.mxu0 0
    %1661 = vmatpush1.bf16.msra.mxu0 0
    %1662 = vmatprep.subr.bf16.mxu0 0
    %1663 = vmatpush1.bf16.msra.mxu0 %v381
    %1664 = vmatprep.subr.bf16.mxu0 0
    %1665 = vmatpush1.bf16.msra.mxu0 %v380
    %1666 = vmatprep.subr.bf16.mxu0 0
    %1667 = vmatpush2.bf16.msra.mxu0 0
    %1668 = vmatprep.subr.bf16.mxu0 0
    %1669 = vmatpush2.bf16.msra.mxu0 0
    %1670 = vmatprep.subr.bf16.mxu0 0
    %1671 = vmatpush2.bf16.msra.mxu0 0
    %1672 = vmatprep.subr.bf16.mxu0 0
    %1673 = vmatpush2.bf16.msra.mxu0 0
    %1674 = vmatprep.subr.bf16.mxu0 0
    %1675 = vmatpush2.bf16.msra.mxu0 0
    %1676 = vmatprep.subr.bf16.mxu0 0
    %1677 = vmatpush2.bf16.msra.mxu0 0
    %1678 = vmatprep.subr.bf16.mxu0 0
    %1679 = vmatpush2.bf16.msra.mxu0 0
    %1680 = vmatprep.subr.bf16.mxu0 0
    %1681 = vmatpush2.bf16.msra.mxu0 0
    %1682 = vmatprep.mubr.bf16.mxu0 0
    %1683 = vmatmul.mubr.bf16.gmra.mxu0 %v1648
    %v1684 = vpop.f32.mrf.mxu0
    %v1685 = vadd.f32 0.0, %v1684
    %v1686 = vpop.f32.mrf.mxu0
    %v1687 = vpop.f32.mrf.mxu0
    %v1688 = vpop.f32.mrf.mxu0
    %1689 = vdwg.mxu0
    %v1690 = vadd.f32 %v1644, %v1685
    %v1691 = vxor.u32 %v1690, 2147483648
    %v1692 = vmul.f32 %v1691, 1.442695
    %v1693 = vpow.pop %v1692
    %v1694 = vadd.f32 %v1693, 1.0
    %v1695 = vrcp.pop %v1694
    %v1696 = vmul.f32 1.0, %v1695
    %1698 = vrot.lane.b32.xlu0 %v1685, 64
    %v1699 = vpop.permute.xlu0 %1698
    %v1701 = vmul.f32 %v1696, %v1699
    %1703 = vrot.lane.b32.xlu0 %v1701, 64
    %v1704 = vpop.permute.xlu0 %1703
    %v1706 = vadd.f32 %v1644, %v1704
    %v1707 = vtanh.pop %v1706
    %v1708 = vsub.f32 1.0, %v1696
    %1710 = vrot.lane.b32.xlu0 %v1707, 96
    %v1711 = vpop.permute.xlu0 %1710
    %v1713 = vmul.f32 %v1708, %v1711
    %1715 = vrot.lane.b32.xlu0 %v1645, 32
    %v1716 = vpop.permute.xlu0 %1715
    %v1718 = vmul.f32 %v1696, %v1716
    %v1719 = vadd.f32 %v1713, %v1718
    %v1720 = vld [vmem:[%s562] sm:$0xff]
    %1722 = vset.pattern.permute.xlu0 0
    %1723 = vperm.xlu0 %1722, %v1720
    %v1724 = vpop.permute.xlu0 %1723
    %v1726 = vmul.f32 %v1724, %v1719
    %v1727 = vsub.f32 1.0, %v1720
    %1729 = vset.pattern.permute.xlu0 0
    %1730 = vperm.xlu0 %1729, %v1727
    %v1731 = vpop.permute.xlu0 %1730
    %v1733 = vmul.f32 %v1731, %v1645
    %1735 = vrot.lane.b32.xlu0 %v1733, 32
    %v1736 = vpop.permute.xlu0 %1735
    %v1738 = vadd.f32 %v1726, %v1736
    %1740 = vrot.lane.b32.xlu0 %v1738, 96
    %v1741 = vpop.permute.xlu0 %1740
    %1743 = vst.msk [vmem:[#allocation5] sm:$0xff] %vm63, %v1741
    %1744 = vst.msk [vmem:[%s591] sm:$0xff] %vm483, %v1726
    %s1745 = scalar_lea.vmem [#allocation2], 56
    %v1746 = vld [vmem:[%s1745] sm:$0xff]
    %v1747 = vld [vmem:[#allocation4] sm:$0xff]
    %v1748 = vpack.c.bf16 %v1747, %v1747
    %v1750 = vsel %vm63, %v1748, 0
    %1752 = vmatprep.subr.bf16.mxu0 0
    %1753 = vmatpush1.bf16.msra.mxu0 0
    %1754 = vmatprep.subr.bf16.mxu0 0
    %1755 = vmatpush1.bf16.msra.mxu0 0
    %1756 = vmatprep.subr.bf16.mxu0 0
    %1757 = vmatpush1.bf16.msra.mxu0 0
    %1758 = vmatprep.subr.bf16.mxu0 0
    %1759 = vmatpush1.bf16.msra.mxu0 0
    %1760 = vmatprep.subr.bf16.mxu0 0
    %1761 = vmatpush1.bf16.msra.mxu0 0
    %1762 = vmatprep.subr.bf16.mxu0 0
    %1763 = vmatpush1.bf16.msra.mxu0 0
    %1764 = vmatprep.subr.bf16.mxu0 0
    %1765 = vmatpush1.bf16.msra.mxu0 %v263
    %1766 = vmatprep.subr.bf16.mxu0 0
    %1767 = vmatpush1.bf16.msra.mxu0 %v262
    %1768 = vmatprep.subr.bf16.mxu0 0
    %1769 = vmatpush2.bf16.msra.mxu0 0
    %1770 = vmatprep.subr.bf16.mxu0 0
    %1771 = vmatpush2.bf16.msra.mxu0 0
    %1772 = vmatprep.subr.bf16.mxu0 0
    %1773 = vmatpush2.bf16.msra.mxu0 0
    %1774 = vmatprep.subr.bf16.mxu0 0
    %1775 = vmatpush2.bf16.msra.mxu0 0
    %1776 = vmatprep.subr.bf16.mxu0 0
    %1777 = vmatpush2.bf16.msra.mxu0 0
    %1778 = vmatprep.subr.bf16.mxu0 0
    %1779 = vmatpush2.bf16.msra.mxu0 0
    %1780 = vmatprep.subr.bf16.mxu0 0
    %1781 = vmatpush2.bf16.msra.mxu0 0
    %1782 = vmatprep.subr.bf16.mxu0 0
    %1783 = vmatpush2.bf16.msra.mxu0 0
    %1784 = vmatprep.mubr.bf16.mxu0 0
    %1785 = vmatmul.mubr.bf16.gmra.mxu0 %v1750
    %v1786 = vpop.f32.mrf.mxu0
    %v1787 = vadd.f32 0.0, %v1786
    %v1788 = vpop.f32.mrf.mxu0
    %v1789 = vpop.f32.mrf.mxu0
    %v1790 = vpop.f32.mrf.mxu0
    %1791 = vdwg.mxu0
    %v1792 = vadd.f32 %v1746, %v1787
    %v1793 = vxor.u32 %v1792, 2147483648
    %v1794 = vmul.f32 %v1793, 1.442695
    %v1795 = vpow.pop %v1794
    %v1796 = vadd.f32 %v1795, 1.0
    %v1797 = vrcp.pop %v1796
    %v1798 = vmul.f32 1.0, %v1797
    %1800 = vrot.lane.b32.xlu0 %v1787, 64
    %v1801 = vpop.permute.xlu0 %1800
    %v1803 = vmul.f32 %v1798, %v1801
    %1805 = vrot.lane.b32.xlu0 %v1803, 64
    %v1806 = vpop.permute.xlu0 %1805
    %v1808 = vadd.f32 %v1746, %v1806
    %v1809 = vtanh.pop %v1808
    %v1810 = vsub.f32 1.0, %v1798
    %1812 = vrot.lane.b32.xlu0 %v1809, 96
    %v1813 = vpop.permute.xlu0 %1812
    %v1815 = vmul.f32 %v1810, %v1813
    %1817 = vrot.lane.b32.xlu0 %v1747, 32
    %v1818 = vpop.permute.xlu0 %1817
    %v1820 = vmul.f32 %v1798, %v1818
    %v1821 = vadd.f32 %v1815, %v1820
    %v1822 = vld [vmem:[%s457] sm:$0xff]
    %1824 = vset.pattern.permute.xlu0 0
    %1825 = vperm.xlu0 %1824, %v1822
    %v1826 = vpop.permute.xlu0 %1825
    %v1828 = vmul.f32 %v1826, %v1821
    %v1829 = vsub.f32 1.0, %v1822
    %1831 = vset.pattern.permute.xlu0 0
    %1832 = vperm.xlu0 %1831, %v1829
    %v1833 = vpop.permute.xlu0 %1832
    %v1835 = vmul.f32 %v1833, %v1747
    %1837 = vrot.lane.b32.xlu0 %v1835, 32
    %v1838 = vpop.permute.xlu0 %1837
    %v1840 = vadd.f32 %v1828, %v1838
    %1842 = vrot.lane.b32.xlu0 %v1840, 96
    %v1843 = vpop.permute.xlu0 %1842
    %1845 = vst.msk [vmem:[#allocation4] sm:$0xff] %vm63, %v1843
    %1847 = vrot.lane.b32.xlu0 %v1828, 96
    %v1848 = vpop.permute.xlu0 %1847
    %1850 = vst.msk [vmem:[%s482] sm:$0xff] %vm63, %v1848
    %v1851 = vld [vmem:[#allocation3] sm:$0xff]
    %v1852 = vld [vmem:[#allocation5] sm:$0xff]
    %v1853 = vpack.c.bf16 %v1852, %v1852
    %v1855 = vsel %vm63, %v1853, 0
    %1857 = vmatprep.subr.bf16.mxu0 0
    %1858 = vmatpush1.bf16.msra.mxu0 0
    %1859 = vmatprep.subr.bf16.mxu0 0
    %1860 = vmatpush1.bf16.msra.mxu0 0
    %1861 = vmatprep.subr.bf16.mxu0 0
    %1862 = vmatpush1.bf16.msra.mxu0 0
    %1863 = vmatprep.subr.bf16.mxu0 0
    %1864 = vmatpush1.bf16.msra.mxu0 0
    %1865 = vmatprep.subr.bf16.mxu0 0
    %1866 = vmatpush1.bf16.msra.mxu0 0
    %1867 = vmatprep.subr.bf16.mxu0 0
    %1868 = vmatpush1.bf16.msra.mxu0 0
    %1869 = vmatprep.subr.bf16.mxu0 0
    %1870 = vmatpush1.bf16.msra.mxu0 %v381
    %1871 = vmatprep.subr.bf16.mxu0 0
    %1872 = vmatpush1.bf16.msra.mxu0 %v380
    %1873 = vmatprep.subr.bf16.mxu0 0
    %1874 = vmatpush2.bf16.msra.mxu0 0
    %1875 = vmatprep.subr.bf16.mxu0 0
    %1876 = vmatpush2.bf16.msra.mxu0 0
    %1877 = vmatprep.subr.bf16.mxu0 0
    %1878 = vmatpush2.bf16.msra.mxu0 0
    %1879 = vmatprep.subr.bf16.mxu0 0
    %1880 = vmatpush2.bf16.msra.mxu0 0
    %1881 = vmatprep.subr.bf16.mxu0 0
    %1882 = vmatpush2.bf16.msra.mxu0 0
    %1883 = vmatprep.subr.bf16.mxu0 0
    %1884 = vmatpush2.bf16.msra.mxu0 0
    %1885 = vmatprep.subr.bf16.mxu0 0
    %1886 = vmatpush2.bf16.msra.mxu0 0
    %1887 = vmatprep.subr.bf16.mxu0 0
    %1888 = vmatpush2.bf16.msra.mxu0 0
    %1889 = vmatprep.mubr.bf16.mxu0 0
    %1890 = vmatmul.mubr.bf16.gmra.mxu0 %v1855
    %v1891 = vpop.f32.mrf.mxu0
    %v1892 = vadd.f32 0.0, %v1891
    %v1893 = vpop.f32.mrf.mxu0
    %v1894 = vpop.f32.mrf.mxu0
    %v1895 = vpop.f32.mrf.mxu0
    %1896 = vdwg.mxu0
    %v1897 = vadd.f32 %v1851, %v1892
    %v1898 = vxor.u32 %v1897, 2147483648
    %v1899 = vmul.f32 %v1898, 1.442695
    %v1900 = vpow.pop %v1899
    %v1901 = vadd.f32 %v1900, 1.0
    %v1902 = vrcp.pop %v1901
    %v1903 = vmul.f32 1.0, %v1902
    %1905 = vrot.lane.b32.xlu0 %v1892, 64
    %v1906 = vpop.permute.xlu0 %1905
    %v1908 = vmul.f32 %v1903, %v1906
    %1910 = vrot.lane.b32.xlu0 %v1908, 64
    %v1911 = vpop.permute.xlu0 %1910
    %v1913 = vadd.f32 %v1851, %v1911
    %v1914 = vtanh.pop %v1913
    %v1915 = vsub.f32 1.0, %v1903
    %1917 = vrot.lane.b32.xlu0 %v1914, 96
    %v1918 = vpop.permute.xlu0 %1917
    %v1920 = vmul.f32 %v1915, %v1918
    %1922 = vrot.lane.b32.xlu0 %v1852, 32
    %v1923 = vpop.permute.xlu0 %1922
    %v1925 = vmul.f32 %v1903, %v1923
    %v1926 = vadd.f32 %v1920, %v1925
    %v1927 = vld [vmem:[%s1] sm:$0xff]
    %1929 = vset.pattern.permute.xlu0 0
    %1930 = vperm.xlu0 %1929, %v1927
    %v1931 = vpop.permute.xlu0 %1930
    %v1933 = vmul.f32 %v1931, %v1926
    %v1934 = vsub.f32 1.0, %v1927
    %1936 = vset.pattern.permute.xlu0 0
    %1937 = vperm.xlu0 %1936, %v1934
    %v1938 = vpop.permute.xlu0 %1937
    %v1940 = vmul.f32 %v1938, %v1852
    %1942 = vrot.lane.b32.xlu0 %v1940, 32
    %v1943 = vpop.permute.xlu0 %1942
    %v1945 = vadd.f32 %v1933, %v1943
    %1947 = vrot.lane.b32.xlu0 %v1945, 96
    %v1948 = vpop.permute.xlu0 %1947
    %1950 = vst.msk [vmem:[#allocation5] sm:$0xff] %vm63, %v1948
    %1951 = vst.msk [vmem:[#allocation6] sm:$0xff] %vm483, %v1933
    // Predicated region
    $region18: #{tpu_custom_call.1} parent=1 // pred_check
      _
    $region19: #{tpu_custom_call.1} parent=1 // pred_check_branch
      %1953 = sbr.rel (0) target = $region21
    $region20: #{tpu_custom_call.1} parent=1 // pred_region
      %s1955 = ssub.s32 1024, 1024
      %1956 = vsyncadd [#allocation7], %s1955
      %s1957 = sshll.u32 [#allocation6], 4
      %s1958 = int_to_ptr.vmem [resolvable:$true] %s1957
      %1963 = dma.vmem_to_hbm [thread:$0]  %s1958, 1024, %s4, [#allocation7], 128, 128, 8
    $region21: #{tpu_custom_call.1} parent=1 // pred_fallthru
      _
    // Predicated region
    $region22: #{tpu_custom_call.1} parent=1 // pred_check
      _
    $region23: #{tpu_custom_call.1} parent=1 // pred_check_branch
      %1965 = sbr.rel (0) target = $region25
    $region24: #{tpu_custom_call.1} parent=1 // pred_region
      %1966 = dma.done [#allocation7], 1024
    $region25: #{tpu_custom_call.1} parent=1 // pred_fallthru
      _
    %1967 = vsyncpa [#allocation7], 1

</llo_original>
